<compile_context>
chip_gen: v5e
topology: v5e:2x2
jax: 0.10.0
libtpu: 0.0.40
codegen_flags: <defaults>
</compile_context>

<pallas_src>
import functools
import math

import jax
import jax.numpy as jnp
from jax import lax
from jax.experimental import pallas as pl
from jax.experimental.pallas import tpu as pltpu


def _round_up(x, m):
    return (x + m - 1) // m * m


# ----------------------------- Fused Pallas kernel ---------------------------


def typelm_fused_kernel(
    x_ref, bias_ref, emb_ref,
    wq_ref, wk_ref, wv_ref, wo_ref,
    bq_ref, bk_ref, bv_ref, bo_ref,
    g1_ref, be1_ref, g2_ref, be2_ref,
    w1_ref, bf1_ref, w2_ref, bf2_ref,
    out_ref, *, num_heads, num_layers, d_real, c_real,
):
    """Whole TypeLM forward for all B*N token rows in one invocation."""
    Dp = x_ref.shape[-1]
    x = x_ref[...]                                  # (B*N, Dp) f32
    attn_bias = bias_ref[...]                       # (B*N, B*N) f32 additive bias

    H = num_heads
    dh = d_real // H
    scale = 1.0 / math.sqrt(dh)
    inv_d = 1.0 / d_real

    # Feature-column helpers (padded columns >= d_real stay exactly zero).
    d_idx = lax.broadcasted_iota(jnp.int32, (1, Dp), 1)
    feat_mask = (d_idx < d_real).astype(jnp.float32)                     # (1, Dp)
    head_masks = [
        ((d_idx >= h * dh) & (d_idx < (h + 1) * dh)).astype(jnp.float32)
        for h in range(H)
    ]

    def layer_norm(y, gamma, beta):
        # LayerNorm over the d_real real features only; padded cols stay 0
        # because gamma/beta are zero-padded.
        mean = jnp.sum(y, axis=-1, keepdims=True) * inv_d
        diff = (y - mean) * feat_mask
        var = jnp.sum(diff * diff, axis=-1, keepdims=True) * inv_d
        return diff * lax.rsqrt(var + 1e-5) * gamma + beta

    for l in range(num_layers):                     # static unroll
        xb = x.astype(jnp.bfloat16)
        q = jnp.dot(xb, wq_ref[l], preferred_element_type=jnp.float32) + bq_ref[l]
        k = jnp.dot(xb, wk_ref[l], preferred_element_type=jnp.float32) + bk_ref[l]
        v = jnp.dot(xb, wv_ref[l], preferred_element_type=jnp.float32) + bv_ref[l]
        kb = k.astype(jnp.bfloat16)

        # Multi-head attention: head h occupies feature columns [h*dh, (h+1)*dh).
        # Masking q/v per head keeps the full-lane layout; the cross-batch and
        # causal structure lives entirely in the additive bias.
        attn = jnp.zeros_like(x)
        for h in range(H):                          # static unroll
            qh = (q * head_masks[h]).astype(jnp.bfloat16)
            s = lax.dot_general(qh, kb, (((1,), (1,)), ((), ())),
                                preferred_element_type=jnp.float32)
            s = s * scale + attn_bias               # (B*N, B*N)
            s = s - jnp.max(s, axis=-1, keepdims=True)
            p = jnp.exp(s)
            p = p * pl.reciprocal(jnp.sum(p, axis=-1, keepdims=True), approx=True)
            vh = (v * head_masks[h]).astype(jnp.bfloat16)
            attn = attn + jnp.dot(p.astype(jnp.bfloat16), vh,
                                  preferred_element_type=jnp.float32)

        attn = jnp.dot(attn.astype(jnp.bfloat16), wo_ref[l],
                       preferred_element_type=jnp.float32) + bo_ref[l]

        # Residual + LayerNorm 1
        x1 = layer_norm(x + attn, g1_ref[l], be1_ref[l])

        # Position-wise FFN (ReLU)
        h1 = jnp.dot(x1.astype(jnp.bfloat16), w1_ref[l],
                     preferred_element_type=jnp.float32) + bf1_ref[l]
        h1 = jnp.maximum(h1, 0.0)
        ff = jnp.dot(h1.astype(jnp.bfloat16), w2_ref[l],
                     preferred_element_type=jnp.float32) + bf2_ref[l]

        # Residual + LayerNorm 2
        x = layer_norm(x1 + ff, g2_ref[l], be2_ref[l])

    # Tied-embedding logits: prediction = x @ (E^T + 1e-10).
    emb = (emb_ref[...] + 1e-10).astype(jnp.bfloat16)          # (Cp, Dp)
    logits = lax.dot_general(x.astype(jnp.bfloat16), emb, (((1,), (1,)), ((), ())),
                             preferred_element_type=jnp.float32)  # (B*N, Cp)

    # log(sigsoftmax(x)) = x + log_sigmoid(x) - logsumexp(x + log_sigmoid(x))
    # (log-space, max-subtracted -> no overflow). Padded class columns are
    # excluded from the normalizer and stripped by the wrapper.
    log_sig = jnp.minimum(logits, 0.0) - jnp.log(1.0 + jnp.exp(-jnp.abs(logits)))
    log_z = logits + log_sig
    c_idx = lax.broadcasted_iota(jnp.int32, (1, logits.shape[-1]), 1)
    log_z_m = jnp.where(c_idx < c_real, log_z, -jnp.inf)
    m = jnp.max(log_z_m, axis=-1, keepdims=True)
    lse = m + jnp.log(jnp.sum(jnp.exp(log_z_m - m), axis=-1, keepdims=True))
    out_ref[...] = log_z - lse


# ----------------------------- Pallas wrapper --------------------------------


def _full_spec(shape):
    nd = len(shape)
    return pl.BlockSpec(shape, lambda i, _nd=nd: (0,) * _nd)


def typelm_fused_call(x2, attn_bias, emb_p, stacked, *, num_heads, num_layers,
                      d_real, c_real):
    BN, Dp = x2.shape
    Cp = emb_p.shape[0]
    inputs = [
        x2, attn_bias, emb_p,
        stacked["wq"], stacked["wk"], stacked["wv"], stacked["wo"],
        stacked["bq"], stacked["bk"], stacked["bv"], stacked["bo"],
        stacked["g1"], stacked["be1"], stacked["g2"], stacked["be2"],
        stacked["w1"], stacked["bf1"], stacked["w2"], stacked["bf2"],
    ]
    kernel = functools.partial(
        typelm_fused_kernel, num_heads=num_heads, num_layers=num_layers,
        d_real=d_real, c_real=c_real)
    return pl.pallas_call(
        kernel,
        grid=(1,),
        in_specs=[_full_spec(a.shape) for a in inputs],
        out_specs=_full_spec((BN, Cp)),
        out_shape=jax.ShapeDtypeStruct((BN, Cp), jnp.float32),
        compiler_params=pltpu.CompilerParams(
            dimension_semantics=("arbitrary",)),
    )(*inputs)


# ----------------------------- Plain-JAX glue ---------------------------------


def positional_encoding(n, d, freq=10000.0):
    pos = jnp.arange(n, dtype=jnp.float32)[:, None]
    div = jnp.exp(jnp.arange(0, d, 2, dtype=jnp.float32) * (-math.log(freq) / d))
    pe = jnp.zeros((n, d), jnp.float32)
    pe = pe.at[:, 0::2].set(jnp.sin(pos * div))
    pe = pe.at[:, 1::2].set(jnp.cos(pos * div))
    return pe


def _pack_params(layer_params, Dp, Fp):
    """Stack per-layer weights (zero-padded, lane-dense) so one kernel owns them."""
    def pad2(w, r, c):
        return jnp.pad(w, ((0, r - w.shape[0]), (0, c - w.shape[1])))

    def padb(b, c):
        return jnp.pad(b, ((0, 0), (0, c - b.shape[1])))

    stacked = {}
    for name, r, c in [("wq", Dp, Dp), ("wk", Dp, Dp), ("wv", Dp, Dp),
                       ("wo", Dp, Dp), ("w1", Dp, Fp), ("w2", Fp, Dp)]:
        stacked[name] = jnp.stack(
            [pad2(p[name], r, c) for p in layer_params]).astype(jnp.bfloat16)
    for name, c in [("bq", Dp), ("bk", Dp), ("bv", Dp), ("bo", Dp),
                    ("g1", Dp), ("be1", Dp), ("bf1", Fp), ("bf2", Dp),
                    ("g2", Dp), ("be2", Dp)]:
        stacked[name] = jnp.stack(
            [padb(p[name], c) for p in layer_params]).astype(jnp.float32)  # (L,1,W)
    return stacked


def _block_attn_bias(mask):
    """(B, N, N) {0,1} mask -> (B*N, B*N) additive bias (block-diagonal)."""
    B, N, _ = mask.shape
    bias = jnp.where(mask == 0, jnp.float32(-1e10), jnp.float32(0.0))     # (B,N,N)
    eye = jnp.eye(B, dtype=jnp.float32)
    full = jnp.where(eye[:, None, :, None] > 0, bias[:, :, None, :],
                     jnp.float32(-1e10))                                  # (B,N,B,N)
    return full.reshape(B * N, B * N)


def typelm_forward(tokens, mask, emb, layer_params, num_heads):
    C, D = emb.shape
    B, N = tokens.shape
    F = layer_params[0]["w1"].shape[1]
    L = len(layer_params)
    Dp, Fp, Cp = _round_up(D, 128), _round_up(F, 128), _round_up(C, 128)

    emb_p = jnp.pad(emb.astype(jnp.float32), ((0, Cp - C), (0, Dp - D)))

    # Embedding lookup (padding_idx / scale_grad_by_freq only affect gradients)
    # + sinusoidal PE; dropout = identity (eval). Padded feature cols are zero.
    x = jnp.take(emb_p, tokens, axis=0)                                   # (B,N,Dp)
    pe = jnp.pad(positional_encoding(N, D), ((0, 0), (0, Dp - D)))
    x = (x + pe[None]).reshape(B * N, Dp).astype(jnp.float32)

    stacked = _pack_params(layer_params, Dp, Fp)
    attn_bias = _block_attn_bias(mask)

    out = typelm_fused_call(x, attn_bias, emb_p, stacked,
                            num_heads=num_heads, num_layers=L,
                            d_real=D, c_real=C)
    return out.reshape(B, N, Cp)[:, :, :C]


# ----------------------------- Pure-JAX reference -----------------------------


def _ref_layer_norm(x, gamma, beta, eps=1e-5):
    mean = jnp.mean(x, axis=-1, keepdims=True)
    var = jnp.mean((x - mean) ** 2, axis=-1, keepdims=True)
    return (x - mean) * lax.rsqrt(var + eps) * gamma + beta


def typelm_reference(tokens, mask, emb, layer_params, num_heads):
    C, D = emb.shape
    x = jnp.take(emb, tokens, axis=0).astype(jnp.float32)
    B, N, _ = x.shape
    x = x + positional_encoding(N, D)[None]
    H, dh = num_heads, D // num_heads
    for p in layer_params:
        q = x @ p["wq"] + p["bq"]
        k = x @ p["wk"] + p["bk"]
        v = x @ p["wv"] + p["bv"]
        qh = q.reshape(B, N, H, dh).transpose(0, 2, 1, 3)
        kh = k.reshape(B, N, H, dh).transpose(0, 2, 1, 3)
        vh = v.reshape(B, N, H, dh).transpose(0, 2, 1, 3)
        s = jnp.einsum("bhqd,bhkd->bhqk", qh, kh) / math.sqrt(dh)
        s = jnp.where((mask == 0)[:, None], -1e10, s)
        pr = jax.nn.softmax(s, axis=-1)
        attn = jnp.einsum("bhqk,bhkd->bhqd", pr, vh)
        attn = attn.transpose(0, 2, 1, 3).reshape(B, N, D) @ p["wo"] + p["bo"]
        x1 = _ref_layer_norm(x + attn, p["g1"], p["be1"])
        h1 = jax.nn.relu(x1 @ p["w1"] + p["bf1"])
        ff = h1 @ p["w2"] + p["bf2"]
        x = _ref_layer_norm(x1 + ff, p["g2"], p["be2"])
    logits = x @ (emb.T + 1e-10)
    z = jnp.exp(logits) * jax.nn.sigmoid(logits)
    return jnp.log(z / jnp.sum(z, axis=-1, keepdims=True))


# ------------------------------ Init & driver ---------------------------------


def init_layer(key, d_model, d_intermediate):
    ks = jax.random.split(key, 6)
    s = 0.02
    D, F = d_model, d_intermediate
    return dict(
        wq=jax.random.normal(ks[0], (D, D), jnp.float32) * s, bq=jnp.zeros((1, D), jnp.float32),
        wk=jax.random.normal(ks[1], (D, D), jnp.float32) * s, bk=jnp.zeros((1, D), jnp.float32),
        wv=jax.random.normal(ks[2], (D, D), jnp.float32) * s, bv=jnp.zeros((1, D), jnp.float32),
        wo=jax.random.normal(ks[3], (D, D), jnp.float32) * s, bo=jnp.zeros((1, D), jnp.float32),
        g1=jnp.ones((1, D), jnp.float32), be1=jnp.zeros((1, D), jnp.float32),
        w1=jax.random.normal(ks[4], (D, F), jnp.float32) * s, bf1=jnp.zeros((1, F), jnp.float32),
        w2=jax.random.normal(ks[5], (F, D), jnp.float32) * s, bf2=jnp.zeros((1, D), jnp.float32),
        g2=jnp.ones((1, D), jnp.float32), be2=jnp.zeros((1, D), jnp.float32),
    )


if __name__ == "__main__":
    num_classes = 64
    d_model = 32
    num_heads = 4
    num_layers = 2
    d_intermediate = 64
    B, N = 2, 8

    key = jax.random.PRNGKey(0)
    k_emb, k_tok, *k_layers = jax.random.split(key, 2 + num_layers)

    embedding_matrix = jax.random.uniform(k_emb, (num_classes, d_model), jnp.float32) * 0.02
    layer_params = [init_layer(k, d_model, d_intermediate) for k in k_layers]

    tokens = jax.random.randint(k_tok, (B, N), 0, num_classes, dtype=jnp.int32)
    # Causal LM mask (1 = attend, 0 = masked), matching Mask((B, N, N)).
    mask = jnp.broadcast_to(jnp.tril(jnp.ones((N, N), jnp.int32)), (B, N, N))

    out = typelm_forward(tokens, mask, embedding_matrix, layer_params, num_heads)
    out = jax.block_until_ready(out)

    assert out.shape == (B, N, num_classes), out.shape
    # log(sigsoftmax) rows should exponentiate to a probability simplex.
    assert bool(jnp.all(jnp.isfinite(out)))
    assert bool(jnp.allclose(jnp.sum(jnp.exp(out), axis=-1), 1.0, atol=1e-3))

    # Cross-check against a pure-JAX f32 reference (bf16 matmuls + approx recip
    # in the kernel -> loose tolerance).
    ref = typelm_reference(tokens, mask, embedding_matrix, layer_params, num_heads)
    assert bool(jnp.allclose(out, ref, atol=5e-2, rtol=2e-2)), \
        float(jnp.max(jnp.abs(out - ref)))

    print("KERNEL_OK")
</pallas_src>

<mosaic_0001>
module attributes {stable_mosaic.version = 11 : i64} {
  func.func @typelm_fused_kernel(%arg0: i32, %arg1: memref<16x128xf32, #tpu.memory_space<vmem>>, %arg2: memref<16x16xf32, #tpu.memory_space<vmem>>, %arg3: memref<128x128xf32, #tpu.memory_space<vmem>>, %arg4: memref<2x128x128xbf16, #tpu.memory_space<vmem>>, %arg5: memref<2x128x128xbf16, #tpu.memory_space<vmem>>, %arg6: memref<2x128x128xbf16, #tpu.memory_space<vmem>>, %arg7: memref<2x128x128xbf16, #tpu.memory_space<vmem>>, %arg8: memref<2x1x128xf32, #tpu.memory_space<vmem>>, %arg9: memref<2x1x128xf32, #tpu.memory_space<vmem>>, %arg10: memref<2x1x128xf32, #tpu.memory_space<vmem>>, %arg11: memref<2x1x128xf32, #tpu.memory_space<vmem>>, %arg12: memref<2x1x128xf32, #tpu.memory_space<vmem>>, %arg13: memref<2x1x128xf32, #tpu.memory_space<vmem>>, %arg14: memref<2x1x128xf32, #tpu.memory_space<vmem>>, %arg15: memref<2x1x128xf32, #tpu.memory_space<vmem>>, %arg16: memref<2x128x128xbf16, #tpu.memory_space<vmem>>, %arg17: memref<2x1x128xf32, #tpu.memory_space<vmem>>, %arg18: memref<2x128x128xbf16, #tpu.memory_space<vmem>>, %arg19: memref<2x1x128xf32, #tpu.memory_space<vmem>>, %arg20: memref<16x128xf32, #tpu.memory_space<vmem>>) attributes {dimension_semantics = [#tpu.dimension_semantics<arbitrary>], iteration_bounds = array<i64: 1>, scalar_prefetch = 0 : i64, scratch_operands = 0 : i64, tpu.core_type = #tpu.core_type<tc>, window_params = [{pipeline_mode = #tpu.pipeline_mode<synchronous>, transform_indices = @transform_0, window_bounds = array<i64: 16, 128>}, {pipeline_mode = #tpu.pipeline_mode<synchronous>, transform_indices = @transform_1, window_bounds = array<i64: 16, 16>}, {pipeline_mode = #tpu.pipeline_mode<synchronous>, transform_indices = @transform_2, window_bounds = array<i64: 128, 128>}, {pipeline_mode = #tpu.pipeline_mode<synchronous>, transform_indices = @transform_3, window_bounds = array<i64: 2, 128, 128>}, {pipeline_mode = #tpu.pipeline_mode<synchronous>, transform_indices = @transform_4, window_bounds = array<i64: 2, 128, 128>}, {pipeline_mode = #tpu.pipeline_mode<synchronous>, transform_indices = @transform_5, window_bounds = array<i64: 2, 128, 128>}, {pipeline_mode = #tpu.pipeline_mode<synchronous>, transform_indices = @transform_6, window_bounds = array<i64: 2, 128, 128>}, {pipeline_mode = #tpu.pipeline_mode<synchronous>, transform_indices = @transform_7, window_bounds = array<i64: 2, 1, 128>}, {pipeline_mode = #tpu.pipeline_mode<synchronous>, transform_indices = @transform_8, window_bounds = array<i64: 2, 1, 128>}, {pipeline_mode = #tpu.pipeline_mode<synchronous>, transform_indices = @transform_9, window_bounds = array<i64: 2, 1, 128>}, {pipeline_mode = #tpu.pipeline_mode<synchronous>, transform_indices = @transform_10, window_bounds = array<i64: 2, 1, 128>}, {pipeline_mode = #tpu.pipeline_mode<synchronous>, transform_indices = @transform_11, window_bounds = array<i64: 2, 1, 128>}, {pipeline_mode = #tpu.pipeline_mode<synchronous>, transform_indices = @transform_12, window_bounds = array<i64: 2, 1, 128>}, {pipeline_mode = #tpu.pipeline_mode<synchronous>, transform_indices = @transform_13, window_bounds = array<i64: 2, 1, 128>}, {pipeline_mode = #tpu.pipeline_mode<synchronous>, transform_indices = @transform_14, window_bounds = array<i64: 2, 1, 128>}, {pipeline_mode = #tpu.pipeline_mode<synchronous>, transform_indices = @transform_15, window_bounds = array<i64: 2, 128, 128>}, {pipeline_mode = #tpu.pipeline_mode<synchronous>, transform_indices = @transform_16, window_bounds = array<i64: 2, 1, 128>}, {pipeline_mode = #tpu.pipeline_mode<synchronous>, transform_indices = @transform_17, window_bounds = array<i64: 2, 128, 128>}, {pipeline_mode = #tpu.pipeline_mode<synchronous>, transform_indices = @transform_18, window_bounds = array<i64: 2, 1, 128>}, {pipeline_mode = #tpu.pipeline_mode<synchronous>, transform_indices = @transform_19, window_bounds = array<i64: 16, 128>}]} {
    %c0 = arith.constant 0 : index
    %c0_0 = arith.constant 0 : index
    %0 = vector.load %arg1[%c0, %c0_0] : memref<16x128xf32, #tpu.memory_space<vmem>>, vector<16x128xf32>
    %c0_1 = arith.constant 0 : index
    %c0_2 = arith.constant 0 : index
    %1 = vector.load %arg2[%c0_1, %c0_2] : memref<16x16xf32, #tpu.memory_space<vmem>>, vector<16x16xf32>
    %2 = tpu.iota {dimensions = array<i32: 1>} : vector<1x128xi32>
    %c32_i32 = arith.constant 32 : i32
    %3 = vector.broadcast %c32_i32 : i32 to vector<1x128xi32>
    %4 = arith.cmpi slt, %2, %3 : vector<1x128xi32>
    %5 = arith.extui %4 : vector<1x128xi1> to vector<1x128xi32>
    %6 = arith.sitofp %5 : vector<1x128xi32> to vector<1x128xf32>
    %c0_i32 = arith.constant 0 : i32
    %7 = vector.broadcast %c0_i32 : i32 to vector<1x128xi32>
    %8 = arith.cmpi sge, %2, %7 : vector<1x128xi32>
    %c8_i32 = arith.constant 8 : i32
    %9 = vector.broadcast %c8_i32 : i32 to vector<1x128xi32>
    %10 = arith.cmpi slt, %2, %9 : vector<1x128xi32>
    %11 = arith.andi %8, %10 : vector<1x128xi1>
    %12 = arith.extui %11 : vector<1x128xi1> to vector<1x128xi32>
    %13 = arith.sitofp %12 : vector<1x128xi32> to vector<1x128xf32>
    %c8_i32_3 = arith.constant 8 : i32
    %14 = vector.broadcast %c8_i32_3 : i32 to vector<1x128xi32>
    %15 = arith.cmpi sge, %2, %14 : vector<1x128xi32>
    %c16_i32 = arith.constant 16 : i32
    %16 = vector.broadcast %c16_i32 : i32 to vector<1x128xi32>
    %17 = arith.cmpi slt, %2, %16 : vector<1x128xi32>
    %18 = arith.andi %15, %17 : vector<1x128xi1>
    %19 = arith.extui %18 : vector<1x128xi1> to vector<1x128xi32>
    %20 = arith.sitofp %19 : vector<1x128xi32> to vector<1x128xf32>
    %c16_i32_4 = arith.constant 16 : i32
    %21 = vector.broadcast %c16_i32_4 : i32 to vector<1x128xi32>
    %22 = arith.cmpi sge, %2, %21 : vector<1x128xi32>
    %c24_i32 = arith.constant 24 : i32
    %23 = vector.broadcast %c24_i32 : i32 to vector<1x128xi32>
    %24 = arith.cmpi slt, %2, %23 : vector<1x128xi32>
    %25 = arith.andi %22, %24 : vector<1x128xi1>
    %26 = arith.extui %25 : vector<1x128xi1> to vector<1x128xi32>
    %27 = arith.sitofp %26 : vector<1x128xi32> to vector<1x128xf32>
    %c24_i32_5 = arith.constant 24 : i32
    %28 = vector.broadcast %c24_i32_5 : i32 to vector<1x128xi32>
    %29 = arith.cmpi sge, %2, %28 : vector<1x128xi32>
    %c32_i32_6 = arith.constant 32 : i32
    %30 = vector.broadcast %c32_i32_6 : i32 to vector<1x128xi32>
    %31 = arith.cmpi slt, %2, %30 : vector<1x128xi32>
    %32 = arith.andi %29, %31 : vector<1x128xi1>
    %33 = arith.extui %32 : vector<1x128xi1> to vector<1x128xi32>
    %34 = arith.sitofp %33 : vector<1x128xi32> to vector<1x128xf32>
    %35 = arith.truncf %0 : vector<16x128xf32> to vector<16x128xbf16>
    %c0_7 = arith.constant 0 : index
    %c0_8 = arith.constant 0 : index
    %c0_9 = arith.constant 0 : index
    %36 = vector.load %arg4[%c0_7, %c0_8, %c0_9] : memref<2x128x128xbf16, #tpu.memory_space<vmem>>, vector<1x128x128xbf16>
    %37 = vector.shape_cast %36 : vector<1x128x128xbf16> to vector<128x128xbf16>
    %cst = arith.constant dense<0.000000e+00> : vector<16x128xf32>
    %38 = tpu.matmul %35, %37, %cst {dimension_numbers = #tpu.dot_dimension_numbers<[1], [0], [0], [1], [0, 0, 1, 1], [], []>} : vector<16x128xbf16>, vector<128x128xbf16>, vector<16x128xf32> -> vector<16x128xf32>
    %c0_10 = arith.constant 0 : index
    %c0_11 = arith.constant 0 : index
    %c0_12 = arith.constant 0 : index
    %39 = vector.load %arg8[%c0_10, %c0_11, %c0_12] : memref<2x1x128xf32, #tpu.memory_space<vmem>>, vector<1x1x128xf32>
    %40 = vector.shape_cast %39 : vector<1x1x128xf32> to vector<1x128xf32>
    %41 = vector.broadcast %40 : vector<1x128xf32> to vector<16x128xf32>
    %42 = arith.addf %38, %41 : vector<16x128xf32>
    %c0_13 = arith.constant 0 : index
    %c0_14 = arith.constant 0 : index
    %c0_15 = arith.constant 0 : index
    %43 = vector.load %arg5[%c0_13, %c0_14, %c0_15] : memref<2x128x128xbf16, #tpu.memory_space<vmem>>, vector<1x128x128xbf16>
    %44 = vector.shape_cast %43 : vector<1x128x128xbf16> to vector<128x128xbf16>
    %cst_16 = arith.constant dense<0.000000e+00> : vector<16x128xf32>
    %45 = tpu.matmul %35, %44, %cst_16 {dimension_numbers = #tpu.dot_dimension_numbers<[1], [0], [0], [1], [0, 0, 1, 1], [], []>} : vector<16x128xbf16>, vector<128x128xbf16>, vector<16x128xf32> -> vector<16x128xf32>
    %c0_17 = arith.constant 0 : index
    %c0_18 = arith.constant 0 : index
    %c0_19 = arith.constant 0 : index
    %46 = vector.load %arg9[%c0_17, %c0_18, %c0_19] : memref<2x1x128xf32, #tpu.memory_space<vmem>>, vector<1x1x128xf32>
    %47 = vector.shape_cast %46 : vector<1x1x128xf32> to vector<1x128xf32>
    %48 = vector.broadcast %47 : vector<1x128xf32> to vector<16x128xf32>
    %49 = arith.addf %45, %48 : vector<16x128xf32>
    %c0_20 = arith.constant 0 : index
    %c0_21 = arith.constant 0 : index
    %c0_22 = arith.constant 0 : index
    %50 = vector.load %arg6[%c0_20, %c0_21, %c0_22] : memref<2x128x128xbf16, #tpu.memory_space<vmem>>, vector<1x128x128xbf16>
    %51 = vector.shape_cast %50 : vector<1x128x128xbf16> to vector<128x128xbf16>
    %cst_23 = arith.constant dense<0.000000e+00> : vector<16x128xf32>
    %52 = tpu.matmul %35, %51, %cst_23 {dimension_numbers = #tpu.dot_dimension_numbers<[1], [0], [0], [1], [0, 0, 1, 1], [], []>} : vector<16x128xbf16>, vector<128x128xbf16>, vector<16x128xf32> -> vector<16x128xf32>
    %c0_24 = arith.constant 0 : index
    %c0_25 = arith.constant 0 : index
    %c0_26 = arith.constant 0 : index
    %53 = vector.load %arg10[%c0_24, %c0_25, %c0_26] : memref<2x1x128xf32, #tpu.memory_space<vmem>>, vector<1x1x128xf32>
    %54 = vector.shape_cast %53 : vector<1x1x128xf32> to vector<1x128xf32>
    %55 = vector.broadcast %54 : vector<1x128xf32> to vector<16x128xf32>
    %56 = arith.addf %52, %55 : vector<16x128xf32>
    %57 = arith.truncf %49 : vector<16x128xf32> to vector<16x128xbf16>
    %cst_27 = arith.constant 0.000000e+00 : f32
    %58 = vector.broadcast %cst_27 : f32 to vector<16x128xf32>
    %59 = vector.broadcast %13 : vector<1x128xf32> to vector<16x128xf32>
    %60 = arith.mulf %42, %59 : vector<16x128xf32>
    %61 = arith.truncf %60 : vector<16x128xf32> to vector<16x128xbf16>
    %cst_28 = arith.constant dense<0.000000e+00> : vector<16x16xf32>
    %62 = tpu.matmul %61, %57, %cst_28 {dimension_numbers = #tpu.dot_dimension_numbers<[1], [1], [0], [0], [0, 0, 1, 0], [], []>} : vector<16x128xbf16>, vector<16x128xbf16>, vector<16x16xf32> -> vector<16x16xf32>
    %cst_29 = arith.constant 0.353553385 : f32
    %63 = vector.broadcast %cst_29 : f32 to vector<16x16xf32>
    %64 = arith.mulf %62, %63 : vector<16x16xf32>
    %65 = arith.addf %64, %1 : vector<16x16xf32>
    %cst_30 = arith.constant dense<0xFF800000> : vector<16xf32>
    %66 = vector.multi_reduction <maximumf>, %65, %cst_30 [1] : vector<16x16xf32> to vector<16xf32>
    %67 = vector.shape_cast %66 : vector<16xf32> to vector<16x1xf32>
    %68 = vector.broadcast %67 : vector<16x1xf32> to vector<16x16xf32>
    %69 = arith.subf %65, %68 : vector<16x16xf32>
    %70 = math.exp %69 : vector<16x16xf32>
    %cst_31 = arith.constant dense<0.000000e+00> : vector<16xf32>
    %71 = vector.multi_reduction <add>, %70, %cst_31 [1] : vector<16x16xf32> to vector<16xf32>
    %72 = vector.shape_cast %71 : vector<16xf32> to vector<16x1xf32>
    %73 = tpu.reciprocal %72 {approx = true} : vector<16x1xf32> -> vector<16x1xf32>
    %74 = vector.broadcast %73 : vector<16x1xf32> to vector<16x16xf32>
    %75 = arith.mulf %70, %74 : vector<16x16xf32>
    %76 = vector.broadcast %13 : vector<1x128xf32> to vector<16x128xf32>
    %77 = arith.mulf %56, %76 : vector<16x128xf32>
    %78 = arith.truncf %77 : vector<16x128xf32> to vector<16x128xbf16>
    %79 = arith.truncf %75 : vector<16x16xf32> to vector<16x16xbf16>
    %cst_32 = arith.constant dense<0.000000e+00> : vector<16x128xf32>
    %80 = tpu.matmul %79, %78, %cst_32 {dimension_numbers = #tpu.dot_dimension_numbers<[1], [0], [0], [1], [0, 0, 1, 1], [], []>} : vector<16x16xbf16>, vector<16x128xbf16>, vector<16x128xf32> -> vector<16x128xf32>
    %81 = arith.addf %58, %80 : vector<16x128xf32>
    %82 = vector.broadcast %20 : vector<1x128xf32> to vector<16x128xf32>
    %83 = arith.mulf %42, %82 : vector<16x128xf32>
    %84 = arith.truncf %83 : vector<16x128xf32> to vector<16x128xbf16>
    %cst_33 = arith.constant dense<0.000000e+00> : vector<16x16xf32>
    %85 = tpu.matmul %84, %57, %cst_33 {dimension_numbers = #tpu.dot_dimension_numbers<[1], [1], [0], [0], [0, 0, 1, 0], [], []>} : vector<16x128xbf16>, vector<16x128xbf16>, vector<16x16xf32> -> vector<16x16xf32>
    %cst_34 = arith.constant 0.353553385 : f32
    %86 = vector.broadcast %cst_34 : f32 to vector<16x16xf32>
    %87 = arith.mulf %85, %86 : vector<16x16xf32>
    %88 = arith.addf %87, %1 : vector<16x16xf32>
    %cst_35 = arith.constant dense<0xFF800000> : vector<16xf32>
    %89 = vector.multi_reduction <maximumf>, %88, %cst_35 [1] : vector<16x16xf32> to vector<16xf32>
    %90 = vector.shape_cast %89 : vector<16xf32> to vector<16x1xf32>
    %91 = vector.broadcast %90 : vector<16x1xf32> to vector<16x16xf32>
    %92 = arith.subf %88, %91 : vector<16x16xf32>
    %93 = math.exp %92 : vector<16x16xf32>
    %cst_36 = arith.constant dense<0.000000e+00> : vector<16xf32>
    %94 = vector.multi_reduction <add>, %93, %cst_36 [1] : vector<16x16xf32> to vector<16xf32>
    %95 = vector.shape_cast %94 : vector<16xf32> to vector<16x1xf32>
    %96 = tpu.reciprocal %95 {approx = true} : vector<16x1xf32> -> vector<16x1xf32>
    %97 = vector.broadcast %96 : vector<16x1xf32> to vector<16x16xf32>
    %98 = arith.mulf %93, %97 : vector<16x16xf32>
    %99 = vector.broadcast %20 : vector<1x128xf32> to vector<16x128xf32>
    %100 = arith.mulf %56, %99 : vector<16x128xf32>
    %101 = arith.truncf %100 : vector<16x128xf32> to vector<16x128xbf16>
    %102 = arith.truncf %98 : vector<16x16xf32> to vector<16x16xbf16>
    %cst_37 = arith.constant dense<0.000000e+00> : vector<16x128xf32>
    %103 = tpu.matmul %102, %101, %cst_37 {dimension_numbers = #tpu.dot_dimension_numbers<[1], [0], [0], [1], [0, 0, 1, 1], [], []>} : vector<16x16xbf16>, vector<16x128xbf16>, vector<16x128xf32> -> vector<16x128xf32>
    %104 = arith.addf %81, %103 : vector<16x128xf32>
    %105 = vector.broadcast %27 : vector<1x128xf32> to vector<16x128xf32>
    %106 = arith.mulf %42, %105 : vector<16x128xf32>
    %107 = arith.truncf %106 : vector<16x128xf32> to vector<16x128xbf16>
    %cst_38 = arith.constant dense<0.000000e+00> : vector<16x16xf32>
    %108 = tpu.matmul %107, %57, %cst_38 {dimension_numbers = #tpu.dot_dimension_numbers<[1], [1], [0], [0], [0, 0, 1, 0], [], []>} : vector<16x128xbf16>, vector<16x128xbf16>, vector<16x16xf32> -> vector<16x16xf32>
    %cst_39 = arith.constant 0.353553385 : f32
    %109 = vector.broadcast %cst_39 : f32 to vector<16x16xf32>
    %110 = arith.mulf %108, %109 : vector<16x16xf32>
    %111 = arith.addf %110, %1 : vector<16x16xf32>
    %cst_40 = arith.constant dense<0xFF800000> : vector<16xf32>
    %112 = vector.multi_reduction <maximumf>, %111, %cst_40 [1] : vector<16x16xf32> to vector<16xf32>
    %113 = vector.shape_cast %112 : vector<16xf32> to vector<16x1xf32>
    %114 = vector.broadcast %113 : vector<16x1xf32> to vector<16x16xf32>
    %115 = arith.subf %111, %114 : vector<16x16xf32>
    %116 = math.exp %115 : vector<16x16xf32>
    %cst_41 = arith.constant dense<0.000000e+00> : vector<16xf32>
    %117 = vector.multi_reduction <add>, %116, %cst_41 [1] : vector<16x16xf32> to vector<16xf32>
    %118 = vector.shape_cast %117 : vector<16xf32> to vector<16x1xf32>
    %119 = tpu.reciprocal %118 {approx = true} : vector<16x1xf32> -> vector<16x1xf32>
    %120 = vector.broadcast %119 : vector<16x1xf32> to vector<16x16xf32>
    %121 = arith.mulf %116, %120 : vector<16x16xf32>
    %122 = vector.broadcast %27 : vector<1x128xf32> to vector<16x128xf32>
    %123 = arith.mulf %56, %122 : vector<16x128xf32>
    %124 = arith.truncf %123 : vector<16x128xf32> to vector<16x128xbf16>
    %125 = arith.truncf %121 : vector<16x16xf32> to vector<16x16xbf16>
    %cst_42 = arith.constant dense<0.000000e+00> : vector<16x128xf32>
    %126 = tpu.matmul %125, %124, %cst_42 {dimension_numbers = #tpu.dot_dimension_numbers<[1], [0], [0], [1], [0, 0, 1, 1], [], []>} : vector<16x16xbf16>, vector<16x128xbf16>, vector<16x128xf32> -> vector<16x128xf32>
    %127 = arith.addf %104, %126 : vector<16x128xf32>
    %128 = vector.broadcast %34 : vector<1x128xf32> to vector<16x128xf32>
    %129 = arith.mulf %42, %128 : vector<16x128xf32>
    %130 = arith.truncf %129 : vector<16x128xf32> to vector<16x128xbf16>
    %cst_43 = arith.constant dense<0.000000e+00> : vector<16x16xf32>
    %131 = tpu.matmul %130, %57, %cst_43 {dimension_numbers = #tpu.dot_dimension_numbers<[1], [1], [0], [0], [0, 0, 1, 0], [], []>} : vector<16x128xbf16>, vector<16x128xbf16>, vector<16x16xf32> -> vector<16x16xf32>
    %cst_44 = arith.constant 0.353553385 : f32
    %132 = vector.broadcast %cst_44 : f32 to vector<16x16xf32>
    %133 = arith.mulf %131, %132 : vector<16x16xf32>
    %134 = arith.addf %133, %1 : vector<16x16xf32>
    %cst_45 = arith.constant dense<0xFF800000> : vector<16xf32>
    %135 = vector.multi_reduction <maximumf>, %134, %cst_45 [1] : vector<16x16xf32> to vector<16xf32>
    %136 = vector.shape_cast %135 : vector<16xf32> to vector<16x1xf32>
    %137 = vector.broadcast %136 : vector<16x1xf32> to vector<16x16xf32>
    %138 = arith.subf %134, %137 : vector<16x16xf32>
    %139 = math.exp %138 : vector<16x16xf32>
    %cst_46 = arith.constant dense<0.000000e+00> : vector<16xf32>
    %140 = vector.multi_reduction <add>, %139, %cst_46 [1] : vector<16x16xf32> to vector<16xf32>
    %141 = vector.shape_cast %140 : vector<16xf32> to vector<16x1xf32>
    %142 = tpu.reciprocal %141 {approx = true} : vector<16x1xf32> -> vector<16x1xf32>
    %143 = vector.broadcast %142 : vector<16x1xf32> to vector<16x16xf32>
    %144 = arith.mulf %139, %143 : vector<16x16xf32>
    %145 = vector.broadcast %34 : vector<1x128xf32> to vector<16x128xf32>
    %146 = arith.mulf %56, %145 : vector<16x128xf32>
    %147 = arith.truncf %146 : vector<16x128xf32> to vector<16x128xbf16>
    %148 = arith.truncf %144 : vector<16x16xf32> to vector<16x16xbf16>
    %cst_47 = arith.constant dense<0.000000e+00> : vector<16x128xf32>
    %149 = tpu.matmul %148, %147, %cst_47 {dimension_numbers = #tpu.dot_dimension_numbers<[1], [0], [0], [1], [0, 0, 1, 1], [], []>} : vector<16x16xbf16>, vector<16x128xbf16>, vector<16x128xf32> -> vector<16x128xf32>
    %150 = arith.addf %127, %149 : vector<16x128xf32>
    %151 = arith.truncf %150 : vector<16x128xf32> to vector<16x128xbf16>
    %c0_48 = arith.constant 0 : index
    %c0_49 = arith.constant 0 : index
    %c0_50 = arith.constant 0 : index
    %152 = vector.load %arg7[%c0_48, %c0_49, %c0_50] : memref<2x128x128xbf16, #tpu.memory_space<vmem>>, vector<1x128x128xbf16>
    %153 = vector.shape_cast %152 : vector<1x128x128xbf16> to vector<128x128xbf16>
    %cst_51 = arith.constant dense<0.000000e+00> : vector<16x128xf32>
    %154 = tpu.matmul %151, %153, %cst_51 {dimension_numbers = #tpu.dot_dimension_numbers<[1], [0], [0], [1], [0, 0, 1, 1], [], []>} : vector<16x128xbf16>, vector<128x128xbf16>, vector<16x128xf32> -> vector<16x128xf32>
    %c0_52 = arith.constant 0 : index
    %c0_53 = arith.constant 0 : index
    %c0_54 = arith.constant 0 : index
    %155 = vector.load %arg11[%c0_52, %c0_53, %c0_54] : memref<2x1x128xf32, #tpu.memory_space<vmem>>, vector<1x1x128xf32>
    %156 = vector.shape_cast %155 : vector<1x1x128xf32> to vector<1x128xf32>
    %157 = vector.broadcast %156 : vector<1x128xf32> to vector<16x128xf32>
    %158 = arith.addf %154, %157 : vector<16x128xf32>
    %159 = arith.addf %0, %158 : vector<16x128xf32>
    %c0_55 = arith.constant 0 : index
    %c0_56 = arith.constant 0 : index
    %c0_57 = arith.constant 0 : index
    %160 = vector.load %arg12[%c0_55, %c0_56, %c0_57] : memref<2x1x128xf32, #tpu.memory_space<vmem>>, vector<1x1x128xf32>
    %161 = vector.shape_cast %160 : vector<1x1x128xf32> to vector<1x128xf32>
    %c0_58 = arith.constant 0 : index
    %c0_59 = arith.constant 0 : index
    %c0_60 = arith.constant 0 : index
    %162 = vector.load %arg13[%c0_58, %c0_59, %c0_60] : memref<2x1x128xf32, #tpu.memory_space<vmem>>, vector<1x1x128xf32>
    %163 = vector.shape_cast %162 : vector<1x1x128xf32> to vector<1x128xf32>
    %cst_61 = arith.constant dense<0.000000e+00> : vector<16xf32>
    %164 = vector.multi_reduction <add>, %159, %cst_61 [1] : vector<16x128xf32> to vector<16xf32>
    %165 = vector.shape_cast %164 : vector<16xf32> to vector<16x1xf32>
    %cst_62 = arith.constant 3.125000e-02 : f32
    %166 = vector.broadcast %cst_62 : f32 to vector<16x1xf32>
    %167 = arith.mulf %165, %166 : vector<16x1xf32>
    %168 = vector.broadcast %167 : vector<16x1xf32> to vector<16x128xf32>
    %169 = arith.subf %159, %168 : vector<16x128xf32>
    %170 = vector.broadcast %6 : vector<1x128xf32> to vector<16x128xf32>
    %171 = arith.mulf %169, %170 : vector<16x128xf32>
    %172 = arith.mulf %171, %171 : vector<16x128xf32>
    %cst_63 = arith.constant dense<0.000000e+00> : vector<16xf32>
    %173 = vector.multi_reduction <add>, %172, %cst_63 [1] : vector<16x128xf32> to vector<16xf32>
    %174 = vector.shape_cast %173 : vector<16xf32> to vector<16x1xf32>
    %cst_64 = arith.constant 3.125000e-02 : f32
    %175 = vector.broadcast %cst_64 : f32 to vector<16x1xf32>
    %176 = arith.mulf %174, %175 : vector<16x1xf32>
    %cst_65 = arith.constant 9.99999974E-6 : f32
    %177 = vector.broadcast %cst_65 : f32 to vector<16x1xf32>
    %178 = arith.addf %176, %177 : vector<16x1xf32>
    %179 = math.rsqrt %178 : vector<16x1xf32>
    %180 = vector.broadcast %179 : vector<16x1xf32> to vector<16x128xf32>
    %181 = arith.mulf %171, %180 : vector<16x128xf32>
    %182 = vector.broadcast %161 : vector<1x128xf32> to vector<16x128xf32>
    %183 = arith.mulf %181, %182 : vector<16x128xf32>
    %184 = vector.broadcast %163 : vector<1x128xf32> to vector<16x128xf32>
    %185 = arith.addf %183, %184 : vector<16x128xf32>
    %186 = arith.truncf %185 : vector<16x128xf32> to vector<16x128xbf16>
    %c0_66 = arith.constant 0 : index
    %c0_67 = arith.constant 0 : index
    %c0_68 = arith.constant 0 : index
    %187 = vector.load %arg16[%c0_66, %c0_67, %c0_68] : memref<2x128x128xbf16, #tpu.memory_space<vmem>>, vector<1x128x128xbf16>
    %188 = vector.shape_cast %187 : vector<1x128x128xbf16> to vector<128x128xbf16>
    %cst_69 = arith.constant dense<0.000000e+00> : vector<16x128xf32>
    %189 = tpu.matmul %186, %188, %cst_69 {dimension_numbers = #tpu.dot_dimension_numbers<[1], [0], [0], [1], [0, 0, 1, 1], [], []>} : vector<16x128xbf16>, vector<128x128xbf16>, vector<16x128xf32> -> vector<16x128xf32>
    %c0_70 = arith.constant 0 : index
    %c0_71 = arith.constant 0 : index
    %c0_72 = arith.constant 0 : index
    %190 = vector.load %arg17[%c0_70, %c0_71, %c0_72] : memref<2x1x128xf32, #tpu.memory_space<vmem>>, vector<1x1x128xf32>
    %191 = vector.shape_cast %190 : vector<1x1x128xf32> to vector<1x128xf32>
    %192 = vector.broadcast %191 : vector<1x128xf32> to vector<16x128xf32>
    %193 = arith.addf %189, %192 : vector<16x128xf32>
    %cst_73 = arith.constant 0.000000e+00 : f32
    %194 = vector.broadcast %cst_73 : f32 to vector<16x128xf32>
    %195 = arith.maximumf %193, %194 : vector<16x128xf32>
    %196 = arith.truncf %195 : vector<16x128xf32> to vector<16x128xbf16>
    %c0_74 = arith.constant 0 : index
    %c0_75 = arith.constant 0 : index
    %c0_76 = arith.constant 0 : index
    %197 = vector.load %arg18[%c0_74, %c0_75, %c0_76] : memref<2x128x128xbf16, #tpu.memory_space<vmem>>, vector<1x128x128xbf16>
    %198 = vector.shape_cast %197 : vector<1x128x128xbf16> to vector<128x128xbf16>
    %cst_77 = arith.constant dense<0.000000e+00> : vector<16x128xf32>
    %199 = tpu.matmul %196, %198, %cst_77 {dimension_numbers = #tpu.dot_dimension_numbers<[1], [0], [0], [1], [0, 0, 1, 1], [], []>} : vector<16x128xbf16>, vector<128x128xbf16>, vector<16x128xf32> -> vector<16x128xf32>
    %c0_78 = arith.constant 0 : index
    %c0_79 = arith.constant 0 : index
    %c0_80 = arith.constant 0 : index
    %200 = vector.load %arg19[%c0_78, %c0_79, %c0_80] : memref<2x1x128xf32, #tpu.memory_space<vmem>>, vector<1x1x128xf32>
    %201 = vector.shape_cast %200 : vector<1x1x128xf32> to vector<1x128xf32>
    %202 = vector.broadcast %201 : vector<1x128xf32> to vector<16x128xf32>
    %203 = arith.addf %199, %202 : vector<16x128xf32>
    %204 = arith.addf %185, %203 : vector<16x128xf32>
    %c0_81 = arith.constant 0 : index
    %c0_82 = arith.constant 0 : index
    %c0_83 = arith.constant 0 : index
    %205 = vector.load %arg14[%c0_81, %c0_82, %c0_83] : memref<2x1x128xf32, #tpu.memory_space<vmem>>, vector<1x1x128xf32>
    %206 = vector.shape_cast %205 : vector<1x1x128xf32> to vector<1x128xf32>
    %c0_84 = arith.constant 0 : index
    %c0_85 = arith.constant 0 : index
    %c0_86 = arith.constant 0 : index
    %207 = vector.load %arg15[%c0_84, %c0_85, %c0_86] : memref<2x1x128xf32, #tpu.memory_space<vmem>>, vector<1x1x128xf32>
    %208 = vector.shape_cast %207 : vector<1x1x128xf32> to vector<1x128xf32>
    %cst_87 = arith.constant dense<0.000000e+00> : vector<16xf32>
    %209 = vector.multi_reduction <add>, %204, %cst_87 [1] : vector<16x128xf32> to vector<16xf32>
    %210 = vector.shape_cast %209 : vector<16xf32> to vector<16x1xf32>
    %cst_88 = arith.constant 3.125000e-02 : f32
    %211 = vector.broadcast %cst_88 : f32 to vector<16x1xf32>
    %212 = arith.mulf %210, %211 : vector<16x1xf32>
    %213 = vector.broadcast %212 : vector<16x1xf32> to vector<16x128xf32>
    %214 = arith.subf %204, %213 : vector<16x128xf32>
    %215 = vector.broadcast %6 : vector<1x128xf32> to vector<16x128xf32>
    %216 = arith.mulf %214, %215 : vector<16x128xf32>
    %217 = arith.mulf %216, %216 : vector<16x128xf32>
    %cst_89 = arith.constant dense<0.000000e+00> : vector<16xf32>
    %218 = vector.multi_reduction <add>, %217, %cst_89 [1] : vector<16x128xf32> to vector<16xf32>
    %219 = vector.shape_cast %218 : vector<16xf32> to vector<16x1xf32>
    %cst_90 = arith.constant 3.125000e-02 : f32
    %220 = vector.broadcast %cst_90 : f32 to vector<16x1xf32>
    %221 = arith.mulf %219, %220 : vector<16x1xf32>
    %cst_91 = arith.constant 9.99999974E-6 : f32
    %222 = vector.broadcast %cst_91 : f32 to vector<16x1xf32>
    %223 = arith.addf %221, %222 : vector<16x1xf32>
    %224 = math.rsqrt %223 : vector<16x1xf32>
    %225 = vector.broadcast %224 : vector<16x1xf32> to vector<16x128xf32>
    %226 = arith.mulf %216, %225 : vector<16x128xf32>
    %227 = vector.broadcast %206 : vector<1x128xf32> to vector<16x128xf32>
    %228 = arith.mulf %226, %227 : vector<16x128xf32>
    %229 = vector.broadcast %208 : vector<1x128xf32> to vector<16x128xf32>
    %230 = arith.addf %228, %229 : vector<16x128xf32>
    %231 = arith.truncf %230 : vector<16x128xf32> to vector<16x128xbf16>
    %c1 = arith.constant 1 : index
    %c0_92 = arith.constant 0 : index
    %c0_93 = arith.constant 0 : index
    %232 = vector.load %arg4[%c1, %c0_92, %c0_93] : memref<2x128x128xbf16, #tpu.memory_space<vmem>>, vector<1x128x128xbf16>
    %233 = vector.shape_cast %232 : vector<1x128x128xbf16> to vector<128x128xbf16>
    %cst_94 = arith.constant dense<0.000000e+00> : vector<16x128xf32>
    %234 = tpu.matmul %231, %233, %cst_94 {dimension_numbers = #tpu.dot_dimension_numbers<[1], [0], [0], [1], [0, 0, 1, 1], [], []>} : vector<16x128xbf16>, vector<128x128xbf16>, vector<16x128xf32> -> vector<16x128xf32>
    %c1_95 = arith.constant 1 : index
    %c0_96 = arith.constant 0 : index
    %c0_97 = arith.constant 0 : index
    %235 = vector.load %arg8[%c1_95, %c0_96, %c0_97] : memref<2x1x128xf32, #tpu.memory_space<vmem>>, vector<1x1x128xf32>
    %236 = vector.shape_cast %235 : vector<1x1x128xf32> to vector<1x128xf32>
    %237 = vector.broadcast %236 : vector<1x128xf32> to vector<16x128xf32>
    %238 = arith.addf %234, %237 : vector<16x128xf32>
    %c1_98 = arith.constant 1 : index
    %c0_99 = arith.constant 0 : index
    %c0_100 = arith.constant 0 : index
    %239 = vector.load %arg5[%c1_98, %c0_99, %c0_100] : memref<2x128x128xbf16, #tpu.memory_space<vmem>>, vector<1x128x128xbf16>
    %240 = vector.shape_cast %239 : vector<1x128x128xbf16> to vector<128x128xbf16>
    %cst_101 = arith.constant dense<0.000000e+00> : vector<16x128xf32>
    %241 = tpu.matmul %231, %240, %cst_101 {dimension_numbers = #tpu.dot_dimension_numbers<[1], [0], [0], [1], [0, 0, 1, 1], [], []>} : vector<16x128xbf16>, vector<128x128xbf16>, vector<16x128xf32> -> vector<16x128xf32>
    %c1_102 = arith.constant 1 : index
    %c0_103 = arith.constant 0 : index
    %c0_104 = arith.constant 0 : index
    %242 = vector.load %arg9[%c1_102, %c0_103, %c0_104] : memref<2x1x128xf32, #tpu.memory_space<vmem>>, vector<1x1x128xf32>
    %243 = vector.shape_cast %242 : vector<1x1x128xf32> to vector<1x128xf32>
    %244 = vector.broadcast %243 : vector<1x128xf32> to vector<16x128xf32>
    %245 = arith.addf %241, %244 : vector<16x128xf32>
    %c1_105 = arith.constant 1 : index
    %c0_106 = arith.constant 0 : index
    %c0_107 = arith.constant 0 : index
    %246 = vector.load %arg6[%c1_105, %c0_106, %c0_107] : memref<2x128x128xbf16, #tpu.memory_space<vmem>>, vector<1x128x128xbf16>
    %247 = vector.shape_cast %246 : vector<1x128x128xbf16> to vector<128x128xbf16>
    %cst_108 = arith.constant dense<0.000000e+00> : vector<16x128xf32>
    %248 = tpu.matmul %231, %247, %cst_108 {dimension_numbers = #tpu.dot_dimension_numbers<[1], [0], [0], [1], [0, 0, 1, 1], [], []>} : vector<16x128xbf16>, vector<128x128xbf16>, vector<16x128xf32> -> vector<16x128xf32>
    %c1_109 = arith.constant 1 : index
    %c0_110 = arith.constant 0 : index
    %c0_111 = arith.constant 0 : index
    %249 = vector.load %arg10[%c1_109, %c0_110, %c0_111] : memref<2x1x128xf32, #tpu.memory_space<vmem>>, vector<1x1x128xf32>
    %250 = vector.shape_cast %249 : vector<1x1x128xf32> to vector<1x128xf32>
    %251 = vector.broadcast %250 : vector<1x128xf32> to vector<16x128xf32>
    %252 = arith.addf %248, %251 : vector<16x128xf32>
    %253 = arith.truncf %245 : vector<16x128xf32> to vector<16x128xbf16>
    %cst_112 = arith.constant 0.000000e+00 : f32
    %254 = vector.broadcast %cst_112 : f32 to vector<16x128xf32>
    %255 = vector.broadcast %13 : vector<1x128xf32> to vector<16x128xf32>
    %256 = arith.mulf %238, %255 : vector<16x128xf32>
    %257 = arith.truncf %256 : vector<16x128xf32> to vector<16x128xbf16>
    %cst_113 = arith.constant dense<0.000000e+00> : vector<16x16xf32>
    %258 = tpu.matmul %257, %253, %cst_113 {dimension_numbers = #tpu.dot_dimension_numbers<[1], [1], [0], [0], [0, 0, 1, 0], [], []>} : vector<16x128xbf16>, vector<16x128xbf16>, vector<16x16xf32> -> vector<16x16xf32>
    %cst_114 = arith.constant 0.353553385 : f32
    %259 = vector.broadcast %cst_114 : f32 to vector<16x16xf32>
    %260 = arith.mulf %258, %259 : vector<16x16xf32>
    %261 = arith.addf %260, %1 : vector<16x16xf32>
    %cst_115 = arith.constant dense<0xFF800000> : vector<16xf32>
    %262 = vector.multi_reduction <maximumf>, %261, %cst_115 [1] : vector<16x16xf32> to vector<16xf32>
    %263 = vector.shape_cast %262 : vector<16xf32> to vector<16x1xf32>
    %264 = vector.broadcast %263 : vector<16x1xf32> to vector<16x16xf32>
    %265 = arith.subf %261, %264 : vector<16x16xf32>
    %266 = math.exp %265 : vector<16x16xf32>
    %cst_116 = arith.constant dense<0.000000e+00> : vector<16xf32>
    %267 = vector.multi_reduction <add>, %266, %cst_116 [1] : vector<16x16xf32> to vector<16xf32>
    %268 = vector.shape_cast %267 : vector<16xf32> to vector<16x1xf32>
    %269 = tpu.reciprocal %268 {approx = true} : vector<16x1xf32> -> vector<16x1xf32>
    %270 = vector.broadcast %269 : vector<16x1xf32> to vector<16x16xf32>
    %271 = arith.mulf %266, %270 : vector<16x16xf32>
    %272 = vector.broadcast %13 : vector<1x128xf32> to vector<16x128xf32>
    %273 = arith.mulf %252, %272 : vector<16x128xf32>
    %274 = arith.truncf %273 : vector<16x128xf32> to vector<16x128xbf16>
    %275 = arith.truncf %271 : vector<16x16xf32> to vector<16x16xbf16>
    %cst_117 = arith.constant dense<0.000000e+00> : vector<16x128xf32>
    %276 = tpu.matmul %275, %274, %cst_117 {dimension_numbers = #tpu.dot_dimension_numbers<[1], [0], [0], [1], [0, 0, 1, 1], [], []>} : vector<16x16xbf16>, vector<16x128xbf16>, vector<16x128xf32> -> vector<16x128xf32>
    %277 = arith.addf %254, %276 : vector<16x128xf32>
    %278 = vector.broadcast %20 : vector<1x128xf32> to vector<16x128xf32>
    %279 = arith.mulf %238, %278 : vector<16x128xf32>
    %280 = arith.truncf %279 : vector<16x128xf32> to vector<16x128xbf16>
    %cst_118 = arith.constant dense<0.000000e+00> : vector<16x16xf32>
    %281 = tpu.matmul %280, %253, %cst_118 {dimension_numbers = #tpu.dot_dimension_numbers<[1], [1], [0], [0], [0, 0, 1, 0], [], []>} : vector<16x128xbf16>, vector<16x128xbf16>, vector<16x16xf32> -> vector<16x16xf32>
    %cst_119 = arith.constant 0.353553385 : f32
    %282 = vector.broadcast %cst_119 : f32 to vector<16x16xf32>
    %283 = arith.mulf %281, %282 : vector<16x16xf32>
    %284 = arith.addf %283, %1 : vector<16x16xf32>
    %cst_120 = arith.constant dense<0xFF800000> : vector<16xf32>
    %285 = vector.multi_reduction <maximumf>, %284, %cst_120 [1] : vector<16x16xf32> to vector<16xf32>
    %286 = vector.shape_cast %285 : vector<16xf32> to vector<16x1xf32>
    %287 = vector.broadcast %286 : vector<16x1xf32> to vector<16x16xf32>
    %288 = arith.subf %284, %287 : vector<16x16xf32>
    %289 = math.exp %288 : vector<16x16xf32>
    %cst_121 = arith.constant dense<0.000000e+00> : vector<16xf32>
    %290 = vector.multi_reduction <add>, %289, %cst_121 [1] : vector<16x16xf32> to vector<16xf32>
    %291 = vector.shape_cast %290 : vector<16xf32> to vector<16x1xf32>
    %292 = tpu.reciprocal %291 {approx = true} : vector<16x1xf32> -> vector<16x1xf32>
    %293 = vector.broadcast %292 : vector<16x1xf32> to vector<16x16xf32>
    %294 = arith.mulf %289, %293 : vector<16x16xf32>
    %295 = vector.broadcast %20 : vector<1x128xf32> to vector<16x128xf32>
    %296 = arith.mulf %252, %295 : vector<16x128xf32>
    %297 = arith.truncf %296 : vector<16x128xf32> to vector<16x128xbf16>
    %298 = arith.truncf %294 : vector<16x16xf32> to vector<16x16xbf16>
    %cst_122 = arith.constant dense<0.000000e+00> : vector<16x128xf32>
    %299 = tpu.matmul %298, %297, %cst_122 {dimension_numbers = #tpu.dot_dimension_numbers<[1], [0], [0], [1], [0, 0, 1, 1], [], []>} : vector<16x16xbf16>, vector<16x128xbf16>, vector<16x128xf32> -> vector<16x128xf32>
    %300 = arith.addf %277, %299 : vector<16x128xf32>
    %301 = vector.broadcast %27 : vector<1x128xf32> to vector<16x128xf32>
    %302 = arith.mulf %238, %301 : vector<16x128xf32>
    %303 = arith.truncf %302 : vector<16x128xf32> to vector<16x128xbf16>
    %cst_123 = arith.constant dense<0.000000e+00> : vector<16x16xf32>
    %304 = tpu.matmul %303, %253, %cst_123 {dimension_numbers = #tpu.dot_dimension_numbers<[1], [1], [0], [0], [0, 0, 1, 0], [], []>} : vector<16x128xbf16>, vector<16x128xbf16>, vector<16x16xf32> -> vector<16x16xf32>
    %cst_124 = arith.constant 0.353553385 : f32
    %305 = vector.broadcast %cst_124 : f32 to vector<16x16xf32>
    %306 = arith.mulf %304, %305 : vector<16x16xf32>
    %307 = arith.addf %306, %1 : vector<16x16xf32>
    %cst_125 = arith.constant dense<0xFF800000> : vector<16xf32>
    %308 = vector.multi_reduction <maximumf>, %307, %cst_125 [1] : vector<16x16xf32> to vector<16xf32>
    %309 = vector.shape_cast %308 : vector<16xf32> to vector<16x1xf32>
    %310 = vector.broadcast %309 : vector<16x1xf32> to vector<16x16xf32>
    %311 = arith.subf %307, %310 : vector<16x16xf32>
    %312 = math.exp %311 : vector<16x16xf32>
    %cst_126 = arith.constant dense<0.000000e+00> : vector<16xf32>
    %313 = vector.multi_reduction <add>, %312, %cst_126 [1] : vector<16x16xf32> to vector<16xf32>
    %314 = vector.shape_cast %313 : vector<16xf32> to vector<16x1xf32>
    %315 = tpu.reciprocal %314 {approx = true} : vector<16x1xf32> -> vector<16x1xf32>
    %316 = vector.broadcast %315 : vector<16x1xf32> to vector<16x16xf32>
    %317 = arith.mulf %312, %316 : vector<16x16xf32>
    %318 = vector.broadcast %27 : vector<1x128xf32> to vector<16x128xf32>
    %319 = arith.mulf %252, %318 : vector<16x128xf32>
    %320 = arith.truncf %319 : vector<16x128xf32> to vector<16x128xbf16>
    %321 = arith.truncf %317 : vector<16x16xf32> to vector<16x16xbf16>
    %cst_127 = arith.constant dense<0.000000e+00> : vector<16x128xf32>
    %322 = tpu.matmul %321, %320, %cst_127 {dimension_numbers = #tpu.dot_dimension_numbers<[1], [0], [0], [1], [0, 0, 1, 1], [], []>} : vector<16x16xbf16>, vector<16x128xbf16>, vector<16x128xf32> -> vector<16x128xf32>
    %323 = arith.addf %300, %322 : vector<16x128xf32>
    %324 = vector.broadcast %34 : vector<1x128xf32> to vector<16x128xf32>
    %325 = arith.mulf %238, %324 : vector<16x128xf32>
    %326 = arith.truncf %325 : vector<16x128xf32> to vector<16x128xbf16>
    %cst_128 = arith.constant dense<0.000000e+00> : vector<16x16xf32>
    %327 = tpu.matmul %326, %253, %cst_128 {dimension_numbers = #tpu.dot_dimension_numbers<[1], [1], [0], [0], [0, 0, 1, 0], [], []>} : vector<16x128xbf16>, vector<16x128xbf16>, vector<16x16xf32> -> vector<16x16xf32>
    %cst_129 = arith.constant 0.353553385 : f32
    %328 = vector.broadcast %cst_129 : f32 to vector<16x16xf32>
    %329 = arith.mulf %327, %328 : vector<16x16xf32>
    %330 = arith.addf %329, %1 : vector<16x16xf32>
    %cst_130 = arith.constant dense<0xFF800000> : vector<16xf32>
    %331 = vector.multi_reduction <maximumf>, %330, %cst_130 [1] : vector<16x16xf32> to vector<16xf32>
    %332 = vector.shape_cast %331 : vector<16xf32> to vector<16x1xf32>
    %333 = vector.broadcast %332 : vector<16x1xf32> to vector<16x16xf32>
    %334 = arith.subf %330, %333 : vector<16x16xf32>
    %335 = math.exp %334 : vector<16x16xf32>
    %cst_131 = arith.constant dense<0.000000e+00> : vector<16xf32>
    %336 = vector.multi_reduction <add>, %335, %cst_131 [1] : vector<16x16xf32> to vector<16xf32>
    %337 = vector.shape_cast %336 : vector<16xf32> to vector<16x1xf32>
    %338 = tpu.reciprocal %337 {approx = true} : vector<16x1xf32> -> vector<16x1xf32>
    %339 = vector.broadcast %338 : vector<16x1xf32> to vector<16x16xf32>
    %340 = arith.mulf %335, %339 : vector<16x16xf32>
    %341 = vector.broadcast %34 : vector<1x128xf32> to vector<16x128xf32>
    %342 = arith.mulf %252, %341 : vector<16x128xf32>
    %343 = arith.truncf %342 : vector<16x128xf32> to vector<16x128xbf16>
    %344 = arith.truncf %340 : vector<16x16xf32> to vector<16x16xbf16>
    %cst_132 = arith.constant dense<0.000000e+00> : vector<16x128xf32>
    %345 = tpu.matmul %344, %343, %cst_132 {dimension_numbers = #tpu.dot_dimension_numbers<[1], [0], [0], [1], [0, 0, 1, 1], [], []>} : vector<16x16xbf16>, vector<16x128xbf16>, vector<16x128xf32> -> vector<16x128xf32>
    %346 = arith.addf %323, %345 : vector<16x128xf32>
    %347 = arith.truncf %346 : vector<16x128xf32> to vector<16x128xbf16>
    %c1_133 = arith.constant 1 : index
    %c0_134 = arith.constant 0 : index
    %c0_135 = arith.constant 0 : index
    %348 = vector.load %arg7[%c1_133, %c0_134, %c0_135] : memref<2x128x128xbf16, #tpu.memory_space<vmem>>, vector<1x128x128xbf16>
    %349 = vector.shape_cast %348 : vector<1x128x128xbf16> to vector<128x128xbf16>
    %cst_136 = arith.constant dense<0.000000e+00> : vector<16x128xf32>
    %350 = tpu.matmul %347, %349, %cst_136 {dimension_numbers = #tpu.dot_dimension_numbers<[1], [0], [0], [1], [0, 0, 1, 1], [], []>} : vector<16x128xbf16>, vector<128x128xbf16>, vector<16x128xf32> -> vector<16x128xf32>
    %c1_137 = arith.constant 1 : index
    %c0_138 = arith.constant 0 : index
    %c0_139 = arith.constant 0 : index
    %351 = vector.load %arg11[%c1_137, %c0_138, %c0_139] : memref<2x1x128xf32, #tpu.memory_space<vmem>>, vector<1x1x128xf32>
    %352 = vector.shape_cast %351 : vector<1x1x128xf32> to vector<1x128xf32>
    %353 = vector.broadcast %352 : vector<1x128xf32> to vector<16x128xf32>
    %354 = arith.addf %350, %353 : vector<16x128xf32>
    %355 = arith.addf %230, %354 : vector<16x128xf32>
    %c1_140 = arith.constant 1 : index
    %c0_141 = arith.constant 0 : index
    %c0_142 = arith.constant 0 : index
    %356 = vector.load %arg12[%c1_140, %c0_141, %c0_142] : memref<2x1x128xf32, #tpu.memory_space<vmem>>, vector<1x1x128xf32>
    %357 = vector.shape_cast %356 : vector<1x1x128xf32> to vector<1x128xf32>
    %c1_143 = arith.constant 1 : index
    %c0_144 = arith.constant 0 : index
    %c0_145 = arith.constant 0 : index
    %358 = vector.load %arg13[%c1_143, %c0_144, %c0_145] : memref<2x1x128xf32, #tpu.memory_space<vmem>>, vector<1x1x128xf32>
    %359 = vector.shape_cast %358 : vector<1x1x128xf32> to vector<1x128xf32>
    %cst_146 = arith.constant dense<0.000000e+00> : vector<16xf32>
    %360 = vector.multi_reduction <add>, %355, %cst_146 [1] : vector<16x128xf32> to vector<16xf32>
    %361 = vector.shape_cast %360 : vector<16xf32> to vector<16x1xf32>
    %cst_147 = arith.constant 3.125000e-02 : f32
    %362 = vector.broadcast %cst_147 : f32 to vector<16x1xf32>
    %363 = arith.mulf %361, %362 : vector<16x1xf32>
    %364 = vector.broadcast %363 : vector<16x1xf32> to vector<16x128xf32>
    %365 = arith.subf %355, %364 : vector<16x128xf32>
    %366 = vector.broadcast %6 : vector<1x128xf32> to vector<16x128xf32>
    %367 = arith.mulf %365, %366 : vector<16x128xf32>
    %368 = arith.mulf %367, %367 : vector<16x128xf32>
    %cst_148 = arith.constant dense<0.000000e+00> : vector<16xf32>
    %369 = vector.multi_reduction <add>, %368, %cst_148 [1] : vector<16x128xf32> to vector<16xf32>
    %370 = vector.shape_cast %369 : vector<16xf32> to vector<16x1xf32>
    %cst_149 = arith.constant 3.125000e-02 : f32
    %371 = vector.broadcast %cst_149 : f32 to vector<16x1xf32>
    %372 = arith.mulf %370, %371 : vector<16x1xf32>
    %cst_150 = arith.constant 9.99999974E-6 : f32
    %373 = vector.broadcast %cst_150 : f32 to vector<16x1xf32>
    %374 = arith.addf %372, %373 : vector<16x1xf32>
    %375 = math.rsqrt %374 : vector<16x1xf32>
    %376 = vector.broadcast %375 : vector<16x1xf32> to vector<16x128xf32>
    %377 = arith.mulf %367, %376 : vector<16x128xf32>
    %378 = vector.broadcast %357 : vector<1x128xf32> to vector<16x128xf32>
    %379 = arith.mulf %377, %378 : vector<16x128xf32>
    %380 = vector.broadcast %359 : vector<1x128xf32> to vector<16x128xf32>
    %381 = arith.addf %379, %380 : vector<16x128xf32>
    %382 = arith.truncf %381 : vector<16x128xf32> to vector<16x128xbf16>
    %c1_151 = arith.constant 1 : index
    %c0_152 = arith.constant 0 : index
    %c0_153 = arith.constant 0 : index
    %383 = vector.load %arg16[%c1_151, %c0_152, %c0_153] : memref<2x128x128xbf16, #tpu.memory_space<vmem>>, vector<1x128x128xbf16>
    %384 = vector.shape_cast %383 : vector<1x128x128xbf16> to vector<128x128xbf16>
    %cst_154 = arith.constant dense<0.000000e+00> : vector<16x128xf32>
    %385 = tpu.matmul %382, %384, %cst_154 {dimension_numbers = #tpu.dot_dimension_numbers<[1], [0], [0], [1], [0, 0, 1, 1], [], []>} : vector<16x128xbf16>, vector<128x128xbf16>, vector<16x128xf32> -> vector<16x128xf32>
    %c1_155 = arith.constant 1 : index
    %c0_156 = arith.constant 0 : index
    %c0_157 = arith.constant 0 : index
    %386 = vector.load %arg17[%c1_155, %c0_156, %c0_157] : memref<2x1x128xf32, #tpu.memory_space<vmem>>, vector<1x1x128xf32>
    %387 = vector.shape_cast %386 : vector<1x1x128xf32> to vector<1x128xf32>
    %388 = vector.broadcast %387 : vector<1x128xf32> to vector<16x128xf32>
    %389 = arith.addf %385, %388 : vector<16x128xf32>
    %cst_158 = arith.constant 0.000000e+00 : f32
    %390 = vector.broadcast %cst_158 : f32 to vector<16x128xf32>
    %391 = arith.maximumf %389, %390 : vector<16x128xf32>
    %392 = arith.truncf %391 : vector<16x128xf32> to vector<16x128xbf16>
    %c1_159 = arith.constant 1 : index
    %c0_160 = arith.constant 0 : index
    %c0_161 = arith.constant 0 : index
    %393 = vector.load %arg18[%c1_159, %c0_160, %c0_161] : memref<2x128x128xbf16, #tpu.memory_space<vmem>>, vector<1x128x128xbf16>
    %394 = vector.shape_cast %393 : vector<1x128x128xbf16> to vector<128x128xbf16>
    %cst_162 = arith.constant dense<0.000000e+00> : vector<16x128xf32>
    %395 = tpu.matmul %392, %394, %cst_162 {dimension_numbers = #tpu.dot_dimension_numbers<[1], [0], [0], [1], [0, 0, 1, 1], [], []>} : vector<16x128xbf16>, vector<128x128xbf16>, vector<16x128xf32> -> vector<16x128xf32>
    %c1_163 = arith.constant 1 : index
    %c0_164 = arith.constant 0 : index
    %c0_165 = arith.constant 0 : index
    %396 = vector.load %arg19[%c1_163, %c0_164, %c0_165] : memref<2x1x128xf32, #tpu.memory_space<vmem>>, vector<1x1x128xf32>
    %397 = vector.shape_cast %396 : vector<1x1x128xf32> to vector<1x128xf32>
    %398 = vector.broadcast %397 : vector<1x128xf32> to vector<16x128xf32>
    %399 = arith.addf %395, %398 : vector<16x128xf32>
    %400 = arith.addf %381, %399 : vector<16x128xf32>
    %c1_166 = arith.constant 1 : index
    %c0_167 = arith.constant 0 : index
    %c0_168 = arith.constant 0 : index
    %401 = vector.load %arg14[%c1_166, %c0_167, %c0_168] : memref<2x1x128xf32, #tpu.memory_space<vmem>>, vector<1x1x128xf32>
    %402 = vector.shape_cast %401 : vector<1x1x128xf32> to vector<1x128xf32>
    %c1_169 = arith.constant 1 : index
    %c0_170 = arith.constant 0 : index
    %c0_171 = arith.constant 0 : index
    %403 = vector.load %arg15[%c1_169, %c0_170, %c0_171] : memref<2x1x128xf32, #tpu.memory_space<vmem>>, vector<1x1x128xf32>
    %404 = vector.shape_cast %403 : vector<1x1x128xf32> to vector<1x128xf32>
    %cst_172 = arith.constant dense<0.000000e+00> : vector<16xf32>
    %405 = vector.multi_reduction <add>, %400, %cst_172 [1] : vector<16x128xf32> to vector<16xf32>
    %406 = vector.shape_cast %405 : vector<16xf32> to vector<16x1xf32>
    %cst_173 = arith.constant 3.125000e-02 : f32
    %407 = vector.broadcast %cst_173 : f32 to vector<16x1xf32>
    %408 = arith.mulf %406, %407 : vector<16x1xf32>
    %409 = vector.broadcast %408 : vector<16x1xf32> to vector<16x128xf32>
    %410 = arith.subf %400, %409 : vector<16x128xf32>
    %411 = vector.broadcast %6 : vector<1x128xf32> to vector<16x128xf32>
    %412 = arith.mulf %410, %411 : vector<16x128xf32>
    %413 = arith.mulf %412, %412 : vector<16x128xf32>
    %cst_174 = arith.constant dense<0.000000e+00> : vector<16xf32>
    %414 = vector.multi_reduction <add>, %413, %cst_174 [1] : vector<16x128xf32> to vector<16xf32>
    %415 = vector.shape_cast %414 : vector<16xf32> to vector<16x1xf32>
    %cst_175 = arith.constant 3.125000e-02 : f32
    %416 = vector.broadcast %cst_175 : f32 to vector<16x1xf32>
    %417 = arith.mulf %415, %416 : vector<16x1xf32>
    %cst_176 = arith.constant 9.99999974E-6 : f32
    %418 = vector.broadcast %cst_176 : f32 to vector<16x1xf32>
    %419 = arith.addf %417, %418 : vector<16x1xf32>
    %420 = math.rsqrt %419 : vector<16x1xf32>
    %421 = vector.broadcast %420 : vector<16x1xf32> to vector<16x128xf32>
    %422 = arith.mulf %412, %421 : vector<16x128xf32>
    %423 = vector.broadcast %402 : vector<1x128xf32> to vector<16x128xf32>
    %424 = arith.mulf %422, %423 : vector<16x128xf32>
    %425 = vector.broadcast %404 : vector<1x128xf32> to vector<16x128xf32>
    %426 = arith.addf %424, %425 : vector<16x128xf32>
    %c0_177 = arith.constant 0 : index
    %c0_178 = arith.constant 0 : index
    %427 = vector.load %arg3[%c0_177, %c0_178] : memref<128x128xf32, #tpu.memory_space<vmem>>, vector<128x128xf32>
    %cst_179 = arith.constant 1.000000e-10 : f32
    %428 = vector.broadcast %cst_179 : f32 to vector<128x128xf32>
    %429 = arith.addf %427, %428 : vector<128x128xf32>
    %430 = arith.truncf %429 : vector<128x128xf32> to vector<128x128xbf16>
    %431 = arith.truncf %426 : vector<16x128xf32> to vector<16x128xbf16>
    %cst_180 = arith.constant dense<0.000000e+00> : vector<16x128xf32>
    %432 = tpu.matmul %431, %430, %cst_180 {dimension_numbers = #tpu.dot_dimension_numbers<[1], [1], [0], [0], [0, 0, 1, 0], [], []>} : vector<16x128xbf16>, vector<128x128xbf16>, vector<16x128xf32> -> vector<16x128xf32>
    %cst_181 = arith.constant 0.000000e+00 : f32
    %433 = vector.broadcast %cst_181 : f32 to vector<16x128xf32>
    %434 = arith.minimumf %432, %433 : vector<16x128xf32>
    %435 = math.absf %432 : vector<16x128xf32>
    %cst_182 = arith.constant 0.000000e+00 : f32
    %436 = vector.broadcast %cst_182 : f32 to vector<16x128xf32>
    %437 = arith.subf %436, %435 : vector<16x128xf32>
    %438 = math.exp %437 : vector<16x128xf32>
    %cst_183 = arith.constant 1.000000e+00 : f32
    %439 = vector.broadcast %cst_183 : f32 to vector<16x128xf32>
    %440 = arith.addf %439, %438 : vector<16x128xf32>
    %441 = math.log %440 : vector<16x128xf32>
    %442 = arith.subf %434, %441 : vector<16x128xf32>
    %443 = arith.addf %432, %442 : vector<16x128xf32>
    %444 = tpu.iota {dimensions = array<i32: 1>} : vector<1x128xi32>
    %c64_i32 = arith.constant 64 : i32
    %445 = vector.broadcast %c64_i32 : i32 to vector<1x128xi32>
    %446 = arith.cmpi slt, %444, %445 : vector<1x128xi32>
    %cst_184 = arith.constant 0xFF800000 : f32
    %447 = vector.shape_cast %446 : vector<1x128xi1> to vector<1x128xi1>
    %448 = vector.broadcast %447 : vector<1x128xi1> to vector<16x128xi1>
    %449 = vector.broadcast %cst_184 : f32 to vector<16x128xf32>
    %450 = arith.select %448, %443, %449 : vector<16x128xi1>, vector<16x128xf32>
    %cst_185 = arith.constant dense<0xFF800000> : vector<16xf32>
    %451 = vector.multi_reduction <maximumf>, %450, %cst_185 [1] : vector<16x128xf32> to vector<16xf32>
    %452 = vector.shape_cast %451 : vector<16xf32> to vector<16x1xf32>
    %453 = vector.broadcast %452 : vector<16x1xf32> to vector<16x128xf32>
    %454 = arith.subf %450, %453 : vector<16x128xf32>
    %455 = math.exp %454 : vector<16x128xf32>
    %cst_186 = arith.constant dense<0.000000e+00> : vector<16xf32>
    %456 = vector.multi_reduction <add>, %455, %cst_186 [1] : vector<16x128xf32> to vector<16xf32>
    %457 = vector.shape_cast %456 : vector<16xf32> to vector<16x1xf32>
    %458 = math.log %457 : vector<16x1xf32>
    %459 = arith.addf %452, %458 : vector<16x1xf32>
    %460 = vector.broadcast %459 : vector<16x1xf32> to vector<16x128xf32>
    %461 = arith.subf %443, %460 : vector<16x128xf32>
    %c0_187 = arith.constant 0 : index
    %c0_188 = arith.constant 0 : index
    %462 = vector.load %arg20[%c0_187, %c0_188] : memref<16x128xf32, #tpu.memory_space<vmem>>, vector<16x128xf32>
    tpu.vector_store %arg20[%c0_187, %c0_188], %461 {strides = array<i32>} : memref<16x128xf32, #tpu.memory_space<vmem>>, vector<16x128xf32>,
    return
  }
  func.func @transform_0(%arg0: i32) -> (i32, i32) {
    %c0_i32 = arith.constant 0 : i32
    %c0_i32_0 = arith.constant 0 : i32
    %c0_i32_1 = arith.constant 0 : i32
    return %c0_i32, %c0_i32_0 : i32, i32
  }
  func.func @transform_1(%arg0: i32) -> (i32, i32) {
    %c0_i32 = arith.constant 0 : i32
    %c0_i32_0 = arith.constant 0 : i32
    %c0_i32_1 = arith.constant 0 : i32
    return %c0_i32, %c0_i32_0 : i32, i32
  }
  func.func @transform_2(%arg0: i32) -> (i32, i32) {
    %c0_i32 = arith.constant 0 : i32
    %c0_i32_0 = arith.constant 0 : i32
    %c0_i32_1 = arith.constant 0 : i32
    return %c0_i32, %c0_i32_0 : i32, i32
  }
  func.func @transform_3(%arg0: i32) -> (i32, i32, i32) {
    %c0_i32 = arith.constant 0 : i32
    %c0_i32_0 = arith.constant 0 : i32
    %c0_i32_1 = arith.constant 0 : i32
    %c0_i32_2 = arith.constant 0 : i32
    return %c0_i32, %c0_i32_0, %c0_i32_1 : i32, i32, i32
  }
  func.func @transform_4(%arg0: i32) -> (i32, i32, i32) {
    %c0_i32 = arith.constant 0 : i32
    %c0_i32_0 = arith.constant 0 : i32
    %c0_i32_1 = arith.constant 0 : i32
    %c0_i32_2 = arith.constant 0 : i32
    return %c0_i32, %c0_i32_0, %c0_i32_1 : i32, i32, i32
  }
  func.func @transform_5(%arg0: i32) -> (i32, i32, i32) {
    %c0_i32 = arith.constant 0 : i32
    %c0_i32_0 = arith.constant 0 : i32
    %c0_i32_1 = arith.constant 0 : i32
    %c0_i32_2 = arith.constant 0 : i32
    return %c0_i32, %c0_i32_0, %c0_i32_1 : i32, i32, i32
  }
  func.func @transform_6(%arg0: i32) -> (i32, i32, i32) {
    %c0_i32 = arith.constant 0 : i32
    %c0_i32_0 = arith.constant 0 : i32
    %c0_i32_1 = arith.constant 0 : i32
    %c0_i32_2 = arith.constant 0 : i32
    return %c0_i32, %c0_i32_0, %c0_i32_1 : i32, i32, i32
  }
  func.func @transform_7(%arg0: i32) -> (i32, i32, i32) {
    %c0_i32 = arith.constant 0 : i32
    %c0_i32_0 = arith.constant 0 : i32
    %c0_i32_1 = arith.constant 0 : i32
    %c0_i32_2 = arith.constant 0 : i32
    return %c0_i32, %c0_i32_0, %c0_i32_1 : i32, i32, i32
  }
  func.func @transform_8(%arg0: i32) -> (i32, i32, i32) {
    %c0_i32 = arith.constant 0 : i32
    %c0_i32_0 = arith.constant 0 : i32
    %c0_i32_1 = arith.constant 0 : i32
    %c0_i32_2 = arith.constant 0 : i32
    return %c0_i32, %c0_i32_0, %c0_i32_1 : i32, i32, i32
  }
  func.func @transform_9(%arg0: i32) -> (i32, i32, i32) {
    %c0_i32 = arith.constant 0 : i32
    %c0_i32_0 = arith.constant 0 : i32
    %c0_i32_1 = arith.constant 0 : i32
    %c0_i32_2 = arith.constant 0 : i32
    return %c0_i32, %c0_i32_0, %c0_i32_1 : i32, i32, i32
  }
  func.func @transform_10(%arg0: i32) -> (i32, i32, i32) {
    %c0_i32 = arith.constant 0 : i32
    %c0_i32_0 = arith.constant 0 : i32
    %c0_i32_1 = arith.constant 0 : i32
    %c0_i32_2 = arith.constant 0 : i32
    return %c0_i32, %c0_i32_0, %c0_i32_1 : i32, i32, i32
  }
  func.func @transform_11(%arg0: i32) -> (i32, i32, i32) {
    %c0_i32 = arith.constant 0 : i32
    %c0_i32_0 = arith.constant 0 : i32
    %c0_i32_1 = arith.constant 0 : i32
    %c0_i32_2 = arith.constant 0 : i32
    return %c0_i32, %c0_i32_0, %c0_i32_1 : i32, i32, i32
  }
  func.func @transform_12(%arg0: i32) -> (i32, i32, i32) {
    %c0_i32 = arith.constant 0 : i32
    %c0_i32_0 = arith.constant 0 : i32
    %c0_i32_1 = arith.constant 0 : i32
    %c0_i32_2 = arith.constant 0 : i32
    return %c0_i32, %c0_i32_0, %c0_i32_1 : i32, i32, i32
  }
  func.func @transform_13(%arg0: i32) -> (i32, i32, i32) {
    %c0_i32 = arith.constant 0 : i32
    %c0_i32_0 = arith.constant 0 : i32
    %c0_i32_1 = arith.constant 0 : i32
    %c0_i32_2 = arith.constant 0 : i32
    return %c0_i32, %c0_i32_0, %c0_i32_1 : i32, i32, i32
  }
  func.func @transform_14(%arg0: i32) -> (i32, i32, i32) {
    %c0_i32 = arith.constant 0 : i32
    %c0_i32_0 = arith.constant 0 : i32
    %c0_i32_1 = arith.constant 0 : i32
    %c0_i32_2 = arith.constant 0 : i32
    return %c0_i32, %c0_i32_0, %c0_i32_1 : i32, i32, i32
  }
  func.func @transform_15(%arg0: i32) -> (i32, i32, i32) {
    %c0_i32 = arith.constant 0 : i32
    %c0_i32_0 = arith.constant 0 : i32
    %c0_i32_1 = arith.constant 0 : i32
    %c0_i32_2 = arith.constant 0 : i32
    return %c0_i32, %c0_i32_0, %c0_i32_1 : i32, i32, i32
  }
  func.func @transform_16(%arg0: i32) -> (i32, i32, i32) {
    %c0_i32 = arith.constant 0 : i32
    %c0_i32_0 = arith.constant 0 : i32
    %c0_i32_1 = arith.constant 0 : i32
    %c0_i32_2 = arith.constant 0 : i32
    return %c0_i32, %c0_i32_0, %c0_i32_1 : i32, i32, i32
  }
  func.func @transform_17(%arg0: i32) -> (i32, i32, i32) {
    %c0_i32 = arith.constant 0 : i32
    %c0_i32_0 = arith.constant 0 : i32
    %c0_i32_1 = arith.constant 0 : i32
    %c0_i32_2 = arith.constant 0 : i32
    return %c0_i32, %c0_i32_0, %c0_i32_1 : i32, i32, i32
  }
  func.func @transform_18(%arg0: i32) -> (i32, i32, i32) {
    %c0_i32 = arith.constant 0 : i32
    %c0_i32_0 = arith.constant 0 : i32
    %c0_i32_1 = arith.constant 0 : i32
    %c0_i32_2 = arith.constant 0 : i32
    return %c0_i32, %c0_i32_0, %c0_i32_1 : i32, i32, i32
  }
  func.func @transform_19(%arg0: i32) -> (i32, i32) {
    %c0_i32 = arith.constant 0 : i32
    %c0_i32_0 = arith.constant 0 : i32
    %c0_i32_1 = arith.constant 0 : i32
    return %c0_i32, %c0_i32_0 : i32, i32
  }
}

</mosaic_0001>

<llo_original>
// kernel: tpu_custom_call.1
$region0: #{tpu_custom_call.1}
  #allocation0 [shape = 'u32[]', space=smem, size = 0x4, offset = 0x4, fixed_abs, tag = 'smem constant byte address 0x4 - core index']
  #allocation1 [shape = 'u32[72,128]{1,0:T(1,128)}', space=vmem, size = 0x9000, scoped, tag = 'internal scratch']
  %s0 = inlined_call_operand.hbm [shape: f32[16,128], index: 0, kind: input, shape index: {}]
  %s1 = inlined_call_operand.hbm [shape: f32[16,16], index: 1, kind: input, shape index: {}]
  %s2 = inlined_call_operand.hbm [shape: f32[128,128], index: 2, kind: input, shape index: {}]
  %s3 = inlined_call_operand.hbm [shape: bf16[2,128,128], index: 3, kind: input, shape index: {}]
  %s4 = inlined_call_operand.hbm [shape: bf16[2,128,128], index: 4, kind: input, shape index: {}]
  %s5 = inlined_call_operand.hbm [shape: bf16[2,128,128], index: 5, kind: input, shape index: {}]
  %s6 = inlined_call_operand.hbm [shape: bf16[2,128,128], index: 6, kind: input, shape index: {}]
  %s7 = inlined_call_operand.vmem [shape: f32[2,1,128], index: 7, kind: input, shape index: {}]
  %s8 = inlined_call_operand.vmem [shape: f32[2,1,128], index: 8, kind: input, shape index: {}]
  %s9 = inlined_call_operand.vmem [shape: f32[2,1,128], index: 9, kind: input, shape index: {}]
  %s10 = inlined_call_operand.vmem [shape: f32[2,1,128], index: 10, kind: input, shape index: {}]
  %s11 = inlined_call_operand.vmem [shape: f32[2,1,128], index: 11, kind: input, shape index: {}]
  %s12 = inlined_call_operand.hbm [shape: f32[2,1,128], index: 12, kind: input, shape index: {}]
  %s13 = inlined_call_operand.vmem [shape: f32[2,1,128], index: 13, kind: input, shape index: {}]
  %s14 = inlined_call_operand.hbm [shape: f32[2,1,128], index: 14, kind: input, shape index: {}]
  %s15 = inlined_call_operand.hbm [shape: bf16[2,128,128], index: 15, kind: input, shape index: {}]
  %s16 = inlined_call_operand.vmem [shape: f32[2,1,128], index: 16, kind: input, shape index: {}]
  %s17 = inlined_call_operand.hbm [shape: bf16[2,128,128], index: 17, kind: input, shape index: {}]
  %s18 = inlined_call_operand.vmem [shape: f32[2,1,128], index: 18, kind: input, shape index: {}]
  %s19 = inlined_call_operand.hbm [shape: f32[16,128], index: 19, kind: output, shape index: {}]
  %s20 = sld [smem:[#allocation0]]
  $region130: #{tpu_custom_call.1} parent=0
    _
  %s22 = ssub.s32 1, %s20
  %s23 = scalar_select 0, %s22, %s20
  $region1: #{tpu_custom_call.1} parent=0
    #allocation2 [shape = 'u8[8192]{0}', space=vmem, size = 0x2000, scoped, tag = 'input window, operand 0, single buffered']
    #allocation3 [shape = 's32[1]{0}', space=sflag, size = 0x4, scoped, tag = 'scoped memory for tpu_custom_call.1']
    #allocation4 [shape = 's32[1]{0}', space=sflag, size = 0x4, scoped, tag = 'scoped memory for tpu_custom_call.1']
    #allocation5 [shape = 'u8[8192]{0}', space=vmem, size = 0x2000, scoped, tag = 'input window, operand 1, single buffered']
    #allocation6 [shape = 's32[1]{0}', space=sflag, size = 0x4, scoped, tag = 'scoped memory for tpu_custom_call.1']
    #allocation7 [shape = 'u8[65536]{0}', space=vmem, size = 0x10000, scoped, tag = 'input window, operand 2, single buffered']
    #allocation8 [shape = 'u8[65536]{0}', space=vmem, size = 0x10000, scoped, tag = 'input window, operand 3, single buffered']
    #allocation9 [shape = 's32[1]{0}', space=sflag, size = 0x4, scoped, tag = 'scoped memory for tpu_custom_call.1']
    #allocation10 [shape = 'u8[65536]{0}', space=vmem, size = 0x10000, scoped, tag = 'input window, operand 4, single buffered']
    #allocation11 [shape = 'u8[65536]{0}', space=vmem, size = 0x10000, scoped, tag = 'input window, operand 5, single buffered']
    #allocation12 [shape = 's32[1]{0}', space=sflag, size = 0x4, scoped, tag = 'scoped memory for tpu_custom_call.1']
    #allocation13 [shape = 'u8[65536]{0}', space=vmem, size = 0x10000, scoped, tag = 'input window, operand 6, single buffered']
    #allocation14 [shape = 'u8[1024]{0}', space=vmem, size = 0x400, scoped, tag = 'input window, operand 12, single buffered']
    #allocation15 [shape = 's32[1]{0}', space=sflag, size = 0x4, scoped, tag = 'scoped memory for tpu_custom_call.1']
    #allocation16 [shape = 'u8[1024]{0}', space=vmem, size = 0x400, scoped, tag = 'input window, operand 14, single buffered']
    #allocation17 [shape = 'u8[65536]{0}', space=vmem, size = 0x10000, scoped, tag = 'input window, operand 15, single buffered']
    #allocation18 [shape = 's32[1]{0}', space=sflag, size = 0x4, scoped, tag = 'scoped memory for tpu_custom_call.1']
    #allocation19 [shape = 'u8[65536]{0}', space=vmem, size = 0x10000, scoped, tag = 'input window, operand 17, single buffered']
    #allocation20 [shape = 'u8[8192]{0}', space=vmem, size = 0x2000, scoped, tag = 'output window, operand 0, single buffered']
    %24 = vsyncpa [#allocation3], 0
    %25 = vsyncpa [#allocation6], 0
    %26 = vsyncpa [#allocation9], 0
    %27 = vsyncpa [#allocation12], 0
    %28 = vsyncpa [#allocation15], 0
    %29 = vsyncpa [#allocation18], 0
    %30 = vsyncpa [#allocation4], 0
    // Predicated region
    $region2: #{tpu_custom_call.1} parent=1 // pred_check
      _
    $region3: #{tpu_custom_call.1} parent=1 // pred_check_branch
      %32 = sbr.rel (0) target = $region5
    $region4: #{tpu_custom_call.1} parent=1 // pred_region
      %34 = vsyncadd [#allocation3], 0
      %s35 = sshll.u32 %s0, 4
      %s36 = int_to_ptr.hbm [resolvable:$true] %s35
      %s37 = sshll.u32 [#allocation2], 4
      %s38 = int_to_ptr.vmem [resolvable:$true] %s37
      %43 = dma.hbm_to_vmem [thread:$0]  %s36, 256, %s38, [#allocation3], 128, 128, 8
    $region5: #{tpu_custom_call.1} parent=1 // pred_fallthru
      _
    // Predicated region
    $region6: #{tpu_custom_call.1} parent=1 // pred_check
      _
    $region7: #{tpu_custom_call.1} parent=1 // pred_check_branch
      %45 = sbr.rel (0) target = $region9
    $region8: #{tpu_custom_call.1} parent=1 // pred_region
      %47 = vsyncadd [#allocation6], 0
      %s48 = sshll.u32 %s1, 4
      %s49 = int_to_ptr.hbm [resolvable:$true] %s48
      %s50 = sshll.u32 [#allocation5], 4
      %s51 = int_to_ptr.vmem [resolvable:$true] %s50
      %56 = dma.hbm_to_vmem [thread:$0]  %s49, 256, %s51, [#allocation6], 128, 128, 8
    $region9: #{tpu_custom_call.1} parent=1 // pred_fallthru
      _
    // Predicated region
    $region10: #{tpu_custom_call.1} parent=1 // pred_check
      _
    $region11: #{tpu_custom_call.1} parent=1 // pred_check_branch
      %58 = sbr.rel (0) target = $region13
    $region12: #{tpu_custom_call.1} parent=1 // pred_region
      %60 = vsyncadd [#allocation6], 0
      %s61 = sshll.u32 %s2, 4
      %s62 = int_to_ptr.hbm [resolvable:$true] %s61
      %s63 = sshll.u32 [#allocation7], 4
      %s64 = int_to_ptr.vmem [resolvable:$true] %s63
      %69 = dma.hbm_to_vmem [thread:$0]  %s62, 2048, %s64, [#allocation6], 128, 128, 8
    $region13: #{tpu_custom_call.1} parent=1 // pred_fallthru
      _
    // Predicated region
    $region14: #{tpu_custom_call.1} parent=1 // pred_check
      _
    $region15: #{tpu_custom_call.1} parent=1 // pred_check_branch
      %71 = sbr.rel (0) target = $region17
    $region16: #{tpu_custom_call.1} parent=1 // pred_region
      %73 = vsyncadd [#allocation9], 0
      %s74 = sshll.u32 %s3, 4
      %s75 = int_to_ptr.hbm [resolvable:$true] %s74
      %s76 = sshll.u32 [#allocation8], 4
      %s77 = int_to_ptr.vmem [resolvable:$true] %s76
      %82 = dma.hbm_to_vmem [thread:$0]  %s75, 2048, %s77, [#allocation9], 64, 64, 4
    $region17: #{tpu_custom_call.1} parent=1 // pred_fallthru
      _
    // Predicated region
    $region18: #{tpu_custom_call.1} parent=1 // pred_check
      _
    $region19: #{tpu_custom_call.1} parent=1 // pred_check_branch
      %84 = sbr.rel (0) target = $region21
    $region20: #{tpu_custom_call.1} parent=1 // pred_region
      %86 = vsyncadd [#allocation9], 0
      %s87 = sshll.u32 %s4, 4
      %s88 = int_to_ptr.hbm [resolvable:$true] %s87
      %s89 = sshll.u32 [#allocation10], 4
      %s90 = int_to_ptr.vmem [resolvable:$true] %s89
      %95 = dma.hbm_to_vmem [thread:$0]  %s88, 2048, %s90, [#allocation9], 64, 64, 4
    $region21: #{tpu_custom_call.1} parent=1 // pred_fallthru
      _
    // Predicated region
    $region22: #{tpu_custom_call.1} parent=1 // pred_check
      _
    $region23: #{tpu_custom_call.1} parent=1 // pred_check_branch
      %97 = sbr.rel (0) target = $region25
    $region24: #{tpu_custom_call.1} parent=1 // pred_region
      %99 = vsyncadd [#allocation12], 0
      %s100 = sshll.u32 %s5, 4
      %s101 = int_to_ptr.hbm [resolvable:$true] %s100
      %s102 = sshll.u32 [#allocation11], 4
      %s103 = int_to_ptr.vmem [resolvable:$true] %s102
      %108 = dma.hbm_to_vmem [thread:$0]  %s101, 2048, %s103, [#allocation12], 64, 64, 4
    $region25: #{tpu_custom_call.1} parent=1 // pred_fallthru
      _
    // Predicated region
    $region26: #{tpu_custom_call.1} parent=1 // pred_check
      _
    $region27: #{tpu_custom_call.1} parent=1 // pred_check_branch
      %110 = sbr.rel (0) target = $region29
    $region28: #{tpu_custom_call.1} parent=1 // pred_region
      %112 = vsyncadd [#allocation12], 0
      %s113 = sshll.u32 %s6, 4
      %s114 = int_to_ptr.hbm [resolvable:$true] %s113
      %s115 = sshll.u32 [#allocation13], 4
      %s116 = int_to_ptr.vmem [resolvable:$true] %s115
      %121 = dma.hbm_to_vmem [thread:$0]  %s114, 2048, %s116, [#allocation12], 64, 64, 4
    $region29: #{tpu_custom_call.1} parent=1 // pred_fallthru
      _
    // Predicated region
    $region30: #{tpu_custom_call.1} parent=1 // pred_check
      _
    $region31: #{tpu_custom_call.1} parent=1 // pred_check_branch
      %123 = sbr.rel (0) target = $region33
    $region32: #{tpu_custom_call.1} parent=1 // pred_region
      _
    $region33: #{tpu_custom_call.1} parent=1 // pred_fallthru
      _
    // Predicated region
    $region34: #{tpu_custom_call.1} parent=1 // pred_check
      _
    $region35: #{tpu_custom_call.1} parent=1 // pred_check_branch
      %125 = sbr.rel (0) target = $region37
    $region36: #{tpu_custom_call.1} parent=1 // pred_region
      _
    $region37: #{tpu_custom_call.1} parent=1 // pred_fallthru
      _
    // Predicated region
    $region38: #{tpu_custom_call.1} parent=1 // pred_check
      _
    $region39: #{tpu_custom_call.1} parent=1 // pred_check_branch
      %127 = sbr.rel (0) target = $region41
    $region40: #{tpu_custom_call.1} parent=1 // pred_region
      _
    $region41: #{tpu_custom_call.1} parent=1 // pred_fallthru
      _
    // Predicated region
    $region42: #{tpu_custom_call.1} parent=1 // pred_check
      _
    $region43: #{tpu_custom_call.1} parent=1 // pred_check_branch
      %129 = sbr.rel (0) target = $region45
    $region44: #{tpu_custom_call.1} parent=1 // pred_region
      _
    $region45: #{tpu_custom_call.1} parent=1 // pred_fallthru
      _
    // Predicated region
    $region46: #{tpu_custom_call.1} parent=1 // pred_check
      _
    $region47: #{tpu_custom_call.1} parent=1 // pred_check_branch
      %131 = sbr.rel (0) target = $region49
    $region48: #{tpu_custom_call.1} parent=1 // pred_region
      _
    $region49: #{tpu_custom_call.1} parent=1 // pred_fallthru
      _
    // Predicated region
    $region50: #{tpu_custom_call.1} parent=1 // pred_check
      _
    $region51: #{tpu_custom_call.1} parent=1 // pred_check_branch
      %133 = sbr.rel (0) target = $region53
    $region52: #{tpu_custom_call.1} parent=1 // pred_region
      %135 = vsyncadd [#allocation15], 0
      %s136 = sshll.u32 %s12, 4
      %s137 = int_to_ptr.hbm [resolvable:$true] %s136
      %s138 = sshll.u32 [#allocation14], 4
      %s139 = int_to_ptr.vmem [resolvable:$true] %s138
      %144 = dma.hbm_to_vmem [thread:$0]  %s137, 32, %s139, [#allocation15], 16, 16, 1
    $region53: #{tpu_custom_call.1} parent=1 // pred_fallthru
      _
    // Predicated region
    $region54: #{tpu_custom_call.1} parent=1 // pred_check
      _
    $region55: #{tpu_custom_call.1} parent=1 // pred_check_branch
      %146 = sbr.rel (0) target = $region57
    $region56: #{tpu_custom_call.1} parent=1 // pred_region
      _
    $region57: #{tpu_custom_call.1} parent=1 // pred_fallthru
      _
    // Predicated region
    $region58: #{tpu_custom_call.1} parent=1 // pred_check
      _
    $region59: #{tpu_custom_call.1} parent=1 // pred_check_branch
      %148 = sbr.rel (0) target = $region61
    $region60: #{tpu_custom_call.1} parent=1 // pred_region
      %150 = vsyncadd [#allocation15], 0
      %s151 = sshll.u32 %s14, 4
      %s152 = int_to_ptr.hbm [resolvable:$true] %s151
      %s153 = sshll.u32 [#allocation16], 4
      %s154 = int_to_ptr.vmem [resolvable:$true] %s153
      %159 = dma.hbm_to_vmem [thread:$0]  %s152, 32, %s154, [#allocation15], 16, 16, 1
    $region61: #{tpu_custom_call.1} parent=1 // pred_fallthru
      _
    // Predicated region
    $region62: #{tpu_custom_call.1} parent=1 // pred_check
      _
    $region63: #{tpu_custom_call.1} parent=1 // pred_check_branch
      %161 = sbr.rel (0) target = $region65
    $region64: #{tpu_custom_call.1} parent=1 // pred_region
      %163 = vsyncadd [#allocation18], 0
      %s164 = sshll.u32 %s15, 4
      %s165 = int_to_ptr.hbm [resolvable:$true] %s164
      %s166 = sshll.u32 [#allocation17], 4
      %s167 = int_to_ptr.vmem [resolvable:$true] %s166
      %172 = dma.hbm_to_vmem [thread:$0]  %s165, 2048, %s167, [#allocation18], 64, 64, 4
    $region65: #{tpu_custom_call.1} parent=1 // pred_fallthru
      _
    // Predicated region
    $region66: #{tpu_custom_call.1} parent=1 // pred_check
      _
    $region67: #{tpu_custom_call.1} parent=1 // pred_check_branch
      %174 = sbr.rel (0) target = $region69
    $region68: #{tpu_custom_call.1} parent=1 // pred_region
      _
    $region69: #{tpu_custom_call.1} parent=1 // pred_fallthru
      _
    // Predicated region
    $region70: #{tpu_custom_call.1} parent=1 // pred_check
      _
    $region71: #{tpu_custom_call.1} parent=1 // pred_check_branch
      %176 = sbr.rel (0) target = $region73
    $region72: #{tpu_custom_call.1} parent=1 // pred_region
      %178 = vsyncadd [#allocation18], 0
      %s179 = sshll.u32 %s17, 4
      %s180 = int_to_ptr.hbm [resolvable:$true] %s179
      %s181 = sshll.u32 [#allocation19], 4
      %s182 = int_to_ptr.vmem [resolvable:$true] %s181
      %187 = dma.hbm_to_vmem [thread:$0]  %s180, 2048, %s182, [#allocation18], 64, 64, 4
    $region73: #{tpu_custom_call.1} parent=1 // pred_fallthru
      _
    // Predicated region
    $region74: #{tpu_custom_call.1} parent=1 // pred_check
      _
    $region75: #{tpu_custom_call.1} parent=1 // pred_check_branch
      %189 = sbr.rel (0) target = $region77
    $region76: #{tpu_custom_call.1} parent=1 // pred_region
      _
    $region77: #{tpu_custom_call.1} parent=1 // pred_fallthru
      _
    // Predicated region
    $region78: #{tpu_custom_call.1} parent=1 // pred_check
      _
    $region79: #{tpu_custom_call.1} parent=1 // pred_check_branch
      %191 = sbr.rel (0) target = $region81
    $region80: #{tpu_custom_call.1} parent=1 // pred_region
      %193 = dma.done [#allocation3], 256
    $region81: #{tpu_custom_call.1} parent=1 // pred_fallthru
      _
    // Predicated region
    $region82: #{tpu_custom_call.1} parent=1 // pred_check
      _
    $region83: #{tpu_custom_call.1} parent=1 // pred_check_branch
      %195 = sbr.rel (0) target = $region85
    $region84: #{tpu_custom_call.1} parent=1 // pred_region
      %197 = dma.done [#allocation6], 256
    $region85: #{tpu_custom_call.1} parent=1 // pred_fallthru
      _
    // Predicated region
    $region86: #{tpu_custom_call.1} parent=1 // pred_check
      _
    $region87: #{tpu_custom_call.1} parent=1 // pred_check_branch
      %199 = sbr.rel (0) target = $region89
    $region88: #{tpu_custom_call.1} parent=1 // pred_region
      %201 = dma.done [#allocation6], 2048
    $region89: #{tpu_custom_call.1} parent=1 // pred_fallthru
      _
    // Predicated region
    $region90: #{tpu_custom_call.1} parent=1 // pred_check
      _
    $region91: #{tpu_custom_call.1} parent=1 // pred_check_branch
      %203 = sbr.rel (0) target = $region93
    $region92: #{tpu_custom_call.1} parent=1 // pred_region
      %205 = dma.done [#allocation9], 2048
    $region93: #{tpu_custom_call.1} parent=1 // pred_fallthru
      _
    // Predicated region
    $region94: #{tpu_custom_call.1} parent=1 // pred_check
      _
    $region95: #{tpu_custom_call.1} parent=1 // pred_check_branch
      %207 = sbr.rel (0) target = $region97
    $region96: #{tpu_custom_call.1} parent=1 // pred_region
      %209 = dma.done [#allocation9], 2048
    $region97: #{tpu_custom_call.1} parent=1 // pred_fallthru
      _
    // Predicated region
    $region98: #{tpu_custom_call.1} parent=1 // pred_check
      _
    $region99: #{tpu_custom_call.1} parent=1 // pred_check_branch
      %211 = sbr.rel (0) target = $region101
    $region100: #{tpu_custom_call.1} parent=1 // pred_region
      %213 = dma.done [#allocation12], 2048
    $region101: #{tpu_custom_call.1} parent=1 // pred_fallthru
      _
    // Predicated region
    $region102: #{tpu_custom_call.1} parent=1 // pred_check
      _
    $region103: #{tpu_custom_call.1} parent=1 // pred_check_branch
      %215 = sbr.rel (0) target = $region105
    $region104: #{tpu_custom_call.1} parent=1 // pred_region
      %217 = dma.done [#allocation12], 2048
    $region105: #{tpu_custom_call.1} parent=1 // pred_fallthru
      _
    // Predicated region
    $region106: #{tpu_custom_call.1} parent=1 // pred_check
      _
    $region107: #{tpu_custom_call.1} parent=1 // pred_check_branch
      %219 = sbr.rel (0) target = $region109
    $region108: #{tpu_custom_call.1} parent=1 // pred_region
      %221 = dma.done [#allocation15], 32
    $region109: #{tpu_custom_call.1} parent=1 // pred_fallthru
      _
    // Predicated region
    $region110: #{tpu_custom_call.1} parent=1 // pred_check
      _
    $region111: #{tpu_custom_call.1} parent=1 // pred_check_branch
      %223 = sbr.rel (0) target = $region113
    $region112: #{tpu_custom_call.1} parent=1 // pred_region
      %225 = dma.done [#allocation15], 32
    $region113: #{tpu_custom_call.1} parent=1 // pred_fallthru
      _
    // Predicated region
    $region114: #{tpu_custom_call.1} parent=1 // pred_check
      _
    $region115: #{tpu_custom_call.1} parent=1 // pred_check_branch
      %227 = sbr.rel (0) target = $region117
    $region116: #{tpu_custom_call.1} parent=1 // pred_region
      %229 = dma.done [#allocation18], 2048
    $region117: #{tpu_custom_call.1} parent=1 // pred_fallthru
      _
    // Predicated region
    $region118: #{tpu_custom_call.1} parent=1 // pred_check
      _
    $region119: #{tpu_custom_call.1} parent=1 // pred_check_branch
      %231 = sbr.rel (0) target = $region121
    $region120: #{tpu_custom_call.1} parent=1 // pred_region
      %233 = dma.done [#allocation18], 2048
    $region121: #{tpu_custom_call.1} parent=1 // pred_fallthru
      _
    %v235 = vld [vmem:[#allocation2] sm:$0xff]
    %v236 = vld [vmem:[#allocation2 + $0x8] sm:$0xff]
    %v237 = vld [vmem:[#allocation5] sm:$0xff]
    %v238 = vld [vmem:[#allocation5 + $0x8] sm:$0xff]
    %v239 = vlaneseq
    %v240 = vand.u32 %v239, 127
    %vm241 = vcmp.lt.s32.totalorder %v240, 32
    %v242 = vsel %vm241, 1, 0
    %v243 = vcvt.s32.f32 %v242
    %vm244 = vcmp.ge.s32.totalorder %v240, 0
    %vm245 = vcmp.lt.s32.totalorder %v240, 8
    %vm246 = vmand %vm244, %vm245
    %v247 = vsel %vm246, 1, 0
    %v248 = vcvt.s32.f32 %v247
    %vm249 = vcmp.ge.s32.totalorder %v240, 8
    %vm250 = vcmp.lt.s32.totalorder %v240, 16
    %vm251 = vmand %vm249, %vm250
    %v252 = vsel %vm251, 1, 0
    %v253 = vcvt.s32.f32 %v252
    %vm254 = vcmp.ge.s32.totalorder %v240, 16
    %vm255 = vcmp.lt.s32.totalorder %v240, 24
    %vm256 = vmand %vm254, %vm255
    %v257 = vsel %vm256, 1, 0
    %v258 = vcvt.s32.f32 %v257
    %vm259 = vcmp.ge.s32.totalorder %v240, 24
    %vm260 = vmand %vm259, %vm241
    %v261 = vsel %vm260, 1, 0
    %v262 = vcvt.s32.f32 %v261
    %v263 = vpack.c.bf16 %v236, %v235
    %v264 = vld [vmem:[#allocation8] sm:$0xf]
    %v265 = vld [vmem:[#allocation8 + $0x4] sm:$0xf]
    %v266 = vld [vmem:[#allocation8 + $0x8] sm:$0xf]
    %v267 = vld [vmem:[#allocation8 + $0xc] sm:$0xf]
    %v268 = vld [vmem:[#allocation8 + $0x10] sm:$0xf]
    %v269 = vld [vmem:[#allocation8 + $0x14] sm:$0xf]
    %v270 = vld [vmem:[#allocation8 + $0x18] sm:$0xf]
    %v271 = vld [vmem:[#allocation8 + $0x1c] sm:$0xf]
    %v272 = vld [vmem:[#allocation8 + $0x20] sm:$0xf]
    %v273 = vld [vmem:[#allocation8 + $0x24] sm:$0xf]
    %v274 = vld [vmem:[#allocation8 + $0x28] sm:$0xf]
    %v275 = vld [vmem:[#allocation8 + $0x2c] sm:$0xf]
    %v276 = vld [vmem:[#allocation8 + $0x30] sm:$0xf]
    %v277 = vld [vmem:[#allocation8 + $0x34] sm:$0xf]
    %v278 = vld [vmem:[#allocation8 + $0x38] sm:$0xf]
    %v279 = vld [vmem:[#allocation8 + $0x3c] sm:$0xf]
    %v280 = vld [vmem:[%s7] sm:$0x1]
    %v282 = vperm.slane %v280, 0
    %v300 = vunpack.c.l.b16 %v264
    %v301 = vunpack.c.l.b16 %v265
    %v302 = vunpack.c.l.b16 %v266
    %v303 = vunpack.c.l.b16 %v267
    %v304 = vunpack.c.l.b16 %v268
    %v305 = vunpack.c.l.b16 %v269
    %v306 = vunpack.c.l.b16 %v270
    %v307 = vunpack.c.l.b16 %v271
    %v308 = vunpack.c.l.b16 %v272
    %v309 = vunpack.c.l.b16 %v273
    %v310 = vunpack.c.l.b16 %v274
    %v311 = vunpack.c.l.b16 %v275
    %v312 = vunpack.c.l.b16 %v276
    %v313 = vunpack.c.l.b16 %v277
    %v314 = vunpack.c.l.b16 %v278
    %v315 = vunpack.c.l.b16 %v279
    %v316 = vpack.c.b16 %v301, %v300
    %v317 = vpack.c.b16 %v303, %v302
    %v318 = vpack.c.b16 %v305, %v304
    %v319 = vpack.c.b16 %v307, %v306
    %v320 = vpack.c.b16 %v309, %v308
    %v321 = vpack.c.b16 %v311, %v310
    %v322 = vpack.c.b16 %v313, %v312
    %v323 = vpack.c.b16 %v315, %v314
    %332 = vmatpush.bf16.msra.mxu0 %v323
    %333 = vmatpush.bf16.msra.mxu0 %v322
    %334 = vmatpush.bf16.msra.mxu0 %v321
    %335 = vmatpush.bf16.msra.mxu0 %v320
    %336 = vmatpush.bf16.msra.mxu0 %v319
    %337 = vmatpush.bf16.msra.mxu0 %v318
    %338 = vmatpush.bf16.msra.mxu0 %v317
    %339 = vmatpush.bf16.msra.mxu0 %v316
    %340 = vmatmul.bf16.gmra.mxu0 %v263
    %v341 = vpop.f32.mrf.mxu0
    %v342 = vadd.f32 %v282, %v341
    %v343 = vpop.f32.mrf.mxu0
    %v344 = vadd.f32 %v282, %v343
    %345 = vdwg.mxu0
    %v346 = vld [vmem:[#allocation10] sm:$0xf]
    %v347 = vld [vmem:[#allocation10 + $0x4] sm:$0xf]
    %v348 = vld [vmem:[#allocation10 + $0x8] sm:$0xf]
    %v349 = vld [vmem:[#allocation10 + $0xc] sm:$0xf]
    %v350 = vld [vmem:[#allocation10 + $0x10] sm:$0xf]
    %v351 = vld [vmem:[#allocation10 + $0x14] sm:$0xf]
    %v352 = vld [vmem:[#allocation10 + $0x18] sm:$0xf]
    %v353 = vld [vmem:[#allocation10 + $0x1c] sm:$0xf]
    %v354 = vld [vmem:[#allocation10 + $0x20] sm:$0xf]
    %v355 = vld [vmem:[#allocation10 + $0x24] sm:$0xf]
    %v356 = vld [vmem:[#allocation10 + $0x28] sm:$0xf]
    %v357 = vld [vmem:[#allocation10 + $0x2c] sm:$0xf]
    %v358 = vld [vmem:[#allocation10 + $0x30] sm:$0xf]
    %v359 = vld [vmem:[#allocation10 + $0x34] sm:$0xf]
    %v360 = vld [vmem:[#allocation10 + $0x38] sm:$0xf]
    %v361 = vld [vmem:[#allocation10 + $0x3c] sm:$0xf]
    %v362 = vld [vmem:[%s8] sm:$0x1]
    %v364 = vperm.slane %v362, 0
    %v382 = vunpack.c.l.b16 %v346
    %v383 = vunpack.c.l.b16 %v347
    %v384 = vunpack.c.l.b16 %v348
    %v385 = vunpack.c.l.b16 %v349
    %v386 = vunpack.c.l.b16 %v350
    %v387 = vunpack.c.l.b16 %v351
    %v388 = vunpack.c.l.b16 %v352
    %v389 = vunpack.c.l.b16 %v353
    %v390 = vunpack.c.l.b16 %v354
    %v391 = vunpack.c.l.b16 %v355
    %v392 = vunpack.c.l.b16 %v356
    %v393 = vunpack.c.l.b16 %v357
    %v394 = vunpack.c.l.b16 %v358
    %v395 = vunpack.c.l.b16 %v359
    %v396 = vunpack.c.l.b16 %v360
    %v397 = vunpack.c.l.b16 %v361
    %v398 = vpack.c.b16 %v383, %v382
    %v399 = vpack.c.b16 %v385, %v384
    %v400 = vpack.c.b16 %v387, %v386
    %v401 = vpack.c.b16 %v389, %v388
    %v402 = vpack.c.b16 %v391, %v390
    %v403 = vpack.c.b16 %v393, %v392
    %v404 = vpack.c.b16 %v395, %v394
    %v405 = vpack.c.b16 %v397, %v396
    %414 = vmatpush.bf16.msra.mxu0 %v405
    %415 = vmatpush.bf16.msra.mxu0 %v404
    %416 = vmatpush.bf16.msra.mxu0 %v403
    %417 = vmatpush.bf16.msra.mxu0 %v402
    %418 = vmatpush.bf16.msra.mxu0 %v401
    %419 = vmatpush.bf16.msra.mxu0 %v400
    %420 = vmatpush.bf16.msra.mxu0 %v399
    %421 = vmatpush.bf16.msra.mxu0 %v398
    %422 = vmatmul.bf16.gmra.mxu0 %v263
    %v423 = vpop.f32.mrf.mxu0
    %v424 = vadd.f32 %v364, %v423
    %v425 = vpop.f32.mrf.mxu0
    %v426 = vadd.f32 %v364, %v425
    %427 = vdwg.mxu0
    %v428 = vld [vmem:[#allocation11] sm:$0xf]
    %v429 = vld [vmem:[#allocation11 + $0x4] sm:$0xf]
    %v430 = vld [vmem:[#allocation11 + $0x8] sm:$0xf]
    %v431 = vld [vmem:[#allocation11 + $0xc] sm:$0xf]
    %v432 = vld [vmem:[#allocation11 + $0x10] sm:$0xf]
    %v433 = vld [vmem:[#allocation11 + $0x14] sm:$0xf]
    %v434 = vld [vmem:[#allocation11 + $0x18] sm:$0xf]
    %v435 = vld [vmem:[#allocation11 + $0x1c] sm:$0xf]
    %v436 = vld [vmem:[#allocation11 + $0x20] sm:$0xf]
    %v437 = vld [vmem:[#allocation11 + $0x24] sm:$0xf]
    %v438 = vld [vmem:[#allocation11 + $0x28] sm:$0xf]
    %v439 = vld [vmem:[#allocation11 + $0x2c] sm:$0xf]
    %v440 = vld [vmem:[#allocation11 + $0x30] sm:$0xf]
    %v441 = vld [vmem:[#allocation11 + $0x34] sm:$0xf]
    %v442 = vld [vmem:[#allocation11 + $0x38] sm:$0xf]
    %v443 = vld [vmem:[#allocation11 + $0x3c] sm:$0xf]
    %v444 = vld [vmem:[%s9] sm:$0x1]
    %v446 = vperm.slane %v444, 0
    %v464 = vunpack.c.l.b16 %v428
    %v465 = vunpack.c.l.b16 %v429
    %v466 = vunpack.c.l.b16 %v430
    %v467 = vunpack.c.l.b16 %v431
    %v468 = vunpack.c.l.b16 %v432
    %v469 = vunpack.c.l.b16 %v433
    %v470 = vunpack.c.l.b16 %v434
    %v471 = vunpack.c.l.b16 %v435
    %v472 = vunpack.c.l.b16 %v436
    %v473 = vunpack.c.l.b16 %v437
    %v474 = vunpack.c.l.b16 %v438
    %v475 = vunpack.c.l.b16 %v439
    %v476 = vunpack.c.l.b16 %v440
    %v477 = vunpack.c.l.b16 %v441
    %v478 = vunpack.c.l.b16 %v442
    %v479 = vunpack.c.l.b16 %v443
    %v480 = vpack.c.b16 %v465, %v464
    %v481 = vpack.c.b16 %v467, %v466
    %v482 = vpack.c.b16 %v469, %v468
    %v483 = vpack.c.b16 %v471, %v470
    %v484 = vpack.c.b16 %v473, %v472
    %v485 = vpack.c.b16 %v475, %v474
    %v486 = vpack.c.b16 %v477, %v476
    %v487 = vpack.c.b16 %v479, %v478
    %496 = vmatpush.bf16.msra.mxu0 %v487
    %497 = vmatpush.bf16.msra.mxu0 %v486
    %498 = vmatpush.bf16.msra.mxu0 %v485
    %499 = vmatpush.bf16.msra.mxu0 %v484
    %500 = vmatpush.bf16.msra.mxu0 %v483
    %501 = vmatpush.bf16.msra.mxu0 %v482
    %502 = vmatpush.bf16.msra.mxu0 %v481
    %503 = vmatpush.bf16.msra.mxu0 %v480
    %504 = vmatmul.bf16.gmra.mxu0 %v263
    %v505 = vpop.f32.mrf.mxu0
    %v506 = vadd.f32 %v446, %v505
    %v507 = vpop.f32.mrf.mxu0
    %v508 = vadd.f32 %v446, %v507
    %509 = vdwg.mxu0
    %v510 = vpack.c.bf16 %v426, %v424
    %v511 = vmul.f32 %v342, %v248
    %v512 = vmul.f32 %v344, %v248
    %v513 = vpack.c.bf16 %v512, %v511
    %514 = vmatpush.bf16.xpose.msra.mxu0 0
    %515 = vmatpush.bf16.xpose.msra.mxu0 0
    %516 = vmatpush.bf16.xpose.msra.mxu0 0
    %517 = vmatpush.bf16.xpose.msra.mxu0 0
    %518 = vmatpush.bf16.xpose.msra.mxu0 0
    %519 = vmatpush.bf16.xpose.msra.mxu0 0
    %520 = vmatpush.bf16.xpose.msra.mxu0 0
    %521 = vmatpush.bf16.xpose.msra.mxu0 %v510
    %522 = vmatmul.bf16.gmra.mxu0 %v513
    %v523 = vpop.f32.mrf.mxu0
    %v524 = vadd.f32 0.0, %v523
    %v525 = vpop.f32.mrf.mxu0
    %v526 = vadd.f32 0.0, %v525
    %527 = vdwg.mxu0
    %v528 = vmul.f32 %v524, 0.35355338
    %v529 = vmul.f32 %v526, 0.35355338
    %v530 = vadd.f32 %v528, %v237
    %v531 = vadd.f32 %v529, %v238
    %vm532 = vcmask 130048
    %v533 = vsel %vm532, %v530, -inf
    %534 = vmax.xlane.f32.xlu0 %v533
    %v535 = vpop.xlane.xlu0 %534
    %v536 = vsel %vm532, %v531, -inf
    %537 = vmax.xlane.f32.xlu0 %v536
    %v538 = vpop.xlane.xlu0 %537
    %v539 = vsub.f32 %v530, %v535
    %v540 = vsub.f32 %v531, %v538
    %v541 = vmul.f32 %v539, 1.442695
    %v542 = vpow.pop %v541
    %v543 = vmul.f32 %v540, 1.442695
    %v544 = vpow.pop %v543
    %v545 = vsel %vm532, %v542, 0.0
    %546 = vadd.xlane.f32.xlu0 %v545
    %v547 = vpop.xlane.xlu0 %546
    %v548 = vsel %vm532, %v544, 0.0
    %549 = vadd.xlane.f32.xlu0 %v548
    %v550 = vpop.xlane.xlu0 %549
    %v551 = vrcp.pop %v547
    %v552 = vrcp.pop %v550
    %v553 = vmul.f32 %v542, %v551
    %v554 = vmul.f32 %v544, %v552
    %v555 = vmul.f32 %v506, %v248
    %v556 = vmul.f32 %v508, %v248
    %v557 = vpack.c.bf16 %v556, %v555
    %v558 = vpack.c.bf16 %v554, %v553
    %v559 = vmul.f32 %v342, %v253
    %v560 = vmul.f32 %v344, %v253
    %v561 = vpack.c.bf16 %v560, %v559
    %562 = vmatpush.bf16.xpose.msra.mxu0 0
    %563 = vmatpush.bf16.xpose.msra.mxu0 0
    %564 = vmatpush.bf16.xpose.msra.mxu0 0
    %565 = vmatpush.bf16.xpose.msra.mxu0 0
    %566 = vmatpush.bf16.xpose.msra.mxu0 0
    %567 = vmatpush.bf16.xpose.msra.mxu0 0
    %568 = vmatpush.bf16.xpose.msra.mxu0 0
    %569 = vmatpush.bf16.xpose.msra.mxu0 %v510
    %570 = vmatmul.bf16.gmra.mxu0 %v561
    %v571 = vpop.f32.mrf.mxu0
    %v572 = vadd.f32 0.0, %v571
    %v573 = vpop.f32.mrf.mxu0
    %v574 = vadd.f32 0.0, %v573
    %575 = vdwg.mxu0
    %v576 = vmul.f32 %v572, 0.35355338
    %v577 = vmul.f32 %v574, 0.35355338
    %v578 = vadd.f32 %v576, %v237
    %v579 = vadd.f32 %v577, %v238
    %v580 = vsel %vm532, %v578, -inf
    %581 = vmax.xlane.f32.xlu0 %v580
    %v582 = vpop.xlane.xlu0 %581
    %v583 = vsel %vm532, %v579, -inf
    %584 = vmax.xlane.f32.xlu0 %v583
    %v585 = vpop.xlane.xlu0 %584
    %v586 = vsub.f32 %v578, %v582
    %v587 = vsub.f32 %v579, %v585
    %v588 = vmul.f32 %v586, 1.442695
    %v589 = vpow.pop %v588
    %v590 = vmul.f32 %v587, 1.442695
    %v591 = vpow.pop %v590
    %v592 = vsel %vm532, %v589, 0.0
    %593 = vadd.xlane.f32.xlu0 %v592
    %v594 = vpop.xlane.xlu0 %593
    %v595 = vsel %vm532, %v591, 0.0
    %596 = vadd.xlane.f32.xlu0 %v595
    %v597 = vpop.xlane.xlu0 %596
    %v598 = vrcp.pop %v594
    %v599 = vrcp.pop %v597
    %v600 = vmul.f32 %v589, %v598
    %v601 = vmul.f32 %v591, %v599
    %v602 = vmul.f32 %v506, %v253
    %v603 = vmul.f32 %v508, %v253
    %v604 = vpack.c.bf16 %v603, %v602
    %v605 = vpack.c.bf16 %v601, %v600
    %v607 = vsel %vm532, %v605, 0
    %609 = vmatpush.bf16.msra.mxu0 0
    %610 = vmatpush.bf16.msra.mxu0 0
    %611 = vmatpush.bf16.msra.mxu0 0
    %612 = vmatpush.bf16.msra.mxu0 0
    %613 = vmatpush.bf16.msra.mxu0 0
    %614 = vmatpush.bf16.msra.mxu0 0
    %615 = vmatpush.bf16.msra.mxu0 0
    %616 = vmatpush.bf16.msra.mxu0 %v604
    %617 = vmatmul.bf16.gmra.mxu0 %v607
    %v618 = vpop.f32.mrf.mxu0
    %v619 = vadd.f32 0.0, %v618
    %v620 = vpop.f32.mrf.mxu0
    %v621 = vadd.f32 0.0, %v620
    %622 = vdwg.mxu0
    %v624 = vsel %vm532, %v558, 0
    %626 = vmatpush.bf16.msra.mxu0 0
    %627 = vmatpush.bf16.msra.mxu0 0
    %628 = vmatpush.bf16.msra.mxu0 0
    %629 = vmatpush.bf16.msra.mxu0 0
    %630 = vmatpush.bf16.msra.mxu0 0
    %631 = vmatpush.bf16.msra.mxu0 0
    %632 = vmatpush.bf16.msra.mxu0 0
    %633 = vmatpush.bf16.msra.mxu0 %v557
    %634 = vmatmul.bf16.gmra.mxu0 %v624
    %v635 = vpop.f32.mrf.mxu0
    %v636 = vadd.f32 %v619, %v635
    %v637 = vpop.f32.mrf.mxu0
    %v638 = vadd.f32 %v621, %v637
    %639 = vdwg.mxu0
    %v640 = vmul.f32 %v342, %v258
    %v641 = vmul.f32 %v344, %v258
    %v642 = vpack.c.bf16 %v641, %v640
    %643 = vmatpush.bf16.xpose.msra.mxu0 0
    %644 = vmatpush.bf16.xpose.msra.mxu0 0
    %645 = vmatpush.bf16.xpose.msra.mxu0 0
    %646 = vmatpush.bf16.xpose.msra.mxu0 0
    %647 = vmatpush.bf16.xpose.msra.mxu0 0
    %648 = vmatpush.bf16.xpose.msra.mxu0 0
    %649 = vmatpush.bf16.xpose.msra.mxu0 0
    %650 = vmatpush.bf16.xpose.msra.mxu0 %v510
    %651 = vmatmul.bf16.gmra.mxu0 %v642
    %v652 = vpop.f32.mrf.mxu0
    %v653 = vadd.f32 0.0, %v652
    %v654 = vpop.f32.mrf.mxu0
    %v655 = vadd.f32 0.0, %v654
    %656 = vdwg.mxu0
    %v657 = vmul.f32 %v653, 0.35355338
    %v658 = vmul.f32 %v655, 0.35355338
    %v659 = vadd.f32 %v657, %v237
    %v660 = vadd.f32 %v658, %v238
    %v661 = vsel %vm532, %v659, -inf
    %662 = vmax.xlane.f32.xlu0 %v661
    %v663 = vpop.xlane.xlu0 %662
    %v664 = vsel %vm532, %v660, -inf
    %665 = vmax.xlane.f32.xlu0 %v664
    %v666 = vpop.xlane.xlu0 %665
    %v667 = vsub.f32 %v659, %v663
    %v668 = vsub.f32 %v660, %v666
    %v669 = vmul.f32 %v667, 1.442695
    %v670 = vpow.pop %v669
    %v671 = vmul.f32 %v668, 1.442695
    %v672 = vpow.pop %v671
    %v673 = vsel %vm532, %v670, 0.0
    %674 = vadd.xlane.f32.xlu0 %v673
    %v675 = vpop.xlane.xlu0 %674
    %v676 = vsel %vm532, %v672, 0.0
    %677 = vadd.xlane.f32.xlu0 %v676
    %v678 = vpop.xlane.xlu0 %677
    %v679 = vrcp.pop %v675
    %v680 = vrcp.pop %v678
    %v681 = vmul.f32 %v670, %v679
    %v682 = vmul.f32 %v672, %v680
    %v683 = vmul.f32 %v506, %v258
    %v684 = vmul.f32 %v508, %v258
    %v685 = vpack.c.bf16 %v684, %v683
    %v686 = vpack.c.bf16 %v682, %v681
    %v688 = vsel %vm532, %v686, 0
    %690 = vmatpush.bf16.msra.mxu0 0
    %691 = vmatpush.bf16.msra.mxu0 0
    %692 = vmatpush.bf16.msra.mxu0 0
    %693 = vmatpush.bf16.msra.mxu0 0
    %694 = vmatpush.bf16.msra.mxu0 0
    %695 = vmatpush.bf16.msra.mxu0 0
    %696 = vmatpush.bf16.msra.mxu0 0
    %697 = vmatpush.bf16.msra.mxu0 %v685
    %698 = vmatmul.bf16.gmra.mxu0 %v688
    %v699 = vpop.f32.mrf.mxu0
    %v700 = vadd.f32 0.0, %v699
    %v701 = vpop.f32.mrf.mxu0
    %v702 = vadd.f32 0.0, %v701
    %703 = vdwg.mxu0
    %v704 = vadd.f32 %v636, %v700
    %v705 = vadd.f32 %v638, %v702
    %v706 = vmul.f32 %v342, %v262
    %v707 = vmul.f32 %v344, %v262
    %v708 = vpack.c.bf16 %v707, %v706
    %709 = vmatpush.bf16.xpose.msra.mxu0 0
    %710 = vmatpush.bf16.xpose.msra.mxu0 0
    %711 = vmatpush.bf16.xpose.msra.mxu0 0
    %712 = vmatpush.bf16.xpose.msra.mxu0 0
    %713 = vmatpush.bf16.xpose.msra.mxu0 0
    %714 = vmatpush.bf16.xpose.msra.mxu0 0
    %715 = vmatpush.bf16.xpose.msra.mxu0 0
    %716 = vmatpush.bf16.xpose.msra.mxu0 %v510
    %717 = vmatmul.bf16.gmra.mxu0 %v708
    %v718 = vpop.f32.mrf.mxu0
    %v719 = vadd.f32 0.0, %v718
    %v720 = vpop.f32.mrf.mxu0
    %v721 = vadd.f32 0.0, %v720
    %722 = vdwg.mxu0
    %v723 = vmul.f32 %v719, 0.35355338
    %v724 = vmul.f32 %v721, 0.35355338
    %v725 = vadd.f32 %v723, %v237
    %v726 = vadd.f32 %v724, %v238
    %v727 = vsel %vm532, %v725, -inf
    %728 = vmax.xlane.f32.xlu0 %v727
    %v729 = vpop.xlane.xlu0 %728
    %v730 = vsel %vm532, %v726, -inf
    %731 = vmax.xlane.f32.xlu0 %v730
    %v732 = vpop.xlane.xlu0 %731
    %v733 = vsub.f32 %v725, %v729
    %v734 = vsub.f32 %v726, %v732
    %v735 = vmul.f32 %v733, 1.442695
    %v736 = vpow.pop %v735
    %v737 = vmul.f32 %v734, 1.442695
    %v738 = vpow.pop %v737
    %v739 = vsel %vm532, %v736, 0.0
    %740 = vadd.xlane.f32.xlu0 %v739
    %v741 = vpop.xlane.xlu0 %740
    %v742 = vsel %vm532, %v738, 0.0
    %743 = vadd.xlane.f32.xlu0 %v742
    %v744 = vpop.xlane.xlu0 %743
    %v745 = vrcp.pop %v741
    %v746 = vrcp.pop %v744
    %v747 = vmul.f32 %v736, %v745
    %v748 = vmul.f32 %v738, %v746
    %v749 = vmul.f32 %v506, %v262
    %v750 = vmul.f32 %v508, %v262
    %v751 = vpack.c.bf16 %v750, %v749
    %v752 = vpack.c.bf16 %v748, %v747
    %v754 = vsel %vm532, %v752, 0
    %756 = vmatpush.bf16.msra.mxu0 0
    %757 = vmatpush.bf16.msra.mxu0 0
    %758 = vmatpush.bf16.msra.mxu0 0
    %759 = vmatpush.bf16.msra.mxu0 0
    %760 = vmatpush.bf16.msra.mxu0 0
    %761 = vmatpush.bf16.msra.mxu0 0
    %762 = vmatpush.bf16.msra.mxu0 0
    %763 = vmatpush.bf16.msra.mxu0 %v751
    %764 = vmatmul.bf16.gmra.mxu0 %v754
    %v765 = vpop.f32.mrf.mxu0
    %v766 = vadd.f32 0.0, %v765
    %v767 = vpop.f32.mrf.mxu0
    %v768 = vadd.f32 0.0, %v767
    %769 = vdwg.mxu0
    %v770 = vadd.f32 %v704, %v766
    %v771 = vadd.f32 %v705, %v768
    %v772 = vpack.c.bf16 %v771, %v770
    %v773 = vld [vmem:[#allocation13] sm:$0xf]
    %v774 = vld [vmem:[#allocation13 + $0x4] sm:$0xf]
    %v775 = vld [vmem:[#allocation13 + $0x8] sm:$0xf]
    %v776 = vld [vmem:[#allocation13 + $0xc] sm:$0xf]
    %v777 = vld [vmem:[#allocation13 + $0x10] sm:$0xf]
    %v778 = vld [vmem:[#allocation13 + $0x14] sm:$0xf]
    %v779 = vld [vmem:[#allocation13 + $0x18] sm:$0xf]
    %v780 = vld [vmem:[#allocation13 + $0x1c] sm:$0xf]
    %v781 = vld [vmem:[#allocation13 + $0x20] sm:$0xf]
    %v782 = vld [vmem:[#allocation13 + $0x24] sm:$0xf]
    %v783 = vld [vmem:[#allocation13 + $0x28] sm:$0xf]
    %v784 = vld [vmem:[#allocation13 + $0x2c] sm:$0xf]
    %v785 = vld [vmem:[#allocation13 + $0x30] sm:$0xf]
    %v786 = vld [vmem:[#allocation13 + $0x34] sm:$0xf]
    %v787 = vld [vmem:[#allocation13 + $0x38] sm:$0xf]
    %v788 = vld [vmem:[#allocation13 + $0x3c] sm:$0xf]
    %v789 = vld [vmem:[%s10] sm:$0x1]
    %v791 = vperm.slane %v789, 0
    %v809 = vunpack.c.l.b16 %v773
    %v810 = vunpack.c.l.b16 %v774
    %v811 = vunpack.c.l.b16 %v775
    %v812 = vunpack.c.l.b16 %v776
    %v813 = vunpack.c.l.b16 %v777
    %v814 = vunpack.c.l.b16 %v778
    %v815 = vunpack.c.l.b16 %v779
    %v816 = vunpack.c.l.b16 %v780
    %v817 = vunpack.c.l.b16 %v781
    %v818 = vunpack.c.l.b16 %v782
    %v819 = vunpack.c.l.b16 %v783
    %v820 = vunpack.c.l.b16 %v784
    %v821 = vunpack.c.l.b16 %v785
    %v822 = vunpack.c.l.b16 %v786
    %v823 = vunpack.c.l.b16 %v787
    %v824 = vunpack.c.l.b16 %v788
    %v825 = vpack.c.b16 %v810, %v809
    %v826 = vpack.c.b16 %v812, %v811
    %v827 = vpack.c.b16 %v814, %v813
    %v828 = vpack.c.b16 %v816, %v815
    %v829 = vpack.c.b16 %v818, %v817
    %v830 = vpack.c.b16 %v820, %v819
    %v831 = vpack.c.b16 %v822, %v821
    %v832 = vpack.c.b16 %v824, %v823
    %841 = vmatpush.bf16.msra.mxu0 %v832
    %842 = vmatpush.bf16.msra.mxu0 %v831
    %843 = vmatpush.bf16.msra.mxu0 %v830
    %844 = vmatpush.bf16.msra.mxu0 %v829
    %845 = vmatpush.bf16.msra.mxu0 %v828
    %846 = vmatpush.bf16.msra.mxu0 %v827
    %847 = vmatpush.bf16.msra.mxu0 %v826
    %848 = vmatpush.bf16.msra.mxu0 %v825
    %849 = vmatmul.bf16.gmra.mxu0 %v772
    %v850 = vpop.f32.mrf.mxu0
    %v851 = vadd.f32 %v791, %v850
    %v852 = vpop.f32.mrf.mxu0
    %v853 = vadd.f32 %v791, %v852
    %854 = vdwg.mxu0
    %v855 = vadd.f32 %v235, %v851
    %v856 = vadd.f32 %v236, %v853
    %v857 = vld [vmem:[%s11] sm:$0x1]
    %v858 = vld [vmem:[#allocation14] sm:$0x1]
    %859 = vadd.xlane.f32.xlu0 %v855
    %v860 = vpop.xlane.xlu0 %859
    %861 = vadd.xlane.f32.xlu0 %v856
    %v862 = vpop.xlane.xlu0 %861
    %v863 = vmul.f32 %v860, 0.03125
    %v864 = vmul.f32 %v862, 0.03125
    %v865 = vsub.f32 %v855, %v863
    %v866 = vsub.f32 %v856, %v864
    %v867 = vmul.f32 %v865, %v243
    %v868 = vmul.f32 %v866, %v243
    %v869 = vmul.f32 %v867, %v867
    %v870 = vmul.f32 %v868, %v868
    %871 = vadd.xlane.f32.xlu0 %v869
    %v872 = vpop.xlane.xlu0 %871
    %873 = vadd.xlane.f32.xlu0 %v870
    %v874 = vpop.xlane.xlu0 %873
    %v875 = vmul.f32 %v872, 0.03125
    %v876 = vmul.f32 %v874, 0.03125
    %v877 = vadd.f32 %v875, 1e-05
    %v878 = vadd.f32 %v876, 1e-05
    %v879 = vrsqrt.pop %v877
    %v880 = vmul.f32 %v879, %v877
    %v881 = vmul.f32 %v880, %v879
    %v882 = vmul.f32 0.5, %v881
    %v883 = vsub.f32 1.5, %v882
    %v884 = vmul.f32 %v879, %v883
    %vm885 = vweird.f32 %v877
    %vm886 = vweird.f32 %v879
    %vm887 = vmor %vm885, %vm886
    %v888 = vsel %vm887, %v879, %v884
    %v889 = vrsqrt.pop %v878
    %v890 = vmul.f32 %v889, %v878
    %v891 = vmul.f32 %v890, %v889
    %v892 = vmul.f32 0.5, %v891
    %v893 = vsub.f32 1.5, %v892
    %v894 = vmul.f32 %v889, %v893
    %vm895 = vweird.f32 %v878
    %vm896 = vweird.f32 %v889
    %vm897 = vmor %vm895, %vm896
    %v898 = vsel %vm897, %v889, %v894
    %v899 = vmul.f32 %v867, %v888
    %v900 = vmul.f32 %v868, %v898
    %v902 = vperm.slane %v857, 0
    %v904 = vmul.f32 %v899, %v902
    %v905 = vmul.f32 %v900, %v902
    %v907 = vperm.slane %v858, 0
    %v909 = vadd.f32 %v904, %v907
    %v910 = vadd.f32 %v905, %v907
    %v911 = vpack.c.bf16 %v910, %v909
    %v912 = vld [vmem:[#allocation17] sm:$0xf]
    %v913 = vld [vmem:[#allocation17 + $0x4] sm:$0xf]
    %v914 = vld [vmem:[#allocation17 + $0x8] sm:$0xf]
    %v915 = vld [vmem:[#allocation17 + $0xc] sm:$0xf]
    %v916 = vld [vmem:[#allocation17 + $0x10] sm:$0xf]
    %v917 = vld [vmem:[#allocation17 + $0x14] sm:$0xf]
    %v918 = vld [vmem:[#allocation17 + $0x18] sm:$0xf]
    %v919 = vld [vmem:[#allocation17 + $0x1c] sm:$0xf]
    %v920 = vld [vmem:[#allocation17 + $0x20] sm:$0xf]
    %v921 = vld [vmem:[#allocation17 + $0x24] sm:$0xf]
    %v922 = vld [vmem:[#allocation17 + $0x28] sm:$0xf]
    %v923 = vld [vmem:[#allocation17 + $0x2c] sm:$0xf]
    %v924 = vld [vmem:[#allocation17 + $0x30] sm:$0xf]
    %v925 = vld [vmem:[#allocation17 + $0x34] sm:$0xf]
    %v926 = vld [vmem:[#allocation17 + $0x38] sm:$0xf]
    %v927 = vld [vmem:[#allocation17 + $0x3c] sm:$0xf]
    %v928 = vld [vmem:[%s16] sm:$0x1]
    %v930 = vperm.slane %v928, 0
    %v948 = vunpack.c.l.b16 %v912
    %v949 = vunpack.c.l.b16 %v913
    %v950 = vunpack.c.l.b16 %v914
    %v951 = vunpack.c.l.b16 %v915
    %v952 = vunpack.c.l.b16 %v916
    %v953 = vunpack.c.l.b16 %v917
    %v954 = vunpack.c.l.b16 %v918
    %v955 = vunpack.c.l.b16 %v919
    %v956 = vunpack.c.l.b16 %v920
    %v957 = vunpack.c.l.b16 %v921
    %v958 = vunpack.c.l.b16 %v922
    %v959 = vunpack.c.l.b16 %v923
    %v960 = vunpack.c.l.b16 %v924
    %v961 = vunpack.c.l.b16 %v925
    %v962 = vunpack.c.l.b16 %v926
    %v963 = vunpack.c.l.b16 %v927
    %v964 = vpack.c.b16 %v949, %v948
    %v965 = vpack.c.b16 %v951, %v950
    %v966 = vpack.c.b16 %v953, %v952
    %v967 = vpack.c.b16 %v955, %v954
    %v968 = vpack.c.b16 %v957, %v956
    %v969 = vpack.c.b16 %v959, %v958
    %v970 = vpack.c.b16 %v961, %v960
    %v971 = vpack.c.b16 %v963, %v962
    %980 = vmatpush.bf16.msra.mxu0 %v971
    %981 = vmatpush.bf16.msra.mxu0 %v970
    %982 = vmatpush.bf16.msra.mxu0 %v969
    %983 = vmatpush.bf16.msra.mxu0 %v968
    %984 = vmatpush.bf16.msra.mxu0 %v967
    %985 = vmatpush.bf16.msra.mxu0 %v966
    %986 = vmatpush.bf16.msra.mxu0 %v965
    %987 = vmatpush.bf16.msra.mxu0 %v964
    %988 = vmatmul.bf16.gmra.mxu0 %v911
    %v989 = vpop.f32.mrf.mxu0
    %v990 = vadd.f32 %v930, %v989
    %v991 = vpop.f32.mrf.mxu0
    %v992 = vadd.f32 %v930, %v991
    %993 = vdwg.mxu0
    %v994 = vmax.f32 %v990, 0.0
    %v995 = vmax.f32 %v992, 0.0
    %v996 = vpack.c.bf16 %v995, %v994
    %v997 = vld [vmem:[#allocation19] sm:$0xf]
    %v998 = vld [vmem:[#allocation19 + $0x4] sm:$0xf]
    %v999 = vld [vmem:[#allocation19 + $0x8] sm:$0xf]
    %v1000 = vld [vmem:[#allocation19 + $0xc] sm:$0xf]
    %v1001 = vld [vmem:[#allocation19 + $0x10] sm:$0xf]
    %v1002 = vld [vmem:[#allocation19 + $0x14] sm:$0xf]
    %v1003 = vld [vmem:[#allocation19 + $0x18] sm:$0xf]
    %v1004 = vld [vmem:[#allocation19 + $0x1c] sm:$0xf]
    %v1005 = vld [vmem:[#allocation19 + $0x20] sm:$0xf]
    %v1006 = vld [vmem:[#allocation19 + $0x24] sm:$0xf]
    %v1007 = vld [vmem:[#allocation19 + $0x28] sm:$0xf]
    %v1008 = vld [vmem:[#allocation19 + $0x2c] sm:$0xf]
    %v1009 = vld [vmem:[#allocation19 + $0x30] sm:$0xf]
    %v1010 = vld [vmem:[#allocation19 + $0x34] sm:$0xf]
    %v1011 = vld [vmem:[#allocation19 + $0x38] sm:$0xf]
    %v1012 = vld [vmem:[#allocation19 + $0x3c] sm:$0xf]
    %v1013 = vld [vmem:[%s18] sm:$0x1]
    %v1015 = vperm.slane %v1013, 0
    %v1033 = vunpack.c.l.b16 %v997
    %v1034 = vunpack.c.l.b16 %v998
    %v1035 = vunpack.c.l.b16 %v999
    %v1036 = vunpack.c.l.b16 %v1000
    %v1037 = vunpack.c.l.b16 %v1001
    %v1038 = vunpack.c.l.b16 %v1002
    %v1039 = vunpack.c.l.b16 %v1003
    %v1040 = vunpack.c.l.b16 %v1004
    %v1041 = vunpack.c.l.b16 %v1005
    %v1042 = vunpack.c.l.b16 %v1006
    %v1043 = vunpack.c.l.b16 %v1007
    %v1044 = vunpack.c.l.b16 %v1008
    %v1045 = vunpack.c.l.b16 %v1009
    %v1046 = vunpack.c.l.b16 %v1010
    %v1047 = vunpack.c.l.b16 %v1011
    %v1048 = vunpack.c.l.b16 %v1012
    %v1049 = vpack.c.b16 %v1034, %v1033
    %v1050 = vpack.c.b16 %v1036, %v1035
    %v1051 = vpack.c.b16 %v1038, %v1037
    %v1052 = vpack.c.b16 %v1040, %v1039
    %v1053 = vpack.c.b16 %v1042, %v1041
    %v1054 = vpack.c.b16 %v1044, %v1043
    %v1055 = vpack.c.b16 %v1046, %v1045
    %v1056 = vpack.c.b16 %v1048, %v1047
    %1065 = vmatpush.bf16.msra.mxu0 %v1056
    %1066 = vmatpush.bf16.msra.mxu0 %v1055
    %1067 = vmatpush.bf16.msra.mxu0 %v1054
    %1068 = vmatpush.bf16.msra.mxu0 %v1053
    %1069 = vmatpush.bf16.msra.mxu0 %v1052
    %1070 = vmatpush.bf16.msra.mxu0 %v1051
    %1071 = vmatpush.bf16.msra.mxu0 %v1050
    %1072 = vmatpush.bf16.msra.mxu0 %v1049
    %1073 = vmatmul.bf16.gmra.mxu0 %v996
    %v1074 = vpop.f32.mrf.mxu0
    %v1075 = vadd.f32 %v1015, %v1074
    %v1076 = vpop.f32.mrf.mxu0
    %v1077 = vadd.f32 %v1015, %v1076
    %1078 = vdwg.mxu0
    %v1079 = vadd.f32 %v909, %v1075
    %v1080 = vadd.f32 %v910, %v1077
    %v1081 = vld [vmem:[%s13] sm:$0x1]
    %v1082 = vld [vmem:[#allocation16] sm:$0x1]
    %1083 = vadd.xlane.f32.xlu0 %v1079
    %v1084 = vpop.xlane.xlu0 %1083
    %1085 = vadd.xlane.f32.xlu0 %v1080
    %v1086 = vpop.xlane.xlu0 %1085
    %v1087 = vmul.f32 %v1084, 0.03125
    %v1088 = vmul.f32 %v1086, 0.03125
    %v1089 = vsub.f32 %v1079, %v1087
    %v1090 = vsub.f32 %v1080, %v1088
    %v1091 = vmul.f32 %v1089, %v243
    %v1092 = vmul.f32 %v1090, %v243
    %v1093 = vmul.f32 %v1091, %v1091
    %v1094 = vmul.f32 %v1092, %v1092
    %1095 = vadd.xlane.f32.xlu0 %v1093
    %v1096 = vpop.xlane.xlu0 %1095
    %1097 = vadd.xlane.f32.xlu0 %v1094
    %v1098 = vpop.xlane.xlu0 %1097
    %v1099 = vmul.f32 %v1096, 0.03125
    %v1100 = vmul.f32 %v1098, 0.03125
    %v1101 = vadd.f32 %v1099, 1e-05
    %v1102 = vadd.f32 %v1100, 1e-05
    %v1103 = vrsqrt.pop %v1101
    %v1104 = vmul.f32 %v1103, %v1101
    %v1105 = vmul.f32 %v1104, %v1103
    %v1106 = vmul.f32 0.5, %v1105
    %v1107 = vsub.f32 1.5, %v1106
    %v1108 = vmul.f32 %v1103, %v1107
    %vm1109 = vweird.f32 %v1101
    %vm1110 = vweird.f32 %v1103
    %vm1111 = vmor %vm1109, %vm1110
    %v1112 = vsel %vm1111, %v1103, %v1108
    %v1113 = vrsqrt.pop %v1102
    %v1114 = vmul.f32 %v1113, %v1102
    %v1115 = vmul.f32 %v1114, %v1113
    %v1116 = vmul.f32 0.5, %v1115
    %v1117 = vsub.f32 1.5, %v1116
    %v1118 = vmul.f32 %v1113, %v1117
    %vm1119 = vweird.f32 %v1102
    %vm1120 = vweird.f32 %v1113
    %vm1121 = vmor %vm1119, %vm1120
    %v1122 = vsel %vm1121, %v1113, %v1118
    %v1123 = vmul.f32 %v1091, %v1112
    %v1124 = vmul.f32 %v1092, %v1122
    %v1126 = vperm.slane %v1081, 0
    %v1128 = vmul.f32 %v1123, %v1126
    %v1129 = vmul.f32 %v1124, %v1126
    %v1131 = vperm.slane %v1082, 0
    %v1133 = vadd.f32 %v1128, %v1131
    %v1134 = vadd.f32 %v1129, %v1131
    %v1135 = vpack.c.bf16 %v1134, %v1133
    %s1136 = scalar_lea.vmem [#allocation8], 64
    %v1137 = vld [vmem:[%s1136] sm:$0xf]
    %v1138 = vld [vmem:[%s1136 + $0x4] sm:$0xf]
    %v1139 = vld [vmem:[%s1136 + $0x8] sm:$0xf]
    %v1140 = vld [vmem:[%s1136 + $0xc] sm:$0xf]
    %v1141 = vld [vmem:[%s1136 + $0x10] sm:$0xf]
    %v1142 = vld [vmem:[%s1136 + $0x14] sm:$0xf]
    %v1143 = vld [vmem:[%s1136 + $0x18] sm:$0xf]
    %v1144 = vld [vmem:[%s1136 + $0x1c] sm:$0xf]
    %v1145 = vld [vmem:[%s1136 + $0x20] sm:$0xf]
    %v1146 = vld [vmem:[%s1136 + $0x24] sm:$0xf]
    %v1147 = vld [vmem:[%s1136 + $0x28] sm:$0xf]
    %v1148 = vld [vmem:[%s1136 + $0x2c] sm:$0xf]
    %v1149 = vld [vmem:[%s1136 + $0x30] sm:$0xf]
    %v1150 = vld [vmem:[%s1136 + $0x34] sm:$0xf]
    %v1151 = vld [vmem:[%s1136 + $0x38] sm:$0xf]
    %v1152 = vld [vmem:[%s1136 + $0x3c] sm:$0xf]
    %s1153 = scalar_lea.vmem %s7, 1
    %v1154 = vld [vmem:[%s1153] sm:$0x1]
    %v1156 = vperm.slane %v1154, 0
    %v1174 = vunpack.c.l.b16 %v1137
    %v1175 = vunpack.c.l.b16 %v1138
    %v1176 = vunpack.c.l.b16 %v1139
    %v1177 = vunpack.c.l.b16 %v1140
    %v1178 = vunpack.c.l.b16 %v1141
    %v1179 = vunpack.c.l.b16 %v1142
    %v1180 = vunpack.c.l.b16 %v1143
    %v1181 = vunpack.c.l.b16 %v1144
    %v1182 = vunpack.c.l.b16 %v1145
    %v1183 = vunpack.c.l.b16 %v1146
    %v1184 = vunpack.c.l.b16 %v1147
    %v1185 = vunpack.c.l.b16 %v1148
    %v1186 = vunpack.c.l.b16 %v1149
    %v1187 = vunpack.c.l.b16 %v1150
    %v1188 = vunpack.c.l.b16 %v1151
    %v1189 = vunpack.c.l.b16 %v1152
    %v1190 = vpack.c.b16 %v1175, %v1174
    %v1191 = vpack.c.b16 %v1177, %v1176
    %v1192 = vpack.c.b16 %v1179, %v1178
    %v1193 = vpack.c.b16 %v1181, %v1180
    %v1194 = vpack.c.b16 %v1183, %v1182
    %v1195 = vpack.c.b16 %v1185, %v1184
    %v1196 = vpack.c.b16 %v1187, %v1186
    %v1197 = vpack.c.b16 %v1189, %v1188
    %1206 = vmatpush.bf16.msra.mxu0 %v1197
    %1207 = vmatpush.bf16.msra.mxu0 %v1196
    %1208 = vmatpush.bf16.msra.mxu0 %v1195
    %1209 = vmatpush.bf16.msra.mxu0 %v1194
    %1210 = vmatpush.bf16.msra.mxu0 %v1193
    %1211 = vmatpush.bf16.msra.mxu0 %v1192
    %1212 = vmatpush.bf16.msra.mxu0 %v1191
    %1213 = vmatpush.bf16.msra.mxu0 %v1190
    %1214 = vmatmul.bf16.gmra.mxu0 %v1135
    %v1215 = vpop.f32.mrf.mxu0
    %v1216 = vadd.f32 %v1156, %v1215
    %v1217 = vpop.f32.mrf.mxu0
    %v1218 = vadd.f32 %v1156, %v1217
    %1219 = vdwg.mxu0
    %s1220 = scalar_lea.vmem [#allocation10], 64
    %v1221 = vld [vmem:[%s1220] sm:$0xf]
    %v1222 = vld [vmem:[%s1220 + $0x4] sm:$0xf]
    %v1223 = vld [vmem:[%s1220 + $0x8] sm:$0xf]
    %v1224 = vld [vmem:[%s1220 + $0xc] sm:$0xf]
    %v1225 = vld [vmem:[%s1220 + $0x10] sm:$0xf]
    %v1226 = vld [vmem:[%s1220 + $0x14] sm:$0xf]
    %v1227 = vld [vmem:[%s1220 + $0x18] sm:$0xf]
    %v1228 = vld [vmem:[%s1220 + $0x1c] sm:$0xf]
    %v1229 = vld [vmem:[%s1220 + $0x20] sm:$0xf]
    %v1230 = vld [vmem:[%s1220 + $0x24] sm:$0xf]
    %v1231 = vld [vmem:[%s1220 + $0x28] sm:$0xf]
    %v1232 = vld [vmem:[%s1220 + $0x2c] sm:$0xf]
    %v1233 = vld [vmem:[%s1220 + $0x30] sm:$0xf]
    %v1234 = vld [vmem:[%s1220 + $0x34] sm:$0xf]
    %v1235 = vld [vmem:[%s1220 + $0x38] sm:$0xf]
    %v1236 = vld [vmem:[%s1220 + $0x3c] sm:$0xf]
    %s1237 = scalar_lea.vmem %s8, 1
    %v1238 = vld [vmem:[%s1237] sm:$0x1]
    %v1240 = vperm.slane %v1238, 0
    %v1258 = vunpack.c.l.b16 %v1221
    %v1259 = vunpack.c.l.b16 %v1222
    %v1260 = vunpack.c.l.b16 %v1223
    %v1261 = vunpack.c.l.b16 %v1224
    %v1262 = vunpack.c.l.b16 %v1225
    %v1263 = vunpack.c.l.b16 %v1226
    %v1264 = vunpack.c.l.b16 %v1227
    %v1265 = vunpack.c.l.b16 %v1228
    %v1266 = vunpack.c.l.b16 %v1229
    %v1267 = vunpack.c.l.b16 %v1230
    %v1268 = vunpack.c.l.b16 %v1231
    %v1269 = vunpack.c.l.b16 %v1232
    %v1270 = vunpack.c.l.b16 %v1233
    %v1271 = vunpack.c.l.b16 %v1234
    %v1272 = vunpack.c.l.b16 %v1235
    %v1273 = vunpack.c.l.b16 %v1236
    %v1274 = vpack.c.b16 %v1259, %v1258
    %v1275 = vpack.c.b16 %v1261, %v1260
    %v1276 = vpack.c.b16 %v1263, %v1262
    %v1277 = vpack.c.b16 %v1265, %v1264
    %v1278 = vpack.c.b16 %v1267, %v1266
    %v1279 = vpack.c.b16 %v1269, %v1268
    %v1280 = vpack.c.b16 %v1271, %v1270
    %v1281 = vpack.c.b16 %v1273, %v1272
    %1290 = vmatpush.bf16.msra.mxu0 %v1281
    %1291 = vmatpush.bf16.msra.mxu0 %v1280
    %1292 = vmatpush.bf16.msra.mxu0 %v1279
    %1293 = vmatpush.bf16.msra.mxu0 %v1278
    %1294 = vmatpush.bf16.msra.mxu0 %v1277
    %1295 = vmatpush.bf16.msra.mxu0 %v1276
    %1296 = vmatpush.bf16.msra.mxu0 %v1275
    %1297 = vmatpush.bf16.msra.mxu0 %v1274
    %1298 = vmatmul.bf16.gmra.mxu0 %v1135
    %v1299 = vpop.f32.mrf.mxu0
    %v1300 = vadd.f32 %v1240, %v1299
    %v1301 = vpop.f32.mrf.mxu0
    %v1302 = vadd.f32 %v1240, %v1301
    %1303 = vdwg.mxu0
    %s1304 = scalar_lea.vmem [#allocation11], 64
    %v1305 = vld [vmem:[%s1304] sm:$0xf]
    %v1306 = vld [vmem:[%s1304 + $0x4] sm:$0xf]
    %v1307 = vld [vmem:[%s1304 + $0x8] sm:$0xf]
    %v1308 = vld [vmem:[%s1304 + $0xc] sm:$0xf]
    %v1309 = vld [vmem:[%s1304 + $0x10] sm:$0xf]
    %v1310 = vld [vmem:[%s1304 + $0x14] sm:$0xf]
    %v1311 = vld [vmem:[%s1304 + $0x18] sm:$0xf]
    %v1312 = vld [vmem:[%s1304 + $0x1c] sm:$0xf]
    %v1313 = vld [vmem:[%s1304 + $0x20] sm:$0xf]
    %v1314 = vld [vmem:[%s1304 + $0x24] sm:$0xf]
    %v1315 = vld [vmem:[%s1304 + $0x28] sm:$0xf]
    %v1316 = vld [vmem:[%s1304 + $0x2c] sm:$0xf]
    %v1317 = vld [vmem:[%s1304 + $0x30] sm:$0xf]
    %v1318 = vld [vmem:[%s1304 + $0x34] sm:$0xf]
    %v1319 = vld [vmem:[%s1304 + $0x38] sm:$0xf]
    %v1320 = vld [vmem:[%s1304 + $0x3c] sm:$0xf]
    %s1321 = scalar_lea.vmem %s9, 1
    %v1322 = vld [vmem:[%s1321] sm:$0x1]
    %v1324 = vperm.slane %v1322, 0
    %v1342 = vunpack.c.l.b16 %v1305
    %v1343 = vunpack.c.l.b16 %v1306
    %v1344 = vunpack.c.l.b16 %v1307
    %v1345 = vunpack.c.l.b16 %v1308
    %v1346 = vunpack.c.l.b16 %v1309
    %v1347 = vunpack.c.l.b16 %v1310
    %v1348 = vunpack.c.l.b16 %v1311
    %v1349 = vunpack.c.l.b16 %v1312
    %v1350 = vunpack.c.l.b16 %v1313
    %v1351 = vunpack.c.l.b16 %v1314
    %v1352 = vunpack.c.l.b16 %v1315
    %v1353 = vunpack.c.l.b16 %v1316
    %v1354 = vunpack.c.l.b16 %v1317
    %v1355 = vunpack.c.l.b16 %v1318
    %v1356 = vunpack.c.l.b16 %v1319
    %v1357 = vunpack.c.l.b16 %v1320
    %v1358 = vpack.c.b16 %v1343, %v1342
    %v1359 = vpack.c.b16 %v1345, %v1344
    %v1360 = vpack.c.b16 %v1347, %v1346
    %v1361 = vpack.c.b16 %v1349, %v1348
    %v1362 = vpack.c.b16 %v1351, %v1350
    %v1363 = vpack.c.b16 %v1353, %v1352
    %v1364 = vpack.c.b16 %v1355, %v1354
    %v1365 = vpack.c.b16 %v1357, %v1356
    %1374 = vmatpush.bf16.msra.mxu0 %v1365
    %1375 = vmatpush.bf16.msra.mxu0 %v1364
    %1376 = vmatpush.bf16.msra.mxu0 %v1363
    %1377 = vmatpush.bf16.msra.mxu0 %v1362
    %1378 = vmatpush.bf16.msra.mxu0 %v1361
    %1379 = vmatpush.bf16.msra.mxu0 %v1360
    %1380 = vmatpush.bf16.msra.mxu0 %v1359
    %1381 = vmatpush.bf16.msra.mxu0 %v1358
    %1382 = vmatmul.bf16.gmra.mxu0 %v1135
    %v1383 = vpop.f32.mrf.mxu0
    %v1384 = vadd.f32 %v1324, %v1383
    %v1385 = vpop.f32.mrf.mxu0
    %v1386 = vadd.f32 %v1324, %v1385
    %1387 = vdwg.mxu0
    %v1388 = vpack.c.bf16 %v1302, %v1300
    %v1389 = vmul.f32 %v1216, %v248
    %v1390 = vmul.f32 %v1218, %v248
    %v1391 = vpack.c.bf16 %v1390, %v1389
    %1392 = vmatpush.bf16.xpose.msra.mxu0 0
    %1393 = vmatpush.bf16.xpose.msra.mxu0 0
    %1394 = vmatpush.bf16.xpose.msra.mxu0 0
    %1395 = vmatpush.bf16.xpose.msra.mxu0 0
    %1396 = vmatpush.bf16.xpose.msra.mxu0 0
    %1397 = vmatpush.bf16.xpose.msra.mxu0 0
    %1398 = vmatpush.bf16.xpose.msra.mxu0 0
    %1399 = vmatpush.bf16.xpose.msra.mxu0 %v1388
    %1400 = vmatmul.bf16.gmra.mxu0 %v1391
    %v1401 = vpop.f32.mrf.mxu0
    %v1402 = vadd.f32 0.0, %v1401
    %v1403 = vpop.f32.mrf.mxu0
    %v1404 = vadd.f32 0.0, %v1403
    %1405 = vdwg.mxu0
    %v1406 = vmul.f32 %v1402, 0.35355338
    %v1407 = vmul.f32 %v1404, 0.35355338
    %v1408 = vadd.f32 %v1406, %v237
    %v1409 = vadd.f32 %v1407, %v238
    %v1410 = vsel %vm532, %v1408, -inf
    %1411 = vmax.xlane.f32.xlu0 %v1410
    %v1412 = vpop.xlane.xlu0 %1411
    %v1413 = vsel %vm532, %v1409, -inf
    %1414 = vmax.xlane.f32.xlu0 %v1413
    %v1415 = vpop.xlane.xlu0 %1414
    %v1416 = vsub.f32 %v1408, %v1412
    %v1417 = vsub.f32 %v1409, %v1415
    %v1418 = vmul.f32 %v1416, 1.442695
    %v1419 = vpow.pop %v1418
    %v1420 = vmul.f32 %v1417, 1.442695
    %v1421 = vpow.pop %v1420
    %v1422 = vsel %vm532, %v1419, 0.0
    %1423 = vadd.xlane.f32.xlu0 %v1422
    %v1424 = vpop.xlane.xlu0 %1423
    %v1425 = vsel %vm532, %v1421, 0.0
    %1426 = vadd.xlane.f32.xlu0 %v1425
    %v1427 = vpop.xlane.xlu0 %1426
    %v1428 = vrcp.pop %v1424
    %v1429 = vrcp.pop %v1427
    %v1430 = vmul.f32 %v1419, %v1428
    %v1431 = vmul.f32 %v1421, %v1429
    %v1432 = vmul.f32 %v1384, %v248
    %v1433 = vmul.f32 %v1386, %v248
    %v1434 = vpack.c.bf16 %v1433, %v1432
    %v1435 = vpack.c.bf16 %v1431, %v1430
    %v1436 = vmul.f32 %v1216, %v253
    %v1437 = vmul.f32 %v1218, %v253
    %v1438 = vpack.c.bf16 %v1437, %v1436
    %1439 = vmatpush.bf16.xpose.msra.mxu0 0
    %1440 = vmatpush.bf16.xpose.msra.mxu0 0
    %1441 = vmatpush.bf16.xpose.msra.mxu0 0
    %1442 = vmatpush.bf16.xpose.msra.mxu0 0
    %1443 = vmatpush.bf16.xpose.msra.mxu0 0
    %1444 = vmatpush.bf16.xpose.msra.mxu0 0
    %1445 = vmatpush.bf16.xpose.msra.mxu0 0
    %1446 = vmatpush.bf16.xpose.msra.mxu0 %v1388
    %1447 = vmatmul.bf16.gmra.mxu0 %v1438
    %v1448 = vpop.f32.mrf.mxu0
    %v1449 = vadd.f32 0.0, %v1448
    %v1450 = vpop.f32.mrf.mxu0
    %v1451 = vadd.f32 0.0, %v1450
    %1452 = vdwg.mxu0
    %v1453 = vmul.f32 %v1449, 0.35355338
    %v1454 = vmul.f32 %v1451, 0.35355338
    %v1455 = vadd.f32 %v1453, %v237
    %v1456 = vadd.f32 %v1454, %v238
    %v1457 = vsel %vm532, %v1455, -inf
    %1458 = vmax.xlane.f32.xlu0 %v1457
    %v1459 = vpop.xlane.xlu0 %1458
    %v1460 = vsel %vm532, %v1456, -inf
    %1461 = vmax.xlane.f32.xlu0 %v1460
    %v1462 = vpop.xlane.xlu0 %1461
    %v1463 = vsub.f32 %v1455, %v1459
    %v1464 = vsub.f32 %v1456, %v1462
    %v1465 = vmul.f32 %v1463, 1.442695
    %v1466 = vpow.pop %v1465
    %v1467 = vmul.f32 %v1464, 1.442695
    %v1468 = vpow.pop %v1467
    %v1469 = vsel %vm532, %v1466, 0.0
    %1470 = vadd.xlane.f32.xlu0 %v1469
    %v1471 = vpop.xlane.xlu0 %1470
    %v1472 = vsel %vm532, %v1468, 0.0
    %1473 = vadd.xlane.f32.xlu0 %v1472
    %v1474 = vpop.xlane.xlu0 %1473
    %v1475 = vrcp.pop %v1471
    %v1476 = vrcp.pop %v1474
    %v1477 = vmul.f32 %v1466, %v1475
    %v1478 = vmul.f32 %v1468, %v1476
    %v1479 = vmul.f32 %v1384, %v253
    %v1480 = vmul.f32 %v1386, %v253
    %v1481 = vpack.c.bf16 %v1480, %v1479
    %v1482 = vpack.c.bf16 %v1478, %v1477
    %v1484 = vsel %vm532, %v1482, 0
    %1486 = vmatpush.bf16.msra.mxu0 0
    %1487 = vmatpush.bf16.msra.mxu0 0
    %1488 = vmatpush.bf16.msra.mxu0 0
    %1489 = vmatpush.bf16.msra.mxu0 0
    %1490 = vmatpush.bf16.msra.mxu0 0
    %1491 = vmatpush.bf16.msra.mxu0 0
    %1492 = vmatpush.bf16.msra.mxu0 0
    %1493 = vmatpush.bf16.msra.mxu0 %v1481
    %1494 = vmatmul.bf16.gmra.mxu0 %v1484
    %v1495 = vpop.f32.mrf.mxu0
    %v1496 = vadd.f32 0.0, %v1495
    %v1497 = vpop.f32.mrf.mxu0
    %v1498 = vadd.f32 0.0, %v1497
    %1499 = vdwg.mxu0
    %v1501 = vsel %vm532, %v1435, 0
    %1503 = vmatpush.bf16.msra.mxu0 0
    %1504 = vmatpush.bf16.msra.mxu0 0
    %1505 = vmatpush.bf16.msra.mxu0 0
    %1506 = vmatpush.bf16.msra.mxu0 0
    %1507 = vmatpush.bf16.msra.mxu0 0
    %1508 = vmatpush.bf16.msra.mxu0 0
    %1509 = vmatpush.bf16.msra.mxu0 0
    %1510 = vmatpush.bf16.msra.mxu0 %v1434
    %1511 = vmatmul.bf16.gmra.mxu0 %v1501
    %v1512 = vpop.f32.mrf.mxu0
    %v1513 = vadd.f32 %v1496, %v1512
    %v1514 = vpop.f32.mrf.mxu0
    %v1515 = vadd.f32 %v1498, %v1514
    %1516 = vdwg.mxu0
    %v1517 = vmul.f32 %v1216, %v258
    %v1518 = vmul.f32 %v1218, %v258
    %v1519 = vpack.c.bf16 %v1518, %v1517
    %1520 = vmatpush.bf16.xpose.msra.mxu0 0
    %1521 = vmatpush.bf16.xpose.msra.mxu0 0
    %1522 = vmatpush.bf16.xpose.msra.mxu0 0
    %1523 = vmatpush.bf16.xpose.msra.mxu0 0
    %1524 = vmatpush.bf16.xpose.msra.mxu0 0
    %1525 = vmatpush.bf16.xpose.msra.mxu0 0
    %1526 = vmatpush.bf16.xpose.msra.mxu0 0
    %1527 = vmatpush.bf16.xpose.msra.mxu0 %v1388
    %1528 = vmatmul.bf16.gmra.mxu0 %v1519
    %v1529 = vpop.f32.mrf.mxu0
    %v1530 = vadd.f32 0.0, %v1529
    %v1531 = vpop.f32.mrf.mxu0
    %v1532 = vadd.f32 0.0, %v1531
    %1533 = vdwg.mxu0
    %v1534 = vmul.f32 %v1530, 0.35355338
    %v1535 = vmul.f32 %v1532, 0.35355338
    %v1536 = vadd.f32 %v1534, %v237
    %v1537 = vadd.f32 %v1535, %v238
    %v1538 = vsel %vm532, %v1536, -inf
    %1539 = vmax.xlane.f32.xlu0 %v1538
    %v1540 = vpop.xlane.xlu0 %1539
    %v1541 = vsel %vm532, %v1537, -inf
    %1542 = vmax.xlane.f32.xlu0 %v1541
    %v1543 = vpop.xlane.xlu0 %1542
    %v1544 = vsub.f32 %v1536, %v1540
    %v1545 = vsub.f32 %v1537, %v1543
    %v1546 = vmul.f32 %v1544, 1.442695
    %v1547 = vpow.pop %v1546
    %v1548 = vmul.f32 %v1545, 1.442695
    %v1549 = vpow.pop %v1548
    %v1550 = vsel %vm532, %v1547, 0.0
    %1551 = vadd.xlane.f32.xlu0 %v1550
    %v1552 = vpop.xlane.xlu0 %1551
    %v1553 = vsel %vm532, %v1549, 0.0
    %1554 = vadd.xlane.f32.xlu0 %v1553
    %v1555 = vpop.xlane.xlu0 %1554
    %v1556 = vrcp.pop %v1552
    %v1557 = vrcp.pop %v1555
    %v1558 = vmul.f32 %v1547, %v1556
    %v1559 = vmul.f32 %v1549, %v1557
    %v1560 = vmul.f32 %v1384, %v258
    %v1561 = vmul.f32 %v1386, %v258
    %v1562 = vpack.c.bf16 %v1561, %v1560
    %v1563 = vpack.c.bf16 %v1559, %v1558
    %v1565 = vsel %vm532, %v1563, 0
    %1567 = vmatpush.bf16.msra.mxu0 0
    %1568 = vmatpush.bf16.msra.mxu0 0
    %1569 = vmatpush.bf16.msra.mxu0 0
    %1570 = vmatpush.bf16.msra.mxu0 0
    %1571 = vmatpush.bf16.msra.mxu0 0
    %1572 = vmatpush.bf16.msra.mxu0 0
    %1573 = vmatpush.bf16.msra.mxu0 0
    %1574 = vmatpush.bf16.msra.mxu0 %v1562
    %1575 = vmatmul.bf16.gmra.mxu0 %v1565
    %v1576 = vpop.f32.mrf.mxu0
    %v1577 = vadd.f32 0.0, %v1576
    %v1578 = vpop.f32.mrf.mxu0
    %v1579 = vadd.f32 0.0, %v1578
    %1580 = vdwg.mxu0
    %v1581 = vadd.f32 %v1513, %v1577
    %v1582 = vadd.f32 %v1515, %v1579
    %v1583 = vmul.f32 %v1216, %v262
    %v1584 = vmul.f32 %v1218, %v262
    %v1585 = vpack.c.bf16 %v1584, %v1583
    %1586 = vmatpush.bf16.xpose.msra.mxu0 0
    %1587 = vmatpush.bf16.xpose.msra.mxu0 0
    %1588 = vmatpush.bf16.xpose.msra.mxu0 0
    %1589 = vmatpush.bf16.xpose.msra.mxu0 0
    %1590 = vmatpush.bf16.xpose.msra.mxu0 0
    %1591 = vmatpush.bf16.xpose.msra.mxu0 0
    %1592 = vmatpush.bf16.xpose.msra.mxu0 0
    %1593 = vmatpush.bf16.xpose.msra.mxu0 %v1388
    %1594 = vmatmul.bf16.gmra.mxu0 %v1585
    %v1595 = vpop.f32.mrf.mxu0
    %v1596 = vadd.f32 0.0, %v1595
    %v1597 = vpop.f32.mrf.mxu0
    %v1598 = vadd.f32 0.0, %v1597
    %1599 = vdwg.mxu0
    %v1600 = vmul.f32 %v1596, 0.35355338
    %v1601 = vmul.f32 %v1598, 0.35355338
    %v1602 = vadd.f32 %v1600, %v237
    %v1603 = vadd.f32 %v1601, %v238
    %v1604 = vsel %vm532, %v1602, -inf
    %1605 = vmax.xlane.f32.xlu0 %v1604
    %v1606 = vpop.xlane.xlu0 %1605
    %v1607 = vsel %vm532, %v1603, -inf
    %1608 = vmax.xlane.f32.xlu0 %v1607
    %v1609 = vpop.xlane.xlu0 %1608
    %v1610 = vsub.f32 %v1602, %v1606
    %v1611 = vsub.f32 %v1603, %v1609
    %v1612 = vmul.f32 %v1610, 1.442695
    %v1613 = vpow.pop %v1612
    %v1614 = vmul.f32 %v1611, 1.442695
    %v1615 = vpow.pop %v1614
    %v1616 = vsel %vm532, %v1613, 0.0
    %1617 = vadd.xlane.f32.xlu0 %v1616
    %v1618 = vpop.xlane.xlu0 %1617
    %v1619 = vsel %vm532, %v1615, 0.0
    %1620 = vadd.xlane.f32.xlu0 %v1619
    %v1621 = vpop.xlane.xlu0 %1620
    %v1622 = vrcp.pop %v1618
    %v1623 = vrcp.pop %v1621
    %v1624 = vmul.f32 %v1613, %v1622
    %v1625 = vmul.f32 %v1615, %v1623
    %v1626 = vmul.f32 %v1384, %v262
    %v1627 = vmul.f32 %v1386, %v262
    %v1628 = vpack.c.bf16 %v1627, %v1626
    %v1629 = vpack.c.bf16 %v1625, %v1624
    %v1631 = vsel %vm532, %v1629, 0
    %1633 = vmatpush.bf16.msra.mxu0 0
    %1634 = vmatpush.bf16.msra.mxu0 0
    %1635 = vmatpush.bf16.msra.mxu0 0
    %1636 = vmatpush.bf16.msra.mxu0 0
    %1637 = vmatpush.bf16.msra.mxu0 0
    %1638 = vmatpush.bf16.msra.mxu0 0
    %1639 = vmatpush.bf16.msra.mxu0 0
    %1640 = vmatpush.bf16.msra.mxu0 %v1628
    %1641 = vmatmul.bf16.gmra.mxu0 %v1631
    %v1642 = vpop.f32.mrf.mxu0
    %v1643 = vadd.f32 0.0, %v1642
    %v1644 = vpop.f32.mrf.mxu0
    %v1645 = vadd.f32 0.0, %v1644
    %1646 = vdwg.mxu0
    %v1647 = vadd.f32 %v1581, %v1643
    %v1648 = vadd.f32 %v1582, %v1645
    %v1649 = vpack.c.bf16 %v1648, %v1647
    %s1650 = scalar_lea.vmem [#allocation13], 64
    %v1651 = vld [vmem:[%s1650] sm:$0xf]
    %v1652 = vld [vmem:[%s1650 + $0x4] sm:$0xf]
    %v1653 = vld [vmem:[%s1650 + $0x8] sm:$0xf]
    %v1654 = vld [vmem:[%s1650 + $0xc] sm:$0xf]
    %v1655 = vld [vmem:[%s1650 + $0x10] sm:$0xf]
    %v1656 = vld [vmem:[%s1650 + $0x14] sm:$0xf]
    %v1657 = vld [vmem:[%s1650 + $0x18] sm:$0xf]
    %v1658 = vld [vmem:[%s1650 + $0x1c] sm:$0xf]
    %v1659 = vld [vmem:[%s1650 + $0x20] sm:$0xf]
    %v1660 = vld [vmem:[%s1650 + $0x24] sm:$0xf]
    %v1661 = vld [vmem:[%s1650 + $0x28] sm:$0xf]
    %v1662 = vld [vmem:[%s1650 + $0x2c] sm:$0xf]
    %v1663 = vld [vmem:[%s1650 + $0x30] sm:$0xf]
    %v1664 = vld [vmem:[%s1650 + $0x34] sm:$0xf]
    %v1665 = vld [vmem:[%s1650 + $0x38] sm:$0xf]
    %v1666 = vld [vmem:[%s1650 + $0x3c] sm:$0xf]
    %s1667 = scalar_lea.vmem %s10, 1
    %v1668 = vld [vmem:[%s1667] sm:$0x1]
    %v1670 = vperm.slane %v1668, 0
    %v1688 = vunpack.c.l.b16 %v1651
    %v1689 = vunpack.c.l.b16 %v1652
    %v1690 = vunpack.c.l.b16 %v1653
    %v1691 = vunpack.c.l.b16 %v1654
    %v1692 = vunpack.c.l.b16 %v1655
    %v1693 = vunpack.c.l.b16 %v1656
    %v1694 = vunpack.c.l.b16 %v1657
    %v1695 = vunpack.c.l.b16 %v1658
    %v1696 = vunpack.c.l.b16 %v1659
    %v1697 = vunpack.c.l.b16 %v1660
    %v1698 = vunpack.c.l.b16 %v1661
    %v1699 = vunpack.c.l.b16 %v1662
    %v1700 = vunpack.c.l.b16 %v1663
    %v1701 = vunpack.c.l.b16 %v1664
    %v1702 = vunpack.c.l.b16 %v1665
    %v1703 = vunpack.c.l.b16 %v1666
    %v1704 = vpack.c.b16 %v1689, %v1688
    %v1705 = vpack.c.b16 %v1691, %v1690
    %v1706 = vpack.c.b16 %v1693, %v1692
    %v1707 = vpack.c.b16 %v1695, %v1694
    %v1708 = vpack.c.b16 %v1697, %v1696
    %v1709 = vpack.c.b16 %v1699, %v1698
    %v1710 = vpack.c.b16 %v1701, %v1700
    %v1711 = vpack.c.b16 %v1703, %v1702
    %1720 = vmatpush.bf16.msra.mxu0 %v1711
    %1721 = vmatpush.bf16.msra.mxu0 %v1710
    %1722 = vmatpush.bf16.msra.mxu0 %v1709
    %1723 = vmatpush.bf16.msra.mxu0 %v1708
    %1724 = vmatpush.bf16.msra.mxu0 %v1707
    %1725 = vmatpush.bf16.msra.mxu0 %v1706
    %1726 = vmatpush.bf16.msra.mxu0 %v1705
    %1727 = vmatpush.bf16.msra.mxu0 %v1704
    %1728 = vmatmul.bf16.gmra.mxu0 %v1649
    %v1729 = vpop.f32.mrf.mxu0
    %v1730 = vadd.f32 %v1670, %v1729
    %v1731 = vpop.f32.mrf.mxu0
    %v1732 = vadd.f32 %v1670, %v1731
    %1733 = vdwg.mxu0
    %v1734 = vadd.f32 %v1133, %v1730
    %v1735 = vadd.f32 %v1134, %v1732
    %s1736 = scalar_lea.vmem %s11, 1
    %v1737 = vld [vmem:[%s1736] sm:$0x1]
    %s1738 = scalar_lea.vmem [#allocation14], 1
    %v1739 = vld [vmem:[%s1738] sm:$0x1]
    %1740 = vadd.xlane.f32.xlu0 %v1734
    %v1741 = vpop.xlane.xlu0 %1740
    %1742 = vadd.xlane.f32.xlu0 %v1735
    %v1743 = vpop.xlane.xlu0 %1742
    %v1744 = vmul.f32 %v1741, 0.03125
    %v1745 = vmul.f32 %v1743, 0.03125
    %v1746 = vsub.f32 %v1734, %v1744
    %v1747 = vsub.f32 %v1735, %v1745
    %v1748 = vmul.f32 %v1746, %v243
    %v1749 = vmul.f32 %v1747, %v243
    %v1750 = vmul.f32 %v1748, %v1748
    %v1751 = vmul.f32 %v1749, %v1749
    %1752 = vadd.xlane.f32.xlu0 %v1750
    %v1753 = vpop.xlane.xlu0 %1752
    %1754 = vadd.xlane.f32.xlu0 %v1751
    %v1755 = vpop.xlane.xlu0 %1754
    %v1756 = vmul.f32 %v1753, 0.03125
    %v1757 = vmul.f32 %v1755, 0.03125
    %v1758 = vadd.f32 %v1756, 1e-05
    %v1759 = vadd.f32 %v1757, 1e-05
    %v1760 = vrsqrt.pop %v1758
    %v1761 = vmul.f32 %v1760, %v1758
    %v1762 = vmul.f32 %v1761, %v1760
    %v1763 = vmul.f32 0.5, %v1762
    %v1764 = vsub.f32 1.5, %v1763
    %v1765 = vmul.f32 %v1760, %v1764
    %vm1766 = vweird.f32 %v1758
    %vm1767 = vweird.f32 %v1760
    %vm1768 = vmor %vm1766, %vm1767
    %v1769 = vsel %vm1768, %v1760, %v1765
    %v1770 = vrsqrt.pop %v1759
    %v1771 = vmul.f32 %v1770, %v1759
    %v1772 = vmul.f32 %v1771, %v1770
    %v1773 = vmul.f32 0.5, %v1772
    %v1774 = vsub.f32 1.5, %v1773
    %v1775 = vmul.f32 %v1770, %v1774
    %vm1776 = vweird.f32 %v1759
    %vm1777 = vweird.f32 %v1770
    %vm1778 = vmor %vm1776, %vm1777
    %v1779 = vsel %vm1778, %v1770, %v1775
    %v1780 = vmul.f32 %v1748, %v1769
    %v1781 = vmul.f32 %v1749, %v1779
    %v1783 = vperm.slane %v1737, 0
    %v1785 = vmul.f32 %v1780, %v1783
    %v1786 = vmul.f32 %v1781, %v1783
    %v1788 = vperm.slane %v1739, 0
    %v1790 = vadd.f32 %v1785, %v1788
    %v1791 = vadd.f32 %v1786, %v1788
    %v1792 = vpack.c.bf16 %v1791, %v1790
    %s1793 = scalar_lea.vmem [#allocation17], 64
    %v1794 = vld [vmem:[%s1793] sm:$0xf]
    %v1795 = vld [vmem:[%s1793 + $0x4] sm:$0xf]
    %v1796 = vld [vmem:[%s1793 + $0x8] sm:$0xf]
    %v1797 = vld [vmem:[%s1793 + $0xc] sm:$0xf]
    %v1798 = vld [vmem:[%s1793 + $0x10] sm:$0xf]
    %v1799 = vld [vmem:[%s1793 + $0x14] sm:$0xf]
    %v1800 = vld [vmem:[%s1793 + $0x18] sm:$0xf]
    %v1801 = vld [vmem:[%s1793 + $0x1c] sm:$0xf]
    %v1802 = vld [vmem:[%s1793 + $0x20] sm:$0xf]
    %v1803 = vld [vmem:[%s1793 + $0x24] sm:$0xf]
    %v1804 = vld [vmem:[%s1793 + $0x28] sm:$0xf]
    %v1805 = vld [vmem:[%s1793 + $0x2c] sm:$0xf]
    %v1806 = vld [vmem:[%s1793 + $0x30] sm:$0xf]
    %v1807 = vld [vmem:[%s1793 + $0x34] sm:$0xf]
    %v1808 = vld [vmem:[%s1793 + $0x38] sm:$0xf]
    %v1809 = vld [vmem:[%s1793 + $0x3c] sm:$0xf]
    %s1810 = scalar_lea.vmem %s16, 1
    %v1811 = vld [vmem:[%s1810] sm:$0x1]
    %v1813 = vperm.slane %v1811, 0
    %v1831 = vunpack.c.l.b16 %v1794
    %v1832 = vunpack.c.l.b16 %v1795
    %v1833 = vunpack.c.l.b16 %v1796
    %v1834 = vunpack.c.l.b16 %v1797
    %v1835 = vunpack.c.l.b16 %v1798
    %v1836 = vunpack.c.l.b16 %v1799
    %v1837 = vunpack.c.l.b16 %v1800
    %v1838 = vunpack.c.l.b16 %v1801
    %v1839 = vunpack.c.l.b16 %v1802
    %v1840 = vunpack.c.l.b16 %v1803
    %v1841 = vunpack.c.l.b16 %v1804
    %v1842 = vunpack.c.l.b16 %v1805
    %v1843 = vunpack.c.l.b16 %v1806
    %v1844 = vunpack.c.l.b16 %v1807
    %v1845 = vunpack.c.l.b16 %v1808
    %v1846 = vunpack.c.l.b16 %v1809
    %v1847 = vpack.c.b16 %v1832, %v1831
    %v1848 = vpack.c.b16 %v1834, %v1833
    %v1849 = vpack.c.b16 %v1836, %v1835
    %v1850 = vpack.c.b16 %v1838, %v1837
    %v1851 = vpack.c.b16 %v1840, %v1839
    %v1852 = vpack.c.b16 %v1842, %v1841
    %v1853 = vpack.c.b16 %v1844, %v1843
    %v1854 = vpack.c.b16 %v1846, %v1845
    %1863 = vmatpush.bf16.msra.mxu0 %v1854
    %1864 = vmatpush.bf16.msra.mxu0 %v1853
    %1865 = vmatpush.bf16.msra.mxu0 %v1852
    %1866 = vmatpush.bf16.msra.mxu0 %v1851
    %1867 = vmatpush.bf16.msra.mxu0 %v1850
    %1868 = vmatpush.bf16.msra.mxu0 %v1849
    %1869 = vmatpush.bf16.msra.mxu0 %v1848
    %1870 = vmatpush.bf16.msra.mxu0 %v1847
    %1871 = vmatmul.bf16.gmra.mxu0 %v1792
    %v1872 = vpop.f32.mrf.mxu0
    %v1873 = vadd.f32 %v1813, %v1872
    %v1874 = vpop.f32.mrf.mxu0
    %v1875 = vadd.f32 %v1813, %v1874
    %1876 = vdwg.mxu0
    %v1877 = vmax.f32 %v1873, 0.0
    %v1878 = vmax.f32 %v1875, 0.0
    %v1879 = vpack.c.bf16 %v1878, %v1877
    %s1880 = scalar_lea.vmem [#allocation19], 64
    %v1881 = vld [vmem:[%s1880] sm:$0xf]
    %v1882 = vld [vmem:[%s1880 + $0x4] sm:$0xf]
    %v1883 = vld [vmem:[%s1880 + $0x8] sm:$0xf]
    %v1884 = vld [vmem:[%s1880 + $0xc] sm:$0xf]
    %v1885 = vld [vmem:[%s1880 + $0x10] sm:$0xf]
    %v1886 = vld [vmem:[%s1880 + $0x14] sm:$0xf]
    %v1887 = vld [vmem:[%s1880 + $0x18] sm:$0xf]
    %v1888 = vld [vmem:[%s1880 + $0x1c] sm:$0xf]
    %v1889 = vld [vmem:[%s1880 + $0x20] sm:$0xf]
    %v1890 = vld [vmem:[%s1880 + $0x24] sm:$0xf]
    %v1891 = vld [vmem:[%s1880 + $0x28] sm:$0xf]
    %v1892 = vld [vmem:[%s1880 + $0x2c] sm:$0xf]
    %v1893 = vld [vmem:[%s1880 + $0x30] sm:$0xf]
    %v1894 = vld [vmem:[%s1880 + $0x34] sm:$0xf]
    %v1895 = vld [vmem:[%s1880 + $0x38] sm:$0xf]
    %v1896 = vld [vmem:[%s1880 + $0x3c] sm:$0xf]
    %s1897 = scalar_lea.vmem %s18, 1
    %v1898 = vld [vmem:[%s1897] sm:$0x1]
    %v1900 = vperm.slane %v1898, 0
    %v1918 = vunpack.c.l.b16 %v1881
    %v1919 = vunpack.c.l.b16 %v1882
    %v1920 = vunpack.c.l.b16 %v1883
    %v1921 = vunpack.c.l.b16 %v1884
    %v1922 = vunpack.c.l.b16 %v1885
    %v1923 = vunpack.c.l.b16 %v1886
    %v1924 = vunpack.c.l.b16 %v1887
    %v1925 = vunpack.c.l.b16 %v1888
    %v1926 = vunpack.c.l.b16 %v1889
    %v1927 = vunpack.c.l.b16 %v1890
    %v1928 = vunpack.c.l.b16 %v1891
    %v1929 = vunpack.c.l.b16 %v1892
    %v1930 = vunpack.c.l.b16 %v1893
    %v1931 = vunpack.c.l.b16 %v1894
    %v1932 = vunpack.c.l.b16 %v1895
    %v1933 = vunpack.c.l.b16 %v1896
    %v1934 = vpack.c.b16 %v1919, %v1918
    %v1935 = vpack.c.b16 %v1921, %v1920
    %v1936 = vpack.c.b16 %v1923, %v1922
    %v1937 = vpack.c.b16 %v1925, %v1924
    %v1938 = vpack.c.b16 %v1927, %v1926
    %v1939 = vpack.c.b16 %v1929, %v1928
    %v1940 = vpack.c.b16 %v1931, %v1930
    %v1941 = vpack.c.b16 %v1933, %v1932
    %1950 = vmatpush.bf16.msra.mxu0 %v1941
    %1951 = vmatpush.bf16.msra.mxu0 %v1940
    %1952 = vmatpush.bf16.msra.mxu0 %v1939
    %1953 = vmatpush.bf16.msra.mxu0 %v1938
    %1954 = vmatpush.bf16.msra.mxu0 %v1937
    %1955 = vmatpush.bf16.msra.mxu0 %v1936
    %1956 = vmatpush.bf16.msra.mxu0 %v1935
    %1957 = vmatpush.bf16.msra.mxu0 %v1934
    %1958 = vmatmul.bf16.gmra.mxu0 %v1879
    %v1959 = vpop.f32.mrf.mxu0
    %v1960 = vadd.f32 %v1900, %v1959
    %v1961 = vpop.f32.mrf.mxu0
    %v1962 = vadd.f32 %v1900, %v1961
    %1963 = vdwg.mxu0
    %v1964 = vadd.f32 %v1790, %v1960
    %v1965 = vadd.f32 %v1791, %v1962
    %s1966 = scalar_lea.vmem %s13, 1
    %v1967 = vld [vmem:[%s1966] sm:$0x1]
    %s1968 = scalar_lea.vmem [#allocation16], 1
    %v1969 = vld [vmem:[%s1968] sm:$0x1]
    %1970 = vadd.xlane.f32.xlu0 %v1964
    %v1971 = vpop.xlane.xlu0 %1970
    %1972 = vadd.xlane.f32.xlu0 %v1965
    %v1973 = vpop.xlane.xlu0 %1972
    %v1974 = vmul.f32 %v1971, 0.03125
    %v1975 = vmul.f32 %v1973, 0.03125
    %v1976 = vsub.f32 %v1964, %v1974
    %v1977 = vsub.f32 %v1965, %v1975
    %v1978 = vmul.f32 %v1976, %v243
    %v1979 = vmul.f32 %v1977, %v243
    %v1980 = vmul.f32 %v1978, %v1978
    %v1981 = vmul.f32 %v1979, %v1979
    %1982 = vadd.xlane.f32.xlu0 %v1980
    %v1983 = vpop.xlane.xlu0 %1982
    %1984 = vadd.xlane.f32.xlu0 %v1981
    %v1985 = vpop.xlane.xlu0 %1984
    %v1986 = vmul.f32 %v1983, 0.03125
    %v1987 = vmul.f32 %v1985, 0.03125
    %v1988 = vadd.f32 %v1986, 1e-05
    %v1989 = vadd.f32 %v1987, 1e-05
    %v1990 = vrsqrt.pop %v1988
    %v1991 = vmul.f32 %v1990, %v1988
    %v1992 = vmul.f32 %v1991, %v1990
    %v1993 = vmul.f32 0.5, %v1992
    %v1994 = vsub.f32 1.5, %v1993
    %v1995 = vmul.f32 %v1990, %v1994
    %vm1996 = vweird.f32 %v1988
    %vm1997 = vweird.f32 %v1990
    %vm1998 = vmor %vm1996, %vm1997
    %v1999 = vsel %vm1998, %v1990, %v1995
    %v2000 = vrsqrt.pop %v1989
    %v2001 = vmul.f32 %v2000, %v1989
    %v2002 = vmul.f32 %v2001, %v2000
    %v2003 = vmul.f32 0.5, %v2002
    %v2004 = vsub.f32 1.5, %v2003
    %v2005 = vmul.f32 %v2000, %v2004
    %vm2006 = vweird.f32 %v1989
    %vm2007 = vweird.f32 %v2000
    %vm2008 = vmor %vm2006, %vm2007
    %v2009 = vsel %vm2008, %v2000, %v2005
    %v2010 = vmul.f32 %v1978, %v1999
    %v2011 = vmul.f32 %v1979, %v2009
    %v2013 = vperm.slane %v1967, 0
    %v2015 = vmul.f32 %v2010, %v2013
    %v2016 = vmul.f32 %v2011, %v2013
    %v2018 = vperm.slane %v1969, 0
    %v2020 = vadd.f32 %v2015, %v2018
    %v2021 = vadd.f32 %v2016, %v2018
    %v2022 = vld [vmem:[#allocation7] sm:$0xff]
    %v2023 = vld [vmem:[#allocation7 + $0x8] sm:$0xff]
    %v2024 = vld [vmem:[#allocation7 + $0x10] sm:$0xff]
    %v2025 = vld [vmem:[#allocation7 + $0x18] sm:$0xff]
    %v2026 = vld [vmem:[#allocation7 + $0x20] sm:$0xff]
    %v2027 = vld [vmem:[#allocation7 + $0x28] sm:$0xff]
    %v2028 = vld [vmem:[#allocation7 + $0x30] sm:$0xff]
    %v2029 = vld [vmem:[#allocation7 + $0x38] sm:$0xff]
    %v2030 = vld [vmem:[#allocation7 + $0x40] sm:$0xff]
    %v2031 = vld [vmem:[#allocation7 + $0x48] sm:$0xff]
    %v2032 = vld [vmem:[#allocation7 + $0x50] sm:$0xff]
    %v2033 = vld [vmem:[#allocation7 + $0x58] sm:$0xff]
    %v2034 = vld [vmem:[#allocation7 + $0x60] sm:$0xff]
    %v2035 = vld [vmem:[#allocation7 + $0x68] sm:$0xff]
    %v2036 = vld [vmem:[#allocation7 + $0x70] sm:$0xff]
    %v2037 = vld [vmem:[#allocation7 + $0x78] sm:$0xff]
    %v2038 = vadd.f32 %v2022, 1e-10
    %v2039 = vadd.f32 %v2023, 1e-10
    %v2040 = vadd.f32 %v2024, 1e-10
    %v2041 = vadd.f32 %v2025, 1e-10
    %v2042 = vadd.f32 %v2026, 1e-10
    %v2043 = vadd.f32 %v2027, 1e-10
    %v2044 = vadd.f32 %v2028, 1e-10
    %v2045 = vadd.f32 %v2029, 1e-10
    %v2046 = vadd.f32 %v2030, 1e-10
    %v2047 = vadd.f32 %v2031, 1e-10
    %v2048 = vadd.f32 %v2032, 1e-10
    %v2049 = vadd.f32 %v2033, 1e-10
    %v2050 = vadd.f32 %v2034, 1e-10
    %v2051 = vadd.f32 %v2035, 1e-10
    %v2052 = vadd.f32 %v2036, 1e-10
    %v2053 = vadd.f32 %v2037, 1e-10
    %v2054 = vpack.c.bf16 %v2039, %v2038
    %v2055 = vpack.c.bf16 %v2041, %v2040
    %v2056 = vpack.c.bf16 %v2043, %v2042
    %v2057 = vpack.c.bf16 %v2045, %v2044
    %v2058 = vpack.c.bf16 %v2047, %v2046
    %v2059 = vpack.c.bf16 %v2049, %v2048
    %v2060 = vpack.c.bf16 %v2051, %v2050
    %v2061 = vpack.c.bf16 %v2053, %v2052
    %v2062 = vpack.c.bf16 %v2021, %v2020
    %2063 = vmatpush.bf16.xpose.msra.mxu0 %v2061
    %2064 = vmatpush.bf16.xpose.msra.mxu0 %v2060
    %2065 = vmatpush.bf16.xpose.msra.mxu0 %v2059
    %2066 = vmatpush.bf16.xpose.msra.mxu0 %v2058
    %2067 = vmatpush.bf16.xpose.msra.mxu0 %v2057
    %2068 = vmatpush.bf16.xpose.msra.mxu0 %v2056
    %2069 = vmatpush.bf16.xpose.msra.mxu0 %v2055
    %2070 = vmatpush.bf16.xpose.msra.mxu0 %v2054
    %2071 = vmatmul.bf16.gmra.mxu0 %v2062
    %v2072 = vpop.f32.mrf.mxu0
    %v2073 = vadd.f32 0.0, %v2072
    %v2074 = vpop.f32.mrf.mxu0
    %v2075 = vadd.f32 0.0, %v2074
    %2076 = vdwg.mxu0
    %v2077 = vmin.f32 %v2073, 0.0
    %v2078 = vmin.f32 %v2075, 0.0
    %v2079 = vand.u32 2147483647, %v2073
    %v2080 = vand.u32 2147483647, %v2075
    %v2081 = vsub.f32 0.0, %v2079
    %v2082 = vsub.f32 0.0, %v2080
    %v2083 = vmul.f32 %v2081, 1.442695
    %v2084 = vpow.pop %v2083
    %v2085 = vmul.f32 %v2082, 1.442695
    %v2086 = vpow.pop %v2085
    %v2087 = vadd.f32 %v2084, 1.0
    %v2088 = vadd.f32 %v2086, 1.0
    %v2089 = vlog2.pop %v2087
    %v2090 = vmul.f32 %v2089, 0.6931472
    %v2091 = vlog2.pop %v2088
    %v2092 = vmul.f32 %v2091, 0.6931472
    %v2093 = vsub.f32 %v2077, %v2090
    %v2094 = vsub.f32 %v2078, %v2092
    %v2095 = vadd.f32 %v2073, %v2093
    %v2096 = vadd.f32 %v2075, %v2094
    %vm2097 = vcmp.lt.s32.totalorder %v240, 64
    %v2098 = vsel %vm2097, 1, 0
    %vm2099 = vcmp.eq.s32.totalorder %v2098, 1
    %v2100 = vsel %vm2099, %v2095, -inf
    %v2101 = vsel %vm2099, %v2096, -inf
    %2102 = vmax.xlane.f32.xlu0 %v2100
    %v2103 = vpop.xlane.xlu0 %2102
    %2104 = vmax.xlane.f32.xlu0 %v2101
    %v2105 = vpop.xlane.xlu0 %2104
    %v2106 = vsub.f32 %v2100, %v2103
    %v2107 = vsub.f32 %v2101, %v2105
    %v2108 = vmul.f32 %v2106, 1.442695
    %v2109 = vpow.pop %v2108
    %v2110 = vmul.f32 %v2107, 1.442695
    %v2111 = vpow.pop %v2110
    %2112 = vadd.xlane.f32.xlu0 %v2109
    %v2113 = vpop.xlane.xlu0 %2112
    %2114 = vadd.xlane.f32.xlu0 %v2111
    %v2115 = vpop.xlane.xlu0 %2114
    %v2116 = vlog2.pop %v2113
    %v2117 = vmul.f32 %v2116, 0.6931472
    %v2118 = vlog2.pop %v2115
    %v2119 = vmul.f32 %v2118, 0.6931472
    %v2120 = vadd.f32 %v2103, %v2117
    %v2121 = vadd.f32 %v2105, %v2119
    %v2122 = vsub.f32 %v2095, %v2120
    %v2123 = vsub.f32 %v2096, %v2121
    %2124 = vst [vmem:[#allocation20] sm:$0xff] %v2122
    %2125 = vst [vmem:[#allocation20 + $0x8] sm:$0xff] %v2123
    // Predicated region
    $region122: #{tpu_custom_call.1} parent=1 // pred_check
      _
    $region123: #{tpu_custom_call.1} parent=1 // pred_check_branch
      %2127 = sbr.rel (0) target = $region125
    $region124: #{tpu_custom_call.1} parent=1 // pred_region
      %2129 = vsyncadd [#allocation4], 0
      %s2130 = sshll.u32 [#allocation20], 4
      %s2131 = int_to_ptr.vmem [resolvable:$true] %s2130
      %s2132 = sshll.u32 %s19, 4
      %s2133 = int_to_ptr.hbm [resolvable:$true] %s2132
      %2138 = dma.vmem_to_hbm [thread:$0]  %s2131, 256, %s2133, [#allocation4], 128, 128, 8
    $region125: #{tpu_custom_call.1} parent=1 // pred_fallthru
      _
    // Predicated region
    $region126: #{tpu_custom_call.1} parent=1 // pred_check
      _
    $region127: #{tpu_custom_call.1} parent=1 // pred_check_branch
      %2140 = sbr.rel (0) target = $region129
    $region128: #{tpu_custom_call.1} parent=1 // pred_region
      %2142 = dma.done [#allocation4], 256
    $region129: #{tpu_custom_call.1} parent=1 // pred_fallthru
      _
    %2143 = vsyncpa [#allocation3], 1
    %2144 = vsyncpa [#allocation6], 1
    %2145 = vsyncpa [#allocation9], 1
    %2146 = vsyncpa [#allocation12], 1
    %2147 = vsyncpa [#allocation15], 1
    %2148 = vsyncpa [#allocation18], 1
    %2149 = vsyncpa [#allocation4], 1

</llo_original>
